<compile_context>
chip_gen: v5e
topology: v5e:2x2
jax: 0.10.0
libtpu: 0.0.40
codegen_flags: <defaults>
</compile_context>

<pallas_src>
import numpy as np
import jax
import jax.numpy as jnp
from jax import lax
from jax.experimental import pallas as pl
from jax.experimental.pallas import tpu as pltpu


# ----------------------------------------------------------------------------
# Kernel 1: expansion 1x1 conv + BN bias + ReLU6.
# Input is NCHW-flat (B, Cin, R); output is NHWC-flat (B, R, hidden).
# The layout change is folded into the matmul (lhs contracting dim 0), so no
# wrapper transpose / extra HBM pass is needed.
# ----------------------------------------------------------------------------
def _pw_expand_kernel(x_ref, w_ref, b_ref, o_ref):
    xb = x_ref[0].astype(w_ref.dtype)                        # (Cin, TM)
    acc = lax.dot_general(xb, w_ref[...], (((0,), (0,)), ((), ())),
                          preferred_element_type=jnp.float32)  # (TM, hidden)
    acc = acc + b_ref[...]                                   # (1, hidden)
    acc = jnp.clip(acc, 0.0, 6.0)
    o_ref[0] = acc.astype(o_ref.dtype)


def pw_expand(x3, w, bias_row, *, out_dtype, row_tile=1024):
    """x3: (B, Cin, R) NCHW-flat. w: (Cin, hidden) (BN scale folded). bias_row: (1, hidden)."""
    B, Cin, R = x3.shape
    hidden = w.shape[1]
    TM = R if R <= row_tile else row_tile                    # full dim or mult. of 128
    return pl.pallas_call(
        _pw_expand_kernel,
        grid=(B, pl.cdiv(R, TM)),
        in_specs=[
            pl.BlockSpec((1, Cin, TM), lambda b, r: (b, 0, r)),
            pl.BlockSpec((Cin, hidden), lambda b, r: (0, 0)),
            pl.BlockSpec((1, hidden), lambda b, r: (0, 0)),
        ],
        out_specs=pl.BlockSpec((1, TM, hidden), lambda b, r: (b, r, 0)),
        out_shape=jax.ShapeDtypeStruct((B, R, hidden), out_dtype),
        compiler_params=pltpu.CompilerParams(
            dimension_semantics=("parallel", "parallel")),
    )(x3, w, bias_row)


# ----------------------------------------------------------------------------
# Kernel 2: projection 1x1 conv + BN bias, computed TRANSPOSED:
#   out(Cout, TM) = W3^T @ (s * h)^T    (lane axis = rows -> lane-dense stores,
#                                        emits NCHW directly)
# Optional fused SPA per-channel scale on the input and fused identity residual.
# ----------------------------------------------------------------------------
def _pw_project_kernel_factory(has_scale, has_residual):
    def kernel(*refs):
        h_ref, w_ref, b_ref = refs[0], refs[1], refs[2]
        idx = 3
        s_ref = r_ref = None
        if has_scale:
            s_ref = refs[idx]; idx += 1
        if has_residual:
            r_ref = refs[idx]; idx += 1
        o_ref = refs[idx]

        hb = h_ref[0]                                        # (TM, hidden)
        if has_scale:
            hb = hb * s_ref[0]                               # (1, hidden) broadcast
        hb = hb.astype(w_ref.dtype)
        # (Cout, hidden) x (TM, hidden)^T -> (Cout, TM)  (contract last dims)
        acc = lax.dot_general(w_ref[...], hb, (((1,), (1,)), ((), ())),
                              preferred_element_type=jnp.float32)
        acc = acc + b_ref[...]                               # (Cout, 1) broadcast
        if has_residual:
            acc = acc + r_ref[0].astype(jnp.float32)         # (Cout, TM)
        o_ref[0] = acc.astype(o_ref.dtype)
    return kernel


def pw_project(h3, w3t, bias_col, *, scale=None, residual=None, out_dtype,
               row_tile=1024):
    """h3: (B, R, hidden) NHWC-flat. w3t: (Cout, hidden). bias_col: (Cout, 1).
    scale: optional (B, 1, hidden) SPA scale.  residual: optional (B, Cout, R) NCHW-flat.
    Returns (B, Cout, R) NCHW-flat."""
    B, R, hidden = h3.shape
    Cout = w3t.shape[0]
    TM = R if R <= row_tile else row_tile

    args = [h3, w3t, bias_col]
    in_specs = [
        pl.BlockSpec((1, TM, hidden), lambda b, r: (b, r, 0)),
        pl.BlockSpec((Cout, hidden), lambda b, r: (0, 0)),
        pl.BlockSpec((Cout, 1), lambda b, r: (0, 0)),
    ]
    if scale is not None:
        args.append(scale)
        in_specs.append(pl.BlockSpec((1, 1, hidden), lambda b, r: (b, 0, 0)))
    if residual is not None:
        args.append(residual)
        in_specs.append(pl.BlockSpec((1, Cout, TM), lambda b, r: (b, 0, r)))

    return pl.pallas_call(
        _pw_project_kernel_factory(scale is not None, residual is not None),
        grid=(B, pl.cdiv(R, TM)),
        in_specs=in_specs,
        out_specs=pl.BlockSpec((1, Cout, TM), lambda b, r: (b, 0, r)),
        out_shape=jax.ShapeDtypeStruct((B, Cout, R), out_dtype),
        compiler_params=pltpu.CompilerParams(
            dimension_semantics=("parallel", "parallel")),
    )(*args)


# ----------------------------------------------------------------------------
# Kernel 3: depthwise 3x3 conv (pad=1, stride 1/2) + BN bias + ReLU6, with the
# SPA adaptive pooling (1x1 / 2x2 / 4x4 bins) fused into the epilogue.
#   * halo lives in an activation-dtype VMEM scratch; only the 1-px border ring
#     is zeroed each step (interior fully overwritten).
#   * accumulation is strip-tiled over output rows; each strip's accumulator is
#     a value (register-resident for small strips), not a full-image VMEM temp.
#   * pooled bins are emitted bin-major as (21, C) so the SPA FC can consume
#     them directly (fc1 rows are pre-permuted at parameter-prep time).
# Requires Ho % 4 == 0 and Wo % 4 == 0 when SPA is enabled.
# ----------------------------------------------------------------------------
def _dw_kernel_factory(stride, with_spa):
    def kernel(*refs):
        if with_spa:
            x_ref, w_ref, b_ref, o_ref, y_ref, xpad_ref = refs
        else:
            x_ref, w_ref, b_ref, o_ref, xpad_ref = refs
        H, W, C = x_ref.shape[1], x_ref.shape[2], x_ref.shape[3]
        Ho, Wo = o_ref.shape[1], o_ref.shape[2]
        pdt = xpad_ref.dtype

        # zero only the border ring (cheap; done every step -> megacore-safe),
        # then copy the interior in the activation dtype (no f32 upcast).
        xpad_ref[0:1, :, :] = jnp.zeros((1, W + 2, C), pdt)
        xpad_ref[H + 1:H + 2, :, :] = jnp.zeros((1, W + 2, C), pdt)
        xpad_ref[:, 0:1, :] = jnp.zeros((H + 2, 1, C), pdt)
        xpad_ref[:, W + 1:W + 2, :] = jnp.zeros((H + 2, 1, C), pdt)
        xpad_ref[1:H + 1, 1:W + 1, :] = x_ref[0]

        w = w_ref[...].astype(jnp.float32)                   # (9, C)
        bias = b_ref[0, :].astype(jnp.float32)               # (C,)

        def strip(r0, th):
            acc = jnp.zeros((th, Wo, C), jnp.float32)
            for ky in range(3):
                for kx in range(3):
                    if stride == 1:
                        tap = xpad_ref[r0 + ky:r0 + ky + th, kx:kx + Wo, :]
                    else:
                        tap = xpad_ref[pl.ds(stride * r0 + ky, th, stride=stride),
                                       pl.ds(kx, Wo, stride=stride), :]
                    acc = acc + tap.astype(jnp.float32) * w[ky * 3 + kx, :][None, None, :]
            return jnp.clip(acc + bias[None, None, :], 0.0, 6.0)

        if with_spa:
            th = Ho // 4
            wq = Wo // 4
            p4 = []
            for si in range(4):                              # one row-bin per strip
                hs = strip(si * th, th)
                o_ref[0, si * th:(si + 1) * th, :, :] = hs.astype(o_ref.dtype)
                for cj in range(4):
                    m = jnp.mean(hs[:, cj * wq:(cj + 1) * wq, :], axis=(0, 1))
                    y_ref[0, 5 + si * 4 + cj, :] = m.astype(y_ref.dtype)
                    p4.append(m)
            # 2x2 and 1x1 pools from the (equal-sized) 4x4 bin means.
            for i in range(2):
                for j in range(2):
                    q = (p4[(2 * i) * 4 + 2 * j] + p4[(2 * i) * 4 + 2 * j + 1]
                         + p4[(2 * i + 1) * 4 + 2 * j]
                         + p4[(2 * i + 1) * 4 + 2 * j + 1]) * 0.25
                    y_ref[0, 1 + i * 2 + j, :] = q.astype(y_ref.dtype)
            y_ref[0, 0, :] = (sum(p4) * (1.0 / 16.0)).astype(y_ref.dtype)
        else:
            r0 = 0
            while r0 < Ho:                                   # static 8-row strips
                th = min(8, Ho - r0)
                hs = strip(r0, th)
                o_ref[0, r0:r0 + th, :, :] = hs.astype(o_ref.dtype)
                r0 += th
    return kernel


def dw_conv_bn_relu6(x, w9, bias, stride, *, out_dtype, with_spa):
    """x: (B, H, W, C) NHWC.  w9: (9, C) (BN scale folded).  bias: (C,)."""
    B, H, W, C = x.shape
    Ho = (H - 1) // stride + 1
    Wo = (W - 1) // stride + 1
    if with_spa:
        assert Ho % 4 == 0 and Wo % 4 == 0, "SPA pooling needs Ho, Wo divisible by 4"
        # TODO(synk): general AdaptiveAvgPool2d bin edges for non-multiple-of-4 maps.
        out_shape = (jax.ShapeDtypeStruct((B, Ho, Wo, C), out_dtype),
                     jax.ShapeDtypeStruct((B, 21, C), jnp.float32))
        out_specs = (pl.BlockSpec((1, Ho, Wo, C), lambda b: (b, 0, 0, 0)),
                     pl.BlockSpec((1, 21, C), lambda b: (b, 0, 0)))
    else:
        out_shape = jax.ShapeDtypeStruct((B, Ho, Wo, C), out_dtype)
        out_specs = pl.BlockSpec((1, Ho, Wo, C), lambda b: (b, 0, 0, 0))

    return pl.pallas_call(
        _dw_kernel_factory(stride, with_spa),
        grid=(B,),
        in_specs=[
            pl.BlockSpec((1, H, W, C), lambda b: (b, 0, 0, 0)),
            pl.BlockSpec((9, C), lambda b: (0, 0)),
            pl.BlockSpec((1, C), lambda b: (0, 0)),
        ],
        out_specs=out_specs,
        out_shape=out_shape,
        scratch_shapes=[pltpu.VMEM((H + 2, W + 2, C), x.dtype)],
        compiler_params=pltpu.CompilerParams(dimension_semantics=("parallel",)),
    )(x, w9, bias.reshape(1, C))


# ----------------------------------------------------------------------------
# Kernel 4: SPA squeeze-excite FC:  sigmoid(relu(y @ W1p) @ W2)
# (y comes bin-major from the depthwise kernel; W1 rows were pre-permuted.)
# ----------------------------------------------------------------------------
def _spa_fc_kernel(y_ref, w1_ref, w2_ref, o_ref):
    y = y_ref[...].astype(w1_ref.dtype)
    h = jnp.dot(y, w1_ref[...], preferred_element_type=jnp.float32)
    h = jnp.maximum(h, 0.0).astype(w2_ref.dtype)
    s = jnp.dot(h, w2_ref[...], preferred_element_type=jnp.float32)
    o_ref[...] = jax.nn.sigmoid(s).astype(o_ref.dtype)


def spa_fc(y, w1p, w2, *, out_dtype):
    B = y.shape[0]
    C = w2.shape[1]
    return pl.pallas_call(
        _spa_fc_kernel,
        grid=(1,),
        in_specs=[
            pl.BlockSpec(y.shape, lambda i: (0, 0)),
            pl.BlockSpec(w1p.shape, lambda i: (0, 0)),
            pl.BlockSpec(w2.shape, lambda i: (0, 0)),
        ],
        out_specs=pl.BlockSpec((B, C), lambda i: (0, 0)),
        out_shape=jax.ShapeDtypeStruct((B, C), out_dtype),
    )(y, w1p, w2)


# ----------------------------------------------------------------------------
# Parameter preparation: fold BN scales into weights, pre-transpose the
# projection weight, pre-permute SPA fc1 rows to bin-major order, optional
# bf16 matmul path.
# ----------------------------------------------------------------------------
def prepare_params(params, use_bf16):
    mm_dtype = jnp.bfloat16 if use_bf16 else jnp.float32
    hidden = params["w1"].shape[1]

    # bin-major new index = bin*C + ch ; map back to PyTorch's channel-major
    # concat order [y1(c) ; y2(c*4) ; y3(c*16)].
    old = np.empty((21, hidden), np.int32)
    old[0] = np.arange(hidden)
    for q in range(4):
        old[1 + q] = hidden + np.arange(hidden) * 4 + q
    for q in range(16):
        old[5 + q] = 5 * hidden + np.arange(hidden) * 16 + q
    fc1_perm = params["fc1_t"][old.reshape(-1), :]

    w3_folded = params["w3"] * params["bn3_scale"][None, :]          # (hidden, oup)
    return {
        "w1": (params["w1"] * params["bn1_scale"][None, :]).astype(mm_dtype),
        "b1": params["bn1_bias"].reshape(1, hidden).astype(jnp.float32),
        "w_dw": (params["w_dw"] * params["bn2_scale"][None, :]).astype(jnp.float32),
        "b2": params["bn2_bias"].astype(jnp.float32),
        "w3t": jnp.transpose(w3_folded).astype(mm_dtype),             # (oup, hidden)
        "b3": params["bn3_bias"].reshape(-1, 1).astype(jnp.float32),  # (oup, 1)
        "fc1p": fc1_perm.astype(mm_dtype),
        "fc2": params["fc2_t"].astype(mm_dtype),
    }


# ----------------------------------------------------------------------------
# Full InvertedResidual forward (NCHW in / NCHW out, no wrapper transposes on
# the big activations).
# ----------------------------------------------------------------------------
def inverted_residual_forward(x_nchw, params, *, stride, expand_ratio,
                              identity, use_bf16=True):
    p = prepare_params(params, use_bf16)
    act_dtype = jnp.bfloat16 if use_bf16 else jnp.float32

    B, Cin, H, W = x_nchw.shape
    R = H * W
    x3 = x_nchw.reshape(B, Cin, R)                     # NCHW-flat view (no copy)

    if expand_ratio != 1:
        hidden = p["w1"].shape[1]
        h3 = pw_expand(x3, p["w1"], p["b1"], out_dtype=act_dtype)   # (B, R, hidden)
        h4 = h3.reshape(B, H, W, hidden)
        h_dw, y_bins = dw_conv_bn_relu6(h4, p["w_dw"], p["b2"], stride,
                                        out_dtype=act_dtype, with_spa=True)
        s = spa_fc(y_bins.reshape(B, 21 * hidden), p["fc1p"], p["fc2"],
                   out_dtype=act_dtype)                # (B, hidden)
        s = s.reshape(B, 1, hidden)
    else:
        hidden = Cin
        # TODO(synk): fold this NCHW->NHWC relayout into the depthwise kernel.
        h4 = jnp.transpose(x_nchw, (0, 2, 3, 1)).astype(act_dtype)
        h_dw = dw_conv_bn_relu6(h4, p["w_dw"], p["b2"], stride,
                                out_dtype=act_dtype, with_spa=False)
        s = None

    _, Ho, Wo, _ = h_dw.shape
    h3o = h_dw.reshape(B, Ho * Wo, hidden)
    res = x3 if identity else None                     # identity => Cin==oup, R==Ho*Wo
    out3 = pw_project(h3o, p["w3t"], p["b3"], scale=s, residual=res,
                      out_dtype=x_nchw.dtype)          # (B, oup, Ho*Wo) NCHW-flat
    oup = p["w3t"].shape[0]
    return out3.reshape(B, oup, Ho, Wo)


# ----------------------------------------------------------------------------
# Pure-JAX reference (mirrors PyTorch NCHW semantics) for verification
# ----------------------------------------------------------------------------
def reference_forward(x, params, *, stride, expand_ratio, identity):
    def pw(z, w, scale, bias, relu6):
        y = jnp.einsum("bchw,cd->bdhw", z, w)
        y = y * scale[None, :, None, None] + bias[None, :, None, None]
        return jnp.clip(y, 0.0, 6.0) if relu6 else y

    h = pw(x, params["w1"], params["bn1_scale"], params["bn1_bias"], True) \
        if expand_ratio != 1 else x
    C = h.shape[1]
    wdw = jnp.transpose(params["w_dw"].reshape(3, 3, C), (2, 0, 1))[:, None, :, :]
    h = lax.conv_general_dilated(
        h, wdw, window_strides=(stride, stride), padding=((1, 1), (1, 1)),
        dimension_numbers=("NCHW", "OIHW", "NCHW"), feature_group_count=C)
    h = h * params["bn2_scale"][None, :, None, None] \
        + params["bn2_bias"][None, :, None, None]
    h = jnp.clip(h, 0.0, 6.0)
    if expand_ratio != 1:
        b, c, H, W = h.shape
        y1 = jnp.mean(h, axis=(2, 3))
        y2 = h.reshape(b, c, 2, H // 2, 2, W // 2).mean(axis=(3, 5)).reshape(b, 4 * c)
        y3 = h.reshape(b, c, 4, H // 4, 4, W // 4).mean(axis=(3, 5)).reshape(b, 16 * c)
        y = jnp.concatenate([y1, y2, y3], axis=1)
        s = jax.nn.sigmoid(jnp.maximum(y @ params["fc1_t"], 0.0) @ params["fc2_t"])
        h = h * s[:, :, None, None]
    out = pw(h, params["w3"], params["bn3_scale"], params["bn3_bias"], False)
    return x + out if identity else out


# ----------------------------------------------------------------------------
# Deterministic parameter construction
# ----------------------------------------------------------------------------
def make_params(key, inp, oup, expand_ratio, reduction=16, eps=1e-5):
    hidden = round(inp * expand_ratio)
    c_red = max(hidden // reduction, 1)
    ks = jax.random.split(key, 17)

    def bn_fold(kg, kb, km, kv, c):
        gamma = jax.random.uniform(kg, (c,), minval=0.5, maxval=1.5)
        beta = 0.1 * jax.random.normal(kb, (c,))
        mean = 0.1 * jax.random.normal(km, (c,))
        var = jax.random.uniform(kv, (c,), minval=0.5, maxval=1.5)
        scale = gamma / jnp.sqrt(var + eps)
        return scale.astype(jnp.float32), (beta - mean * scale).astype(jnp.float32)

    bn1_s, bn1_b = bn_fold(ks[0], ks[1], ks[2], ks[3], hidden)
    bn2_s, bn2_b = bn_fold(ks[4], ks[5], ks[6], ks[7], hidden)
    bn3_s, bn3_b = bn_fold(ks[8], ks[9], ks[10], ks[11], oup)
    return {
        "w1": 0.2 * jax.random.normal(ks[12], (inp, hidden), jnp.float32),
        "bn1_scale": bn1_s, "bn1_bias": bn1_b,
        "w_dw": 0.2 * jax.random.normal(ks[13], (9, hidden), jnp.float32),
        "bn2_scale": bn2_s, "bn2_bias": bn2_b,
        "fc1_t": 0.2 * jax.random.normal(ks[14], (21 * hidden, c_red), jnp.float32),
        "fc2_t": 0.2 * jax.random.normal(ks[15], (c_red, hidden), jnp.float32),
        "w3": 0.2 * jax.random.normal(ks[16], (hidden, oup), jnp.float32),
        "bn3_scale": bn3_s, "bn3_bias": bn3_b,
    }


if __name__ == "__main__":
    key = jax.random.PRNGKey(0)

    fwd = jax.jit(inverted_residual_forward,
                  static_argnames=("stride", "expand_ratio", "identity", "use_bf16"))

    # ---- config 1: expand_ratio=2, stride=1, identity shortcut (SPA path) ----
    B, inp, oup, H, W = 2, 16, 16, 16, 16
    expand_ratio, stride = 2, 1
    identity = (stride == 1 and inp == oup)
    kx, kp = jax.random.split(key)
    x = jax.random.normal(kx, (B, inp, H, W), jnp.float32)      # NCHW like PyTorch
    params = make_params(kp, inp, oup, expand_ratio)

    ref = np.asarray(jax.block_until_ready(
        reference_forward(x, params, stride=stride, expand_ratio=expand_ratio,
                          identity=identity)))

    # exact path (f32 everywhere)
    out_f32 = jax.block_until_ready(
        fwd(x, params, stride=stride, expand_ratio=expand_ratio,
            identity=identity, use_bf16=False))
    np.testing.assert_allclose(np.asarray(out_f32), ref, rtol=1e-4, atol=1e-4)

    # performance path (bf16 MXU operands / activations, f32 accumulation)
    out_bf16 = jax.block_until_ready(
        fwd(x, params, stride=stride, expand_ratio=expand_ratio,
            identity=identity, use_bf16=True))
    np.testing.assert_allclose(np.asarray(out_bf16), ref, rtol=1e-1, atol=1e-1)

    # ---- config 2: expand_ratio=1 (no expansion conv, no SPA), stride=1 ----
    k2x, k2p = jax.random.split(kp)
    x2 = jax.random.normal(k2x, (B, 16, H, W), jnp.float32)
    params2 = make_params(k2p, 16, 16, 1)
    ref2 = np.asarray(jax.block_until_ready(
        reference_forward(x2, params2, stride=1, expand_ratio=1, identity=True)))
    out2 = jax.block_until_ready(
        fwd(x2, params2, stride=1, expand_ratio=1, identity=True, use_bf16=False))
    np.testing.assert_allclose(np.asarray(out2), ref2, rtol=1e-4, atol=1e-4)

    print("KERNEL_OK")
</pallas_src>

<mosaic_0001>
module attributes {stable_mosaic.version = 11 : i64} {
  func.func @_pw_expand_kernel(%arg0: i32, %arg1: i32, %arg2: memref<1x16x256xf32, #tpu.memory_space<vmem>>, %arg3: memref<16x32xf32, #tpu.memory_space<vmem>>, %arg4: memref<1x32xf32, #tpu.memory_space<vmem>>, %arg5: memref<1x256x32xf32, #tpu.memory_space<vmem>>) attributes {dimension_semantics = [#tpu.dimension_semantics<parallel>, #tpu.dimension_semantics<parallel>], iteration_bounds = array<i64: 2, 1>, scalar_prefetch = 0 : i64, scratch_operands = 0 : i64, tpu.core_type = #tpu.core_type<tc>, window_params = [{transform_indices = @transform_0, window_bounds = array<i64: 1, 16, 256>}, {pipeline_mode = #tpu.pipeline_mode<synchronous>, transform_indices = @transform_1, window_bounds = array<i64: 16, 32>}, {pipeline_mode = #tpu.pipeline_mode<synchronous>, transform_indices = @transform_2, window_bounds = array<i64: 1, 32>}, {transform_indices = @transform_3, window_bounds = array<i64: 1, 256, 32>}]} {
    %c0 = arith.constant 0 : index
    %c0_0 = arith.constant 0 : index
    %c0_1 = arith.constant 0 : index
    %0 = vector.load %arg2[%c0, %c0_0, %c0_1] : memref<1x16x256xf32, #tpu.memory_space<vmem>>, vector<1x16x256xf32>
    %1 = vector.shape_cast %0 : vector<1x16x256xf32> to vector<16x256xf32>
    %c0_2 = arith.constant 0 : index
    %c0_3 = arith.constant 0 : index
    %2 = vector.load %arg3[%c0_2, %c0_3] : memref<16x32xf32, #tpu.memory_space<vmem>>, vector<16x32xf32>
    %cst = arith.constant dense<0.000000e+00> : vector<256x32xf32>
    %3 = tpu.matmul %1, %2, %cst {dimension_numbers = #tpu.dot_dimension_numbers<[0], [0], [1], [1], [0, 1, 1, 1], [], []>} : vector<16x256xf32>, vector<16x32xf32>, vector<256x32xf32> -> vector<256x32xf32>
    %c0_4 = arith.constant 0 : index
    %c0_5 = arith.constant 0 : index
    %4 = vector.load %arg4[%c0_4, %c0_5] : memref<1x32xf32, #tpu.memory_space<vmem>>, vector<1x32xf32>
    %5 = vector.broadcast %4 : vector<1x32xf32> to vector<256x32xf32>
    %6 = arith.addf %3, %5 : vector<256x32xf32>
    %cst_6 = arith.constant 0.000000e+00 : f32
    %cst_7 = arith.constant 6.000000e+00 : f32
    %7 = vector.broadcast %cst_6 : f32 to vector<256x32xf32>
    %8 = arith.maximumf %7, %6 : vector<256x32xf32>
    %9 = vector.broadcast %cst_7 : f32 to vector<256x32xf32>
    %10 = arith.minimumf %9, %8 : vector<256x32xf32>
    %c0_8 = arith.constant 0 : index
    %c0_9 = arith.constant 0 : index
    %c0_10 = arith.constant 0 : index
    %11 = vector.load %arg5[%c0_8, %c0_9, %c0_10] : memref<1x256x32xf32, #tpu.memory_space<vmem>>, vector<1x256x32xf32>
    %12 = vector.shape_cast %11 : vector<1x256x32xf32> to vector<256x32xf32>
    %13 = vector.shape_cast %10 : vector<256x32xf32> to vector<1x256x32xf32>
    tpu.vector_store %arg5[%c0_8, %c0_9, %c0_10], %13 {strides = array<i32>} : memref<1x256x32xf32, #tpu.memory_space<vmem>>, vector<1x256x32xf32>,
    return
  }
  func.func @transform_0(%arg0: i32, %arg1: i32) -> (i32, i32, i32) {
    %c0_i32 = arith.constant 0 : i32
    %c0_i32_0 = arith.constant 0 : i32
    return %arg0, %c0_i32, %arg1 : i32, i32, i32
  }
  func.func @transform_1(%arg0: i32, %arg1: i32) -> (i32, i32) {
    %c0_i32 = arith.constant 0 : i32
    %c0_i32_0 = arith.constant 0 : i32
    %c0_i32_1 = arith.constant 0 : i32
    return %c0_i32, %c0_i32_0 : i32, i32
  }
  func.func @transform_2(%arg0: i32, %arg1: i32) -> (i32, i32) {
    %c0_i32 = arith.constant 0 : i32
    %c0_i32_0 = arith.constant 0 : i32
    %c0_i32_1 = arith.constant 0 : i32
    return %c0_i32, %c0_i32_0 : i32, i32
  }
  func.func @transform_3(%arg0: i32, %arg1: i32) -> (i32, i32, i32) {
    %c0_i32 = arith.constant 0 : i32
    %c0_i32_0 = arith.constant 0 : i32
    return %arg0, %arg1, %c0_i32 : i32, i32, i32
  }
}

module attributes {stable_mosaic.version = 11 : i64} {
  func.func @kernel(%arg0: i32, %arg1: memref<1x16x16x32xf32, #tpu.memory_space<vmem>>, %arg2: memref<9x32xf32, #tpu.memory_space<vmem>>, %arg3: memref<1x32xf32, #tpu.memory_space<vmem>>, %arg4: memref<1x16x16x32xf32, #tpu.memory_space<vmem>>, %arg5: memref<1x21x32xf32, #tpu.memory_space<vmem>>, %arg6: memref<18x18x32xf32, #tpu.memory_space<vmem>>) attributes {dimension_semantics = [#tpu.dimension_semantics<parallel>], iteration_bounds = array<i64: 2>, scalar_prefetch = 0 : i64, scratch_operands = 1 : i64, tpu.core_type = #tpu.core_type<tc>, window_params = [{transform_indices = @transform_0, window_bounds = array<i64: 1, 16, 16, 32>}, {pipeline_mode = #tpu.pipeline_mode<synchronous>, transform_indices = @transform_1, window_bounds = array<i64: 9, 32>}, {pipeline_mode = #tpu.pipeline_mode<synchronous>, transform_indices = @transform_2, window_bounds = array<i64: 1, 32>}, {transform_indices = @transform_3, window_bounds = array<i64: 1, 16, 16, 32>}, {transform_indices = @transform_4, window_bounds = array<i64: 1, 21, 32>}]} {
    %cst = arith.constant 0.000000e+00 : f32
    %0 = vector.broadcast %cst : f32 to vector<1x18x32xf32>
    %c0 = arith.constant 0 : index
    %c0_0 = arith.constant 0 : index
    %c0_1 = arith.constant 0 : index
    %1 = vector.load %arg6[%c0, %c0_0, %c0_1] : memref<18x18x32xf32, #tpu.memory_space<vmem>>, vector<1x18x32xf32>
    tpu.vector_store %arg6[%c0, %c0_0, %c0_1], %0 {strides = array<i32>} : memref<18x18x32xf32, #tpu.memory_space<vmem>>, vector<1x18x32xf32>,
    %cst_2 = arith.constant 0.000000e+00 : f32
    %2 = vector.broadcast %cst_2 : f32 to vector<1x18x32xf32>
    %c17 = arith.constant 17 : index
    %c0_3 = arith.constant 0 : index
    %c0_4 = arith.constant 0 : index
    %3 = vector.load %arg6[%c17, %c0_3, %c0_4] : memref<18x18x32xf32, #tpu.memory_space<vmem>>, vector<1x18x32xf32>
    tpu.vector_store %arg6[%c17, %c0_3, %c0_4], %2 {strides = array<i32>} : memref<18x18x32xf32, #tpu.memory_space<vmem>>, vector<1x18x32xf32>,
    %cst_5 = arith.constant 0.000000e+00 : f32
    %4 = vector.broadcast %cst_5 : f32 to vector<18x1x32xf32>
    %c0_6 = arith.constant 0 : index
    %c0_7 = arith.constant 0 : index
    %c0_8 = arith.constant 0 : index
    %5 = vector.load %arg6[%c0_6, %c0_7, %c0_8] : memref<18x18x32xf32, #tpu.memory_space<vmem>>, vector<18x1x32xf32>
    tpu.vector_store %arg6[%c0_6, %c0_7, %c0_8], %4 {strides = array<i32>} : memref<18x18x32xf32, #tpu.memory_space<vmem>>, vector<18x1x32xf32>,
    %cst_9 = arith.constant 0.000000e+00 : f32
    %6 = vector.broadcast %cst_9 : f32 to vector<18x1x32xf32>
    %c0_10 = arith.constant 0 : index
    %c17_11 = arith.constant 17 : index
    %c0_12 = arith.constant 0 : index
    %7 = vector.load %arg6[%c0_10, %c17_11, %c0_12] : memref<18x18x32xf32, #tpu.memory_space<vmem>>, vector<18x1x32xf32>
    tpu.vector_store %arg6[%c0_10, %c17_11, %c0_12], %6 {strides = array<i32>} : memref<18x18x32xf32, #tpu.memory_space<vmem>>, vector<18x1x32xf32>,
    %c0_13 = arith.constant 0 : index
    %c0_14 = arith.constant 0 : index
    %c0_15 = arith.constant 0 : index
    %c0_16 = arith.constant 0 : index
    %8 = vector.load %arg1[%c0_13, %c0_14, %c0_15, %c0_16] : memref<1x16x16x32xf32, #tpu.memory_space<vmem>>, vector<1x16x16x32xf32>
    %9 = vector.shape_cast %8 : vector<1x16x16x32xf32> to vector<16x16x32xf32>
    %c1 = arith.constant 1 : index
    %c1_17 = arith.constant 1 : index
    %c0_18 = arith.constant 0 : index
    %10 = vector.load %arg6[%c1, %c1_17, %c0_18] : memref<18x18x32xf32, #tpu.memory_space<vmem>>, vector<16x16x32xf32>
    tpu.vector_store %arg6[%c1, %c1_17, %c0_18], %9 {strides = array<i32>} : memref<18x18x32xf32, #tpu.memory_space<vmem>>, vector<16x16x32xf32>,
    %c0_19 = arith.constant 0 : index
    %c0_20 = arith.constant 0 : index
    %11 = vector.load %arg2[%c0_19, %c0_20] : memref<9x32xf32, #tpu.memory_space<vmem>>, vector<9x32xf32>
    %c0_21 = arith.constant 0 : index
    %c0_22 = arith.constant 0 : index
    %12 = vector.load %arg3[%c0_21, %c0_22] : memref<1x32xf32, #tpu.memory_space<vmem>>, vector<1x32xf32>
    %13 = vector.shape_cast %12 : vector<1x32xf32> to vector<32xf32>
    %cst_23 = arith.constant 0.000000e+00 : f32
    %14 = vector.broadcast %cst_23 : f32 to vector<4x16x32xf32>
    %c0_24 = arith.constant 0 : index
    %c0_25 = arith.constant 0 : index
    %c0_26 = arith.constant 0 : index
    %15 = vector.load %arg6[%c0_24, %c0_25, %c0_26] : memref<18x18x32xf32, #tpu.memory_space<vmem>>, vector<4x16x32xf32>
    %16 = vector.extract_strided_slice %11 {offsets = [0, 0], sizes = [1, 32], strides = [1, 1]} : vector<9x32xf32> to vector<1x32xf32>
    %17 = vector.shape_cast %16 : vector<1x32xf32> to vector<32xf32>
    %18 = vector.shape_cast %17 : vector<32xf32> to vector<1x1x32xf32>
    %19 = vector.broadcast %18 : vector<1x1x32xf32> to vector<4x16x32xf32>
    %20 = arith.mulf %15, %19 : vector<4x16x32xf32>
    %21 = arith.addf %14, %20 : vector<4x16x32xf32>
    %c0_27 = arith.constant 0 : index
    %c1_28 = arith.constant 1 : index
    %c0_29 = arith.constant 0 : index
    %22 = vector.load %arg6[%c0_27, %c1_28, %c0_29] : memref<18x18x32xf32, #tpu.memory_space<vmem>>, vector<4x16x32xf32>
    %23 = vector.extract_strided_slice %11 {offsets = [1, 0], sizes = [1, 32], strides = [1, 1]} : vector<9x32xf32> to vector<1x32xf32>
    %24 = vector.shape_cast %23 : vector<1x32xf32> to vector<32xf32>
    %25 = vector.shape_cast %24 : vector<32xf32> to vector<1x1x32xf32>
    %26 = vector.broadcast %25 : vector<1x1x32xf32> to vector<4x16x32xf32>
    %27 = arith.mulf %22, %26 : vector<4x16x32xf32>
    %28 = arith.addf %21, %27 : vector<4x16x32xf32>
    %c0_30 = arith.constant 0 : index
    %c2 = arith.constant 2 : index
    %c0_31 = arith.constant 0 : index
    %29 = vector.load %arg6[%c0_30, %c2, %c0_31] : memref<18x18x32xf32, #tpu.memory_space<vmem>>, vector<4x16x32xf32>
    %30 = vector.extract_strided_slice %11 {offsets = [2, 0], sizes = [1, 32], strides = [1, 1]} : vector<9x32xf32> to vector<1x32xf32>
    %31 = vector.shape_cast %30 : vector<1x32xf32> to vector<32xf32>
    %32 = vector.shape_cast %31 : vector<32xf32> to vector<1x1x32xf32>
    %33 = vector.broadcast %32 : vector<1x1x32xf32> to vector<4x16x32xf32>
    %34 = arith.mulf %29, %33 : vector<4x16x32xf32>
    %35 = arith.addf %28, %34 : vector<4x16x32xf32>
    %c1_32 = arith.constant 1 : index
    %c0_33 = arith.constant 0 : index
    %c0_34 = arith.constant 0 : index
    %36 = vector.load %arg6[%c1_32, %c0_33, %c0_34] : memref<18x18x32xf32, #tpu.memory_space<vmem>>, vector<4x16x32xf32>
    %37 = vector.extract_strided_slice %11 {offsets = [3, 0], sizes = [1, 32], strides = [1, 1]} : vector<9x32xf32> to vector<1x32xf32>
    %38 = vector.shape_cast %37 : vector<1x32xf32> to vector<32xf32>
    %39 = vector.shape_cast %38 : vector<32xf32> to vector<1x1x32xf32>
    %40 = vector.broadcast %39 : vector<1x1x32xf32> to vector<4x16x32xf32>
    %41 = arith.mulf %36, %40 : vector<4x16x32xf32>
    %42 = arith.addf %35, %41 : vector<4x16x32xf32>
    %c1_35 = arith.constant 1 : index
    %c1_36 = arith.constant 1 : index
    %c0_37 = arith.constant 0 : index
    %43 = vector.load %arg6[%c1_35, %c1_36, %c0_37] : memref<18x18x32xf32, #tpu.memory_space<vmem>>, vector<4x16x32xf32>
    %44 = vector.extract_strided_slice %11 {offsets = [4, 0], sizes = [1, 32], strides = [1, 1]} : vector<9x32xf32> to vector<1x32xf32>
    %45 = vector.shape_cast %44 : vector<1x32xf32> to vector<32xf32>
    %46 = vector.shape_cast %45 : vector<32xf32> to vector<1x1x32xf32>
    %47 = vector.broadcast %46 : vector<1x1x32xf32> to vector<4x16x32xf32>
    %48 = arith.mulf %43, %47 : vector<4x16x32xf32>
    %49 = arith.addf %42, %48 : vector<4x16x32xf32>
    %c1_38 = arith.constant 1 : index
    %c2_39 = arith.constant 2 : index
    %c0_40 = arith.constant 0 : index
    %50 = vector.load %arg6[%c1_38, %c2_39, %c0_40] : memref<18x18x32xf32, #tpu.memory_space<vmem>>, vector<4x16x32xf32>
    %51 = vector.extract_strided_slice %11 {offsets = [5, 0], sizes = [1, 32], strides = [1, 1]} : vector<9x32xf32> to vector<1x32xf32>
    %52 = vector.shape_cast %51 : vector<1x32xf32> to vector<32xf32>
    %53 = vector.shape_cast %52 : vector<32xf32> to vector<1x1x32xf32>
    %54 = vector.broadcast %53 : vector<1x1x32xf32> to vector<4x16x32xf32>
    %55 = arith.mulf %50, %54 : vector<4x16x32xf32>
    %56 = arith.addf %49, %55 : vector<4x16x32xf32>
    %c2_41 = arith.constant 2 : index
    %c0_42 = arith.constant 0 : index
    %c0_43 = arith.constant 0 : index
    %57 = vector.load %arg6[%c2_41, %c0_42, %c0_43] : memref<18x18x32xf32, #tpu.memory_space<vmem>>, vector<4x16x32xf32>
    %58 = vector.extract_strided_slice %11 {offsets = [6, 0], sizes = [1, 32], strides = [1, 1]} : vector<9x32xf32> to vector<1x32xf32>
    %59 = vector.shape_cast %58 : vector<1x32xf32> to vector<32xf32>
    %60 = vector.shape_cast %59 : vector<32xf32> to vector<1x1x32xf32>
    %61 = vector.broadcast %60 : vector<1x1x32xf32> to vector<4x16x32xf32>
    %62 = arith.mulf %57, %61 : vector<4x16x32xf32>
    %63 = arith.addf %56, %62 : vector<4x16x32xf32>
    %c2_44 = arith.constant 2 : index
    %c1_45 = arith.constant 1 : index
    %c0_46 = arith.constant 0 : index
    %64 = vector.load %arg6[%c2_44, %c1_45, %c0_46] : memref<18x18x32xf32, #tpu.memory_space<vmem>>, vector<4x16x32xf32>
    %65 = vector.extract_strided_slice %11 {offsets = [7, 0], sizes = [1, 32], strides = [1, 1]} : vector<9x32xf32> to vector<1x32xf32>
    %66 = vector.shape_cast %65 : vector<1x32xf32> to vector<32xf32>
    %67 = vector.shape_cast %66 : vector<32xf32> to vector<1x1x32xf32>
    %68 = vector.broadcast %67 : vector<1x1x32xf32> to vector<4x16x32xf32>
    %69 = arith.mulf %64, %68 : vector<4x16x32xf32>
    %70 = arith.addf %63, %69 : vector<4x16x32xf32>
    %c2_47 = arith.constant 2 : index
    %c2_48 = arith.constant 2 : index
    %c0_49 = arith.constant 0 : index
    %71 = vector.load %arg6[%c2_47, %c2_48, %c0_49] : memref<18x18x32xf32, #tpu.memory_space<vmem>>, vector<4x16x32xf32>
    %72 = vector.extract_strided_slice %11 {offsets = [8, 0], sizes = [1, 32], strides = [1, 1]} : vector<9x32xf32> to vector<1x32xf32>
    %73 = vector.shape_cast %72 : vector<1x32xf32> to vector<32xf32>
    %74 = vector.shape_cast %73 : vector<32xf32> to vector<1x1x32xf32>
    %75 = vector.broadcast %74 : vector<1x1x32xf32> to vector<4x16x32xf32>
    %76 = arith.mulf %71, %75 : vector<4x16x32xf32>
    %77 = arith.addf %70, %76 : vector<4x16x32xf32>
    %78 = vector.shape_cast %13 : vector<32xf32> to vector<1x1x32xf32>
    %79 = vector.broadcast %78 : vector<1x1x32xf32> to vector<4x16x32xf32>
    %80 = arith.addf %77, %79 : vector<4x16x32xf32>
    %cst_50 = arith.constant 0.000000e+00 : f32
    %cst_51 = arith.constant 6.000000e+00 : f32
    %81 = vector.broadcast %cst_50 : f32 to vector<4x16x32xf32>
    %82 = arith.maximumf %81, %80 : vector<4x16x32xf32>
    %83 = vector.broadcast %cst_51 : f32 to vector<4x16x32xf32>
    %84 = arith.minimumf %83, %82 : vector<4x16x32xf32>
    %c0_52 = arith.constant 0 : index
    %c0_53 = arith.constant 0 : index
    %c0_54 = arith.constant 0 : index
    %c0_55 = arith.constant 0 : index
    %85 = vector.load %arg4[%c0_52, %c0_53, %c0_54, %c0_55] : memref<1x16x16x32xf32, #tpu.memory_space<vmem>>, vector<1x4x16x32xf32>
    %86 = vector.shape_cast %85 : vector<1x4x16x32xf32> to vector<4x16x32xf32>
    %87 = vector.shape_cast %84 : vector<4x16x32xf32> to vector<1x4x16x32xf32>
    tpu.vector_store %arg4[%c0_52, %c0_53, %c0_54, %c0_55], %87 {strides = array<i32>} : memref<1x16x16x32xf32, #tpu.memory_space<vmem>>, vector<1x4x16x32xf32>,
    %88 = vector.extract_strided_slice %84 {offsets = [0, 0, 0], sizes = [4, 4, 32], strides = [1, 1, 1]} : vector<4x16x32xf32> to vector<4x4x32xf32>
    %cst_56 = arith.constant dense<0.000000e+00> : vector<32xf32>
    %89 = vector.multi_reduction <add>, %88, %cst_56 [0, 1] : vector<4x4x32xf32> to vector<32xf32>
    %cst_57 = arith.constant 1.600000e+01 : f32
    %90 = vector.broadcast %cst_57 : f32 to vector<32xf32>
    %91 = arith.divf %89, %90 : vector<32xf32>
    %c0_58 = arith.constant 0 : index
    %c5 = arith.constant 5 : index
    %c0_59 = arith.constant 0 : index
    %92 = vector.load %arg5[%c0_58, %c5, %c0_59] : memref<1x21x32xf32, #tpu.memory_space<vmem>>, vector<1x1x32xf32>
    %93 = vector.shape_cast %92 : vector<1x1x32xf32> to vector<32xf32>
    %94 = vector.shape_cast %91 : vector<32xf32> to vector<1x1x32xf32>
    tpu.vector_store %arg5[%c0_58, %c5, %c0_59], %94 {strides = array<i32>} : memref<1x21x32xf32, #tpu.memory_space<vmem>>, vector<1x1x32xf32>,
    %95 = vector.extract_strided_slice %84 {offsets = [0, 4, 0], sizes = [4, 4, 32], strides = [1, 1, 1]} : vector<4x16x32xf32> to vector<4x4x32xf32>
    %cst_60 = arith.constant dense<0.000000e+00> : vector<32xf32>
    %96 = vector.multi_reduction <add>, %95, %cst_60 [0, 1] : vector<4x4x32xf32> to vector<32xf32>
    %cst_61 = arith.constant 1.600000e+01 : f32
    %97 = vector.broadcast %cst_61 : f32 to vector<32xf32>
    %98 = arith.divf %96, %97 : vector<32xf32>
    %c0_62 = arith.constant 0 : index
    %c6 = arith.constant 6 : index
    %c0_63 = arith.constant 0 : index
    %99 = vector.load %arg5[%c0_62, %c6, %c0_63] : memref<1x21x32xf32, #tpu.memory_space<vmem>>, vector<1x1x32xf32>
    %100 = vector.shape_cast %99 : vector<1x1x32xf32> to vector<32xf32>
    %101 = vector.shape_cast %98 : vector<32xf32> to vector<1x1x32xf32>
    tpu.vector_store %arg5[%c0_62, %c6, %c0_63], %101 {strides = array<i32>} : memref<1x21x32xf32, #tpu.memory_space<vmem>>, vector<1x1x32xf32>,
    %102 = vector.extract_strided_slice %84 {offsets = [0, 8, 0], sizes = [4, 4, 32], strides = [1, 1, 1]} : vector<4x16x32xf32> to vector<4x4x32xf32>
    %cst_64 = arith.constant dense<0.000000e+00> : vector<32xf32>
    %103 = vector.multi_reduction <add>, %102, %cst_64 [0, 1] : vector<4x4x32xf32> to vector<32xf32>
    %cst_65 = arith.constant 1.600000e+01 : f32
    %104 = vector.broadcast %cst_65 : f32 to vector<32xf32>
    %105 = arith.divf %103, %104 : vector<32xf32>
    %c0_66 = arith.constant 0 : index
    %c7 = arith.constant 7 : index
    %c0_67 = arith.constant 0 : index
    %106 = vector.load %arg5[%c0_66, %c7, %c0_67] : memref<1x21x32xf32, #tpu.memory_space<vmem>>, vector<1x1x32xf32>
    %107 = vector.shape_cast %106 : vector<1x1x32xf32> to vector<32xf32>
    %108 = vector.shape_cast %105 : vector<32xf32> to vector<1x1x32xf32>
    tpu.vector_store %arg5[%c0_66, %c7, %c0_67], %108 {strides = array<i32>} : memref<1x21x32xf32, #tpu.memory_space<vmem>>, vector<1x1x32xf32>,
    %109 = vector.extract_strided_slice %84 {offsets = [0, 12, 0], sizes = [4, 4, 32], strides = [1, 1, 1]} : vector<4x16x32xf32> to vector<4x4x32xf32>
    %cst_68 = arith.constant dense<0.000000e+00> : vector<32xf32>
    %110 = vector.multi_reduction <add>, %109, %cst_68 [0, 1] : vector<4x4x32xf32> to vector<32xf32>
    %cst_69 = arith.constant 1.600000e+01 : f32
    %111 = vector.broadcast %cst_69 : f32 to vector<32xf32>
    %112 = arith.divf %110, %111 : vector<32xf32>
    %c0_70 = arith.constant 0 : index
    %c8 = arith.constant 8 : index
    %c0_71 = arith.constant 0 : index
    %113 = vector.load %arg5[%c0_70, %c8, %c0_71] : memref<1x21x32xf32, #tpu.memory_space<vmem>>, vector<1x1x32xf32>
    %114 = vector.shape_cast %113 : vector<1x1x32xf32> to vector<32xf32>
    %115 = vector.shape_cast %112 : vector<32xf32> to vector<1x1x32xf32>
    tpu.vector_store %arg5[%c0_70, %c8, %c0_71], %115 {strides = array<i32>} : memref<1x21x32xf32, #tpu.memory_space<vmem>>, vector<1x1x32xf32>,
    %cst_72 = arith.constant 0.000000e+00 : f32
    %116 = vector.broadcast %cst_72 : f32 to vector<4x16x32xf32>
    %c4 = arith.constant 4 : index
    %c0_73 = arith.constant 0 : index
    %c0_74 = arith.constant 0 : index
    %117 = vector.load %arg6[%c4, %c0_73, %c0_74] : memref<18x18x32xf32, #tpu.memory_space<vmem>>, vector<4x16x32xf32>
    %118 = vector.extract_strided_slice %11 {offsets = [0, 0], sizes = [1, 32], strides = [1, 1]} : vector<9x32xf32> to vector<1x32xf32>
    %119 = vector.shape_cast %118 : vector<1x32xf32> to vector<32xf32>
    %120 = vector.shape_cast %119 : vector<32xf32> to vector<1x1x32xf32>
    %121 = vector.broadcast %120 : vector<1x1x32xf32> to vector<4x16x32xf32>
    %122 = arith.mulf %117, %121 : vector<4x16x32xf32>
    %123 = arith.addf %116, %122 : vector<4x16x32xf32>
    %c4_75 = arith.constant 4 : index
    %c1_76 = arith.constant 1 : index
    %c0_77 = arith.constant 0 : index
    %124 = vector.load %arg6[%c4_75, %c1_76, %c0_77] : memref<18x18x32xf32, #tpu.memory_space<vmem>>, vector<4x16x32xf32>
    %125 = vector.extract_strided_slice %11 {offsets = [1, 0], sizes = [1, 32], strides = [1, 1]} : vector<9x32xf32> to vector<1x32xf32>
    %126 = vector.shape_cast %125 : vector<1x32xf32> to vector<32xf32>
    %127 = vector.shape_cast %126 : vector<32xf32> to vector<1x1x32xf32>
    %128 = vector.broadcast %127 : vector<1x1x32xf32> to vector<4x16x32xf32>
    %129 = arith.mulf %124, %128 : vector<4x16x32xf32>
    %130 = arith.addf %123, %129 : vector<4x16x32xf32>
    %c4_78 = arith.constant 4 : index
    %c2_79 = arith.constant 2 : index
    %c0_80 = arith.constant 0 : index
    %131 = vector.load %arg6[%c4_78, %c2_79, %c0_80] : memref<18x18x32xf32, #tpu.memory_space<vmem>>, vector<4x16x32xf32>
    %132 = vector.extract_strided_slice %11 {offsets = [2, 0], sizes = [1, 32], strides = [1, 1]} : vector<9x32xf32> to vector<1x32xf32>
    %133 = vector.shape_cast %132 : vector<1x32xf32> to vector<32xf32>
    %134 = vector.shape_cast %133 : vector<32xf32> to vector<1x1x32xf32>
    %135 = vector.broadcast %134 : vector<1x1x32xf32> to vector<4x16x32xf32>
    %136 = arith.mulf %131, %135 : vector<4x16x32xf32>
    %137 = arith.addf %130, %136 : vector<4x16x32xf32>
    %c5_81 = arith.constant 5 : index
    %c0_82 = arith.constant 0 : index
    %c0_83 = arith.constant 0 : index
    %138 = vector.load %arg6[%c5_81, %c0_82, %c0_83] : memref<18x18x32xf32, #tpu.memory_space<vmem>>, vector<4x16x32xf32>
    %139 = vector.extract_strided_slice %11 {offsets = [3, 0], sizes = [1, 32], strides = [1, 1]} : vector<9x32xf32> to vector<1x32xf32>
    %140 = vector.shape_cast %139 : vector<1x32xf32> to vector<32xf32>
    %141 = vector.shape_cast %140 : vector<32xf32> to vector<1x1x32xf32>
    %142 = vector.broadcast %141 : vector<1x1x32xf32> to vector<4x16x32xf32>
    %143 = arith.mulf %138, %142 : vector<4x16x32xf32>
    %144 = arith.addf %137, %143 : vector<4x16x32xf32>
    %c5_84 = arith.constant 5 : index
    %c1_85 = arith.constant 1 : index
    %c0_86 = arith.constant 0 : index
    %145 = vector.load %arg6[%c5_84, %c1_85, %c0_86] : memref<18x18x32xf32, #tpu.memory_space<vmem>>, vector<4x16x32xf32>
    %146 = vector.extract_strided_slice %11 {offsets = [4, 0], sizes = [1, 32], strides = [1, 1]} : vector<9x32xf32> to vector<1x32xf32>
    %147 = vector.shape_cast %146 : vector<1x32xf32> to vector<32xf32>
    %148 = vector.shape_cast %147 : vector<32xf32> to vector<1x1x32xf32>
    %149 = vector.broadcast %148 : vector<1x1x32xf32> to vector<4x16x32xf32>
    %150 = arith.mulf %145, %149 : vector<4x16x32xf32>
    %151 = arith.addf %144, %150 : vector<4x16x32xf32>
    %c5_87 = arith.constant 5 : index
    %c2_88 = arith.constant 2 : index
    %c0_89 = arith.constant 0 : index
    %152 = vector.load %arg6[%c5_87, %c2_88, %c0_89] : memref<18x18x32xf32, #tpu.memory_space<vmem>>, vector<4x16x32xf32>
    %153 = vector.extract_strided_slice %11 {offsets = [5, 0], sizes = [1, 32], strides = [1, 1]} : vector<9x32xf32> to vector<1x32xf32>
    %154 = vector.shape_cast %153 : vector<1x32xf32> to vector<32xf32>
    %155 = vector.shape_cast %154 : vector<32xf32> to vector<1x1x32xf32>
    %156 = vector.broadcast %155 : vector<1x1x32xf32> to vector<4x16x32xf32>
    %157 = arith.mulf %152, %156 : vector<4x16x32xf32>
    %158 = arith.addf %151, %157 : vector<4x16x32xf32>
    %c6_90 = arith.constant 6 : index
    %c0_91 = arith.constant 0 : index
    %c0_92 = arith.constant 0 : index
    %159 = vector.load %arg6[%c6_90, %c0_91, %c0_92] : memref<18x18x32xf32, #tpu.memory_space<vmem>>, vector<4x16x32xf32>
    %160 = vector.extract_strided_slice %11 {offsets = [6, 0], sizes = [1, 32], strides = [1, 1]} : vector<9x32xf32> to vector<1x32xf32>
    %161 = vector.shape_cast %160 : vector<1x32xf32> to vector<32xf32>
    %162 = vector.shape_cast %161 : vector<32xf32> to vector<1x1x32xf32>
    %163 = vector.broadcast %162 : vector<1x1x32xf32> to vector<4x16x32xf32>
    %164 = arith.mulf %159, %163 : vector<4x16x32xf32>
    %165 = arith.addf %158, %164 : vector<4x16x32xf32>
    %c6_93 = arith.constant 6 : index
    %c1_94 = arith.constant 1 : index
    %c0_95 = arith.constant 0 : index
    %166 = vector.load %arg6[%c6_93, %c1_94, %c0_95] : memref<18x18x32xf32, #tpu.memory_space<vmem>>, vector<4x16x32xf32>
    %167 = vector.extract_strided_slice %11 {offsets = [7, 0], sizes = [1, 32], strides = [1, 1]} : vector<9x32xf32> to vector<1x32xf32>
    %168 = vector.shape_cast %167 : vector<1x32xf32> to vector<32xf32>
    %169 = vector.shape_cast %168 : vector<32xf32> to vector<1x1x32xf32>
    %170 = vector.broadcast %169 : vector<1x1x32xf32> to vector<4x16x32xf32>
    %171 = arith.mulf %166, %170 : vector<4x16x32xf32>
    %172 = arith.addf %165, %171 : vector<4x16x32xf32>
    %c6_96 = arith.constant 6 : index
    %c2_97 = arith.constant 2 : index
    %c0_98 = arith.constant 0 : index
    %173 = vector.load %arg6[%c6_96, %c2_97, %c0_98] : memref<18x18x32xf32, #tpu.memory_space<vmem>>, vector<4x16x32xf32>
    %174 = vector.extract_strided_slice %11 {offsets = [8, 0], sizes = [1, 32], strides = [1, 1]} : vector<9x32xf32> to vector<1x32xf32>
    %175 = vector.shape_cast %174 : vector<1x32xf32> to vector<32xf32>
    %176 = vector.shape_cast %175 : vector<32xf32> to vector<1x1x32xf32>
    %177 = vector.broadcast %176 : vector<1x1x32xf32> to vector<4x16x32xf32>
    %178 = arith.mulf %173, %177 : vector<4x16x32xf32>
    %179 = arith.addf %172, %178 : vector<4x16x32xf32>
    %180 = vector.shape_cast %13 : vector<32xf32> to vector<1x1x32xf32>
    %181 = vector.broadcast %180 : vector<1x1x32xf32> to vector<4x16x32xf32>
    %182 = arith.addf %179, %181 : vector<4x16x32xf32>
    %cst_99 = arith.constant 0.000000e+00 : f32
    %cst_100 = arith.constant 6.000000e+00 : f32
    %183 = vector.broadcast %cst_99 : f32 to vector<4x16x32xf32>
    %184 = arith.maximumf %183, %182 : vector<4x16x32xf32>
    %185 = vector.broadcast %cst_100 : f32 to vector<4x16x32xf32>
    %186 = arith.minimumf %185, %184 : vector<4x16x32xf32>
    %c0_101 = arith.constant 0 : index
    %c4_102 = arith.constant 4 : index
    %c0_103 = arith.constant 0 : index
    %c0_104 = arith.constant 0 : index
    %187 = vector.load %arg4[%c0_101, %c4_102, %c0_103, %c0_104] : memref<1x16x16x32xf32, #tpu.memory_space<vmem>>, vector<1x4x16x32xf32>
    %188 = vector.shape_cast %187 : vector<1x4x16x32xf32> to vector<4x16x32xf32>
    %189 = vector.shape_cast %186 : vector<4x16x32xf32> to vector<1x4x16x32xf32>
    tpu.vector_store %arg4[%c0_101, %c4_102, %c0_103, %c0_104], %189 {strides = array<i32>} : memref<1x16x16x32xf32, #tpu.memory_space<vmem>>, vector<1x4x16x32xf32>,
    %190 = vector.extract_strided_slice %186 {offsets = [0, 0, 0], sizes = [4, 4, 32], strides = [1, 1, 1]} : vector<4x16x32xf32> to vector<4x4x32xf32>
    %cst_105 = arith.constant dense<0.000000e+00> : vector<32xf32>
    %191 = vector.multi_reduction <add>, %190, %cst_105 [0, 1] : vector<4x4x32xf32> to vector<32xf32>
    %cst_106 = arith.constant 1.600000e+01 : f32
    %192 = vector.broadcast %cst_106 : f32 to vector<32xf32>
    %193 = arith.divf %191, %192 : vector<32xf32>
    %c0_107 = arith.constant 0 : index
    %c9 = arith.constant 9 : index
    %c0_108 = arith.constant 0 : index
    %194 = vector.load %arg5[%c0_107, %c9, %c0_108] : memref<1x21x32xf32, #tpu.memory_space<vmem>>, vector<1x1x32xf32>
    %195 = vector.shape_cast %194 : vector<1x1x32xf32> to vector<32xf32>
    %196 = vector.shape_cast %193 : vector<32xf32> to vector<1x1x32xf32>
    tpu.vector_store %arg5[%c0_107, %c9, %c0_108], %196 {strides = array<i32>} : memref<1x21x32xf32, #tpu.memory_space<vmem>>, vector<1x1x32xf32>,
    %197 = vector.extract_strided_slice %186 {offsets = [0, 4, 0], sizes = [4, 4, 32], strides = [1, 1, 1]} : vector<4x16x32xf32> to vector<4x4x32xf32>
    %cst_109 = arith.constant dense<0.000000e+00> : vector<32xf32>
    %198 = vector.multi_reduction <add>, %197, %cst_109 [0, 1] : vector<4x4x32xf32> to vector<32xf32>
    %cst_110 = arith.constant 1.600000e+01 : f32
    %199 = vector.broadcast %cst_110 : f32 to vector<32xf32>
    %200 = arith.divf %198, %199 : vector<32xf32>
    %c0_111 = arith.constant 0 : index
    %c10 = arith.constant 10 : index
    %c0_112 = arith.constant 0 : index
    %201 = vector.load %arg5[%c0_111, %c10, %c0_112] : memref<1x21x32xf32, #tpu.memory_space<vmem>>, vector<1x1x32xf32>
    %202 = vector.shape_cast %201 : vector<1x1x32xf32> to vector<32xf32>
    %203 = vector.shape_cast %200 : vector<32xf32> to vector<1x1x32xf32>
    tpu.vector_store %arg5[%c0_111, %c10, %c0_112], %203 {strides = array<i32>} : memref<1x21x32xf32, #tpu.memory_space<vmem>>, vector<1x1x32xf32>,
    %204 = vector.extract_strided_slice %186 {offsets = [0, 8, 0], sizes = [4, 4, 32], strides = [1, 1, 1]} : vector<4x16x32xf32> to vector<4x4x32xf32>
    %cst_113 = arith.constant dense<0.000000e+00> : vector<32xf32>
    %205 = vector.multi_reduction <add>, %204, %cst_113 [0, 1] : vector<4x4x32xf32> to vector<32xf32>
    %cst_114 = arith.constant 1.600000e+01 : f32
    %206 = vector.broadcast %cst_114 : f32 to vector<32xf32>
    %207 = arith.divf %205, %206 : vector<32xf32>
    %c0_115 = arith.constant 0 : index
    %c11 = arith.constant 11 : index
    %c0_116 = arith.constant 0 : index
    %208 = vector.load %arg5[%c0_115, %c11, %c0_116] : memref<1x21x32xf32, #tpu.memory_space<vmem>>, vector<1x1x32xf32>
    %209 = vector.shape_cast %208 : vector<1x1x32xf32> to vector<32xf32>
    %210 = vector.shape_cast %207 : vector<32xf32> to vector<1x1x32xf32>
    tpu.vector_store %arg5[%c0_115, %c11, %c0_116], %210 {strides = array<i32>} : memref<1x21x32xf32, #tpu.memory_space<vmem>>, vector<1x1x32xf32>,
    %211 = vector.extract_strided_slice %186 {offsets = [0, 12, 0], sizes = [4, 4, 32], strides = [1, 1, 1]} : vector<4x16x32xf32> to vector<4x4x32xf32>
    %cst_117 = arith.constant dense<0.000000e+00> : vector<32xf32>
    %212 = vector.multi_reduction <add>, %211, %cst_117 [0, 1] : vector<4x4x32xf32> to vector<32xf32>
    %cst_118 = arith.constant 1.600000e+01 : f32
    %213 = vector.broadcast %cst_118 : f32 to vector<32xf32>
    %214 = arith.divf %212, %213 : vector<32xf32>
    %c0_119 = arith.constant 0 : index
    %c12 = arith.constant 12 : index
    %c0_120 = arith.constant 0 : index
    %215 = vector.load %arg5[%c0_119, %c12, %c0_120] : memref<1x21x32xf32, #tpu.memory_space<vmem>>, vector<1x1x32xf32>
    %216 = vector.shape_cast %215 : vector<1x1x32xf32> to vector<32xf32>
    %217 = vector.shape_cast %214 : vector<32xf32> to vector<1x1x32xf32>
    tpu.vector_store %arg5[%c0_119, %c12, %c0_120], %217 {strides = array<i32>} : memref<1x21x32xf32, #tpu.memory_space<vmem>>, vector<1x1x32xf32>,
    %cst_121 = arith.constant 0.000000e+00 : f32
    %218 = vector.broadcast %cst_121 : f32 to vector<4x16x32xf32>
    %c8_122 = arith.constant 8 : index
    %c0_123 = arith.constant 0 : index
    %c0_124 = arith.constant 0 : index
    %219 = vector.load %arg6[%c8_122, %c0_123, %c0_124] : memref<18x18x32xf32, #tpu.memory_space<vmem>>, vector<4x16x32xf32>
    %220 = vector.extract_strided_slice %11 {offsets = [0, 0], sizes = [1, 32], strides = [1, 1]} : vector<9x32xf32> to vector<1x32xf32>
    %221 = vector.shape_cast %220 : vector<1x32xf32> to vector<32xf32>
    %222 = vector.shape_cast %221 : vector<32xf32> to vector<1x1x32xf32>
    %223 = vector.broadcast %222 : vector<1x1x32xf32> to vector<4x16x32xf32>
    %224 = arith.mulf %219, %223 : vector<4x16x32xf32>
    %225 = arith.addf %218, %224 : vector<4x16x32xf32>
    %c8_125 = arith.constant 8 : index
    %c1_126 = arith.constant 1 : index
    %c0_127 = arith.constant 0 : index
    %226 = vector.load %arg6[%c8_125, %c1_126, %c0_127] : memref<18x18x32xf32, #tpu.memory_space<vmem>>, vector<4x16x32xf32>
    %227 = vector.extract_strided_slice %11 {offsets = [1, 0], sizes = [1, 32], strides = [1, 1]} : vector<9x32xf32> to vector<1x32xf32>
    %228 = vector.shape_cast %227 : vector<1x32xf32> to vector<32xf32>
    %229 = vector.shape_cast %228 : vector<32xf32> to vector<1x1x32xf32>
    %230 = vector.broadcast %229 : vector<1x1x32xf32> to vector<4x16x32xf32>
    %231 = arith.mulf %226, %230 : vector<4x16x32xf32>
    %232 = arith.addf %225, %231 : vector<4x16x32xf32>
    %c8_128 = arith.constant 8 : index
    %c2_129 = arith.constant 2 : index
    %c0_130 = arith.constant 0 : index
    %233 = vector.load %arg6[%c8_128, %c2_129, %c0_130] : memref<18x18x32xf32, #tpu.memory_space<vmem>>, vector<4x16x32xf32>
    %234 = vector.extract_strided_slice %11 {offsets = [2, 0], sizes = [1, 32], strides = [1, 1]} : vector<9x32xf32> to vector<1x32xf32>
    %235 = vector.shape_cast %234 : vector<1x32xf32> to vector<32xf32>
    %236 = vector.shape_cast %235 : vector<32xf32> to vector<1x1x32xf32>
    %237 = vector.broadcast %236 : vector<1x1x32xf32> to vector<4x16x32xf32>
    %238 = arith.mulf %233, %237 : vector<4x16x32xf32>
    %239 = arith.addf %232, %238 : vector<4x16x32xf32>
    %c9_131 = arith.constant 9 : index
    %c0_132 = arith.constant 0 : index
    %c0_133 = arith.constant 0 : index
    %240 = vector.load %arg6[%c9_131, %c0_132, %c0_133] : memref<18x18x32xf32, #tpu.memory_space<vmem>>, vector<4x16x32xf32>
    %241 = vector.extract_strided_slice %11 {offsets = [3, 0], sizes = [1, 32], strides = [1, 1]} : vector<9x32xf32> to vector<1x32xf32>
    %242 = vector.shape_cast %241 : vector<1x32xf32> to vector<32xf32>
    %243 = vector.shape_cast %242 : vector<32xf32> to vector<1x1x32xf32>
    %244 = vector.broadcast %243 : vector<1x1x32xf32> to vector<4x16x32xf32>
    %245 = arith.mulf %240, %244 : vector<4x16x32xf32>
    %246 = arith.addf %239, %245 : vector<4x16x32xf32>
    %c9_134 = arith.constant 9 : index
    %c1_135 = arith.constant 1 : index
    %c0_136 = arith.constant 0 : index
    %247 = vector.load %arg6[%c9_134, %c1_135, %c0_136] : memref<18x18x32xf32, #tpu.memory_space<vmem>>, vector<4x16x32xf32>
    %248 = vector.extract_strided_slice %11 {offsets = [4, 0], sizes = [1, 32], strides = [1, 1]} : vector<9x32xf32> to vector<1x32xf32>
    %249 = vector.shape_cast %248 : vector<1x32xf32> to vector<32xf32>
    %250 = vector.shape_cast %249 : vector<32xf32> to vector<1x1x32xf32>
    %251 = vector.broadcast %250 : vector<1x1x32xf32> to vector<4x16x32xf32>
    %252 = arith.mulf %247, %251 : vector<4x16x32xf32>
    %253 = arith.addf %246, %252 : vector<4x16x32xf32>
    %c9_137 = arith.constant 9 : index
    %c2_138 = arith.constant 2 : index
    %c0_139 = arith.constant 0 : index
    %254 = vector.load %arg6[%c9_137, %c2_138, %c0_139] : memref<18x18x32xf32, #tpu.memory_space<vmem>>, vector<4x16x32xf32>
    %255 = vector.extract_strided_slice %11 {offsets = [5, 0], sizes = [1, 32], strides = [1, 1]} : vector<9x32xf32> to vector<1x32xf32>
    %256 = vector.shape_cast %255 : vector<1x32xf32> to vector<32xf32>
    %257 = vector.shape_cast %256 : vector<32xf32> to vector<1x1x32xf32>
    %258 = vector.broadcast %257 : vector<1x1x32xf32> to vector<4x16x32xf32>
    %259 = arith.mulf %254, %258 : vector<4x16x32xf32>
    %260 = arith.addf %253, %259 : vector<4x16x32xf32>
    %c10_140 = arith.constant 10 : index
    %c0_141 = arith.constant 0 : index
    %c0_142 = arith.constant 0 : index
    %261 = vector.load %arg6[%c10_140, %c0_141, %c0_142] : memref<18x18x32xf32, #tpu.memory_space<vmem>>, vector<4x16x32xf32>
    %262 = vector.extract_strided_slice %11 {offsets = [6, 0], sizes = [1, 32], strides = [1, 1]} : vector<9x32xf32> to vector<1x32xf32>
    %263 = vector.shape_cast %262 : vector<1x32xf32> to vector<32xf32>
    %264 = vector.shape_cast %263 : vector<32xf32> to vector<1x1x32xf32>
    %265 = vector.broadcast %264 : vector<1x1x32xf32> to vector<4x16x32xf32>
    %266 = arith.mulf %261, %265 : vector<4x16x32xf32>
    %267 = arith.addf %260, %266 : vector<4x16x32xf32>
    %c10_143 = arith.constant 10 : index
    %c1_144 = arith.constant 1 : index
    %c0_145 = arith.constant 0 : index
    %268 = vector.load %arg6[%c10_143, %c1_144, %c0_145] : memref<18x18x32xf32, #tpu.memory_space<vmem>>, vector<4x16x32xf32>
    %269 = vector.extract_strided_slice %11 {offsets = [7, 0], sizes = [1, 32], strides = [1, 1]} : vector<9x32xf32> to vector<1x32xf32>
    %270 = vector.shape_cast %269 : vector<1x32xf32> to vector<32xf32>
    %271 = vector.shape_cast %270 : vector<32xf32> to vector<1x1x32xf32>
    %272 = vector.broadcast %271 : vector<1x1x32xf32> to vector<4x16x32xf32>
    %273 = arith.mulf %268, %272 : vector<4x16x32xf32>
    %274 = arith.addf %267, %273 : vector<4x16x32xf32>
    %c10_146 = arith.constant 10 : index
    %c2_147 = arith.constant 2 : index
    %c0_148 = arith.constant 0 : index
    %275 = vector.load %arg6[%c10_146, %c2_147, %c0_148] : memref<18x18x32xf32, #tpu.memory_space<vmem>>, vector<4x16x32xf32>
    %276 = vector.extract_strided_slice %11 {offsets = [8, 0], sizes = [1, 32], strides = [1, 1]} : vector<9x32xf32> to vector<1x32xf32>
    %277 = vector.shape_cast %276 : vector<1x32xf32> to vector<32xf32>
    %278 = vector.shape_cast %277 : vector<32xf32> to vector<1x1x32xf32>
    %279 = vector.broadcast %278 : vector<1x1x32xf32> to vector<4x16x32xf32>
    %280 = arith.mulf %275, %279 : vector<4x16x32xf32>
    %281 = arith.addf %274, %280 : vector<4x16x32xf32>
    %282 = vector.shape_cast %13 : vector<32xf32> to vector<1x1x32xf32>
    %283 = vector.broadcast %282 : vector<1x1x32xf32> to vector<4x16x32xf32>
    %284 = arith.addf %281, %283 : vector<4x16x32xf32>
    %cst_149 = arith.constant 0.000000e+00 : f32
    %cst_150 = arith.constant 6.000000e+00 : f32
    %285 = vector.broadcast %cst_149 : f32 to vector<4x16x32xf32>
    %286 = arith.maximumf %285, %284 : vector<4x16x32xf32>
    %287 = vector.broadcast %cst_150 : f32 to vector<4x16x32xf32>
    %288 = arith.minimumf %287, %286 : vector<4x16x32xf32>
    %c0_151 = arith.constant 0 : index
    %c8_152 = arith.constant 8 : index
    %c0_153 = arith.constant 0 : index
    %c0_154 = arith.constant 0 : index
    %289 = vector.load %arg4[%c0_151, %c8_152, %c0_153, %c0_154] : memref<1x16x16x32xf32, #tpu.memory_space<vmem>>, vector<1x4x16x32xf32>
    %290 = vector.shape_cast %289 : vector<1x4x16x32xf32> to vector<4x16x32xf32>
    %291 = vector.shape_cast %288 : vector<4x16x32xf32> to vector<1x4x16x32xf32>
    tpu.vector_store %arg4[%c0_151, %c8_152, %c0_153, %c0_154], %291 {strides = array<i32>} : memref<1x16x16x32xf32, #tpu.memory_space<vmem>>, vector<1x4x16x32xf32>,
    %292 = vector.extract_strided_slice %288 {offsets = [0, 0, 0], sizes = [4, 4, 32], strides = [1, 1, 1]} : vector<4x16x32xf32> to vector<4x4x32xf32>
    %cst_155 = arith.constant dense<0.000000e+00> : vector<32xf32>
    %293 = vector.multi_reduction <add>, %292, %cst_155 [0, 1] : vector<4x4x32xf32> to vector<32xf32>
    %cst_156 = arith.constant 1.600000e+01 : f32
    %294 = vector.broadcast %cst_156 : f32 to vector<32xf32>
    %295 = arith.divf %293, %294 : vector<32xf32>
    %c0_157 = arith.constant 0 : index
    %c13 = arith.constant 13 : index
    %c0_158 = arith.constant 0 : index
    %296 = vector.load %arg5[%c0_157, %c13, %c0_158] : memref<1x21x32xf32, #tpu.memory_space<vmem>>, vector<1x1x32xf32>
    %297 = vector.shape_cast %296 : vector<1x1x32xf32> to vector<32xf32>
    %298 = vector.shape_cast %295 : vector<32xf32> to vector<1x1x32xf32>
    tpu.vector_store %arg5[%c0_157, %c13, %c0_158], %298 {strides = array<i32>} : memref<1x21x32xf32, #tpu.memory_space<vmem>>, vector<1x1x32xf32>,
    %299 = vector.extract_strided_slice %288 {offsets = [0, 4, 0], sizes = [4, 4, 32], strides = [1, 1, 1]} : vector<4x16x32xf32> to vector<4x4x32xf32>
    %cst_159 = arith.constant dense<0.000000e+00> : vector<32xf32>
    %300 = vector.multi_reduction <add>, %299, %cst_159 [0, 1] : vector<4x4x32xf32> to vector<32xf32>
    %cst_160 = arith.constant 1.600000e+01 : f32
    %301 = vector.broadcast %cst_160 : f32 to vector<32xf32>
    %302 = arith.divf %300, %301 : vector<32xf32>
    %c0_161 = arith.constant 0 : index
    %c14 = arith.constant 14 : index
    %c0_162 = arith.constant 0 : index
    %303 = vector.load %arg5[%c0_161, %c14, %c0_162] : memref<1x21x32xf32, #tpu.memory_space<vmem>>, vector<1x1x32xf32>
    %304 = vector.shape_cast %303 : vector<1x1x32xf32> to vector<32xf32>
    %305 = vector.shape_cast %302 : vector<32xf32> to vector<1x1x32xf32>
    tpu.vector_store %arg5[%c0_161, %c14, %c0_162], %305 {strides = array<i32>} : memref<1x21x32xf32, #tpu.memory_space<vmem>>, vector<1x1x32xf32>,
    %306 = vector.extract_strided_slice %288 {offsets = [0, 8, 0], sizes = [4, 4, 32], strides = [1, 1, 1]} : vector<4x16x32xf32> to vector<4x4x32xf32>
    %cst_163 = arith.constant dense<0.000000e+00> : vector<32xf32>
    %307 = vector.multi_reduction <add>, %306, %cst_163 [0, 1] : vector<4x4x32xf32> to vector<32xf32>
    %cst_164 = arith.constant 1.600000e+01 : f32
    %308 = vector.broadcast %cst_164 : f32 to vector<32xf32>
    %309 = arith.divf %307, %308 : vector<32xf32>
    %c0_165 = arith.constant 0 : index
    %c15 = arith.constant 15 : index
    %c0_166 = arith.constant 0 : index
    %310 = vector.load %arg5[%c0_165, %c15, %c0_166] : memref<1x21x32xf32, #tpu.memory_space<vmem>>, vector<1x1x32xf32>
    %311 = vector.shape_cast %310 : vector<1x1x32xf32> to vector<32xf32>
    %312 = vector.shape_cast %309 : vector<32xf32> to vector<1x1x32xf32>
    tpu.vector_store %arg5[%c0_165, %c15, %c0_166], %312 {strides = array<i32>} : memref<1x21x32xf32, #tpu.memory_space<vmem>>, vector<1x1x32xf32>,
    %313 = vector.extract_strided_slice %288 {offsets = [0, 12, 0], sizes = [4, 4, 32], strides = [1, 1, 1]} : vector<4x16x32xf32> to vector<4x4x32xf32>
    %cst_167 = arith.constant dense<0.000000e+00> : vector<32xf32>
    %314 = vector.multi_reduction <add>, %313, %cst_167 [0, 1] : vector<4x4x32xf32> to vector<32xf32>
    %cst_168 = arith.constant 1.600000e+01 : f32
    %315 = vector.broadcast %cst_168 : f32 to vector<32xf32>
    %316 = arith.divf %314, %315 : vector<32xf32>
    %c0_169 = arith.constant 0 : index
    %c16 = arith.constant 16 : index
    %c0_170 = arith.constant 0 : index
    %317 = vector.load %arg5[%c0_169, %c16, %c0_170] : memref<1x21x32xf32, #tpu.memory_space<vmem>>, vector<1x1x32xf32>
    %318 = vector.shape_cast %317 : vector<1x1x32xf32> to vector<32xf32>
    %319 = vector.shape_cast %316 : vector<32xf32> to vector<1x1x32xf32>
    tpu.vector_store %arg5[%c0_169, %c16, %c0_170], %319 {strides = array<i32>} : memref<1x21x32xf32, #tpu.memory_space<vmem>>, vector<1x1x32xf32>,
    %cst_171 = arith.constant 0.000000e+00 : f32
    %320 = vector.broadcast %cst_171 : f32 to vector<4x16x32xf32>
    %c12_172 = arith.constant 12 : index
    %c0_173 = arith.constant 0 : index
    %c0_174 = arith.constant 0 : index
    %321 = vector.load %arg6[%c12_172, %c0_173, %c0_174] : memref<18x18x32xf32, #tpu.memory_space<vmem>>, vector<4x16x32xf32>
    %322 = vector.extract_strided_slice %11 {offsets = [0, 0], sizes = [1, 32], strides = [1, 1]} : vector<9x32xf32> to vector<1x32xf32>
    %323 = vector.shape_cast %322 : vector<1x32xf32> to vector<32xf32>
    %324 = vector.shape_cast %323 : vector<32xf32> to vector<1x1x32xf32>
    %325 = vector.broadcast %324 : vector<1x1x32xf32> to vector<4x16x32xf32>
    %326 = arith.mulf %321, %325 : vector<4x16x32xf32>
    %327 = arith.addf %320, %326 : vector<4x16x32xf32>
    %c12_175 = arith.constant 12 : index
    %c1_176 = arith.constant 1 : index
    %c0_177 = arith.constant 0 : index
    %328 = vector.load %arg6[%c12_175, %c1_176, %c0_177] : memref<18x18x32xf32, #tpu.memory_space<vmem>>, vector<4x16x32xf32>
    %329 = vector.extract_strided_slice %11 {offsets = [1, 0], sizes = [1, 32], strides = [1, 1]} : vector<9x32xf32> to vector<1x32xf32>
    %330 = vector.shape_cast %329 : vector<1x32xf32> to vector<32xf32>
    %331 = vector.shape_cast %330 : vector<32xf32> to vector<1x1x32xf32>
    %332 = vector.broadcast %331 : vector<1x1x32xf32> to vector<4x16x32xf32>
    %333 = arith.mulf %328, %332 : vector<4x16x32xf32>
    %334 = arith.addf %327, %333 : vector<4x16x32xf32>
    %c12_178 = arith.constant 12 : index
    %c2_179 = arith.constant 2 : index
    %c0_180 = arith.constant 0 : index
    %335 = vector.load %arg6[%c12_178, %c2_179, %c0_180] : memref<18x18x32xf32, #tpu.memory_space<vmem>>, vector<4x16x32xf32>
    %336 = vector.extract_strided_slice %11 {offsets = [2, 0], sizes = [1, 32], strides = [1, 1]} : vector<9x32xf32> to vector<1x32xf32>
    %337 = vector.shape_cast %336 : vector<1x32xf32> to vector<32xf32>
    %338 = vector.shape_cast %337 : vector<32xf32> to vector<1x1x32xf32>
    %339 = vector.broadcast %338 : vector<1x1x32xf32> to vector<4x16x32xf32>
    %340 = arith.mulf %335, %339 : vector<4x16x32xf32>
    %341 = arith.addf %334, %340 : vector<4x16x32xf32>
    %c13_181 = arith.constant 13 : index
    %c0_182 = arith.constant 0 : index
    %c0_183 = arith.constant 0 : index
    %342 = vector.load %arg6[%c13_181, %c0_182, %c0_183] : memref<18x18x32xf32, #tpu.memory_space<vmem>>, vector<4x16x32xf32>
    %343 = vector.extract_strided_slice %11 {offsets = [3, 0], sizes = [1, 32], strides = [1, 1]} : vector<9x32xf32> to vector<1x32xf32>
    %344 = vector.shape_cast %343 : vector<1x32xf32> to vector<32xf32>
    %345 = vector.shape_cast %344 : vector<32xf32> to vector<1x1x32xf32>
    %346 = vector.broadcast %345 : vector<1x1x32xf32> to vector<4x16x32xf32>
    %347 = arith.mulf %342, %346 : vector<4x16x32xf32>
    %348 = arith.addf %341, %347 : vector<4x16x32xf32>
    %c13_184 = arith.constant 13 : index
    %c1_185 = arith.constant 1 : index
    %c0_186 = arith.constant 0 : index
    %349 = vector.load %arg6[%c13_184, %c1_185, %c0_186] : memref<18x18x32xf32, #tpu.memory_space<vmem>>, vector<4x16x32xf32>
    %350 = vector.extract_strided_slice %11 {offsets = [4, 0], sizes = [1, 32], strides = [1, 1]} : vector<9x32xf32> to vector<1x32xf32>
    %351 = vector.shape_cast %350 : vector<1x32xf32> to vector<32xf32>
    %352 = vector.shape_cast %351 : vector<32xf32> to vector<1x1x32xf32>
    %353 = vector.broadcast %352 : vector<1x1x32xf32> to vector<4x16x32xf32>
    %354 = arith.mulf %349, %353 : vector<4x16x32xf32>
    %355 = arith.addf %348, %354 : vector<4x16x32xf32>
    %c13_187 = arith.constant 13 : index
    %c2_188 = arith.constant 2 : index
    %c0_189 = arith.constant 0 : index
    %356 = vector.load %arg6[%c13_187, %c2_188, %c0_189] : memref<18x18x32xf32, #tpu.memory_space<vmem>>, vector<4x16x32xf32>
    %357 = vector.extract_strided_slice %11 {offsets = [5, 0], sizes = [1, 32], strides = [1, 1]} : vector<9x32xf32> to vector<1x32xf32>
    %358 = vector.shape_cast %357 : vector<1x32xf32> to vector<32xf32>
    %359 = vector.shape_cast %358 : vector<32xf32> to vector<1x1x32xf32>
    %360 = vector.broadcast %359 : vector<1x1x32xf32> to vector<4x16x32xf32>
    %361 = arith.mulf %356, %360 : vector<4x16x32xf32>
    %362 = arith.addf %355, %361 : vector<4x16x32xf32>
    %c14_190 = arith.constant 14 : index
    %c0_191 = arith.constant 0 : index
    %c0_192 = arith.constant 0 : index
    %363 = vector.load %arg6[%c14_190, %c0_191, %c0_192] : memref<18x18x32xf32, #tpu.memory_space<vmem>>, vector<4x16x32xf32>
    %364 = vector.extract_strided_slice %11 {offsets = [6, 0], sizes = [1, 32], strides = [1, 1]} : vector<9x32xf32> to vector<1x32xf32>
    %365 = vector.shape_cast %364 : vector<1x32xf32> to vector<32xf32>
    %366 = vector.shape_cast %365 : vector<32xf32> to vector<1x1x32xf32>
    %367 = vector.broadcast %366 : vector<1x1x32xf32> to vector<4x16x32xf32>
    %368 = arith.mulf %363, %367 : vector<4x16x32xf32>
    %369 = arith.addf %362, %368 : vector<4x16x32xf32>
    %c14_193 = arith.constant 14 : index
    %c1_194 = arith.constant 1 : index
    %c0_195 = arith.constant 0 : index
    %370 = vector.load %arg6[%c14_193, %c1_194, %c0_195] : memref<18x18x32xf32, #tpu.memory_space<vmem>>, vector<4x16x32xf32>
    %371 = vector.extract_strided_slice %11 {offsets = [7, 0], sizes = [1, 32], strides = [1, 1]} : vector<9x32xf32> to vector<1x32xf32>
    %372 = vector.shape_cast %371 : vector<1x32xf32> to vector<32xf32>
    %373 = vector.shape_cast %372 : vector<32xf32> to vector<1x1x32xf32>
    %374 = vector.broadcast %373 : vector<1x1x32xf32> to vector<4x16x32xf32>
    %375 = arith.mulf %370, %374 : vector<4x16x32xf32>
    %376 = arith.addf %369, %375 : vector<4x16x32xf32>
    %c14_196 = arith.constant 14 : index
    %c2_197 = arith.constant 2 : index
    %c0_198 = arith.constant 0 : index
    %377 = vector.load %arg6[%c14_196, %c2_197, %c0_198] : memref<18x18x32xf32, #tpu.memory_space<vmem>>, vector<4x16x32xf32>
    %378 = vector.extract_strided_slice %11 {offsets = [8, 0], sizes = [1, 32], strides = [1, 1]} : vector<9x32xf32> to vector<1x32xf32>
    %379 = vector.shape_cast %378 : vector<1x32xf32> to vector<32xf32>
    %380 = vector.shape_cast %379 : vector<32xf32> to vector<1x1x32xf32>
    %381 = vector.broadcast %380 : vector<1x1x32xf32> to vector<4x16x32xf32>
    %382 = arith.mulf %377, %381 : vector<4x16x32xf32>
    %383 = arith.addf %376, %382 : vector<4x16x32xf32>
    %384 = vector.shape_cast %13 : vector<32xf32> to vector<1x1x32xf32>
    %385 = vector.broadcast %384 : vector<1x1x32xf32> to vector<4x16x32xf32>
    %386 = arith.addf %383, %385 : vector<4x16x32xf32>
    %cst_199 = arith.constant 0.000000e+00 : f32
    %cst_200 = arith.constant 6.000000e+00 : f32
    %387 = vector.broadcast %cst_199 : f32 to vector<4x16x32xf32>
    %388 = arith.maximumf %387, %386 : vector<4x16x32xf32>
    %389 = vector.broadcast %cst_200 : f32 to vector<4x16x32xf32>
    %390 = arith.minimumf %389, %388 : vector<4x16x32xf32>
    %c0_201 = arith.constant 0 : index
    %c12_202 = arith.constant 12 : index
    %c0_203 = arith.constant 0 : index
    %c0_204 = arith.constant 0 : index
    %391 = vector.load %arg4[%c0_201, %c12_202, %c0_203, %c0_204] : memref<1x16x16x32xf32, #tpu.memory_space<vmem>>, vector<1x4x16x32xf32>
    %392 = vector.shape_cast %391 : vector<1x4x16x32xf32> to vector<4x16x32xf32>
    %393 = vector.shape_cast %390 : vector<4x16x32xf32> to vector<1x4x16x32xf32>
    tpu.vector_store %arg4[%c0_201, %c12_202, %c0_203, %c0_204], %393 {strides = array<i32>} : memref<1x16x16x32xf32, #tpu.memory_space<vmem>>, vector<1x4x16x32xf32>,
    %394 = vector.extract_strided_slice %390 {offsets = [0, 0, 0], sizes = [4, 4, 32], strides = [1, 1, 1]} : vector<4x16x32xf32> to vector<4x4x32xf32>
    %cst_205 = arith.constant dense<0.000000e+00> : vector<32xf32>
    %395 = vector.multi_reduction <add>, %394, %cst_205 [0, 1] : vector<4x4x32xf32> to vector<32xf32>
    %cst_206 = arith.constant 1.600000e+01 : f32
    %396 = vector.broadcast %cst_206 : f32 to vector<32xf32>
    %397 = arith.divf %395, %396 : vector<32xf32>
    %c0_207 = arith.constant 0 : index
    %c17_208 = arith.constant 17 : index
    %c0_209 = arith.constant 0 : index
    %398 = vector.load %arg5[%c0_207, %c17_208, %c0_209] : memref<1x21x32xf32, #tpu.memory_space<vmem>>, vector<1x1x32xf32>
    %399 = vector.shape_cast %398 : vector<1x1x32xf32> to vector<32xf32>
    %400 = vector.shape_cast %397 : vector<32xf32> to vector<1x1x32xf32>
    tpu.vector_store %arg5[%c0_207, %c17_208, %c0_209], %400 {strides = array<i32>} : memref<1x21x32xf32, #tpu.memory_space<vmem>>, vector<1x1x32xf32>,
    %401 = vector.extract_strided_slice %390 {offsets = [0, 4, 0], sizes = [4, 4, 32], strides = [1, 1, 1]} : vector<4x16x32xf32> to vector<4x4x32xf32>
    %cst_210 = arith.constant dense<0.000000e+00> : vector<32xf32>
    %402 = vector.multi_reduction <add>, %401, %cst_210 [0, 1] : vector<4x4x32xf32> to vector<32xf32>
    %cst_211 = arith.constant 1.600000e+01 : f32
    %403 = vector.broadcast %cst_211 : f32 to vector<32xf32>
    %404 = arith.divf %402, %403 : vector<32xf32>
    %c0_212 = arith.constant 0 : index
    %c18 = arith.constant 18 : index
    %c0_213 = arith.constant 0 : index
    %405 = vector.load %arg5[%c0_212, %c18, %c0_213] : memref<1x21x32xf32, #tpu.memory_space<vmem>>, vector<1x1x32xf32>
    %406 = vector.shape_cast %405 : vector<1x1x32xf32> to vector<32xf32>
    %407 = vector.shape_cast %404 : vector<32xf32> to vector<1x1x32xf32>
    tpu.vector_store %arg5[%c0_212, %c18, %c0_213], %407 {strides = array<i32>} : memref<1x21x32xf32, #tpu.memory_space<vmem>>, vector<1x1x32xf32>,
    %408 = vector.extract_strided_slice %390 {offsets = [0, 8, 0], sizes = [4, 4, 32], strides = [1, 1, 1]} : vector<4x16x32xf32> to vector<4x4x32xf32>
    %cst_214 = arith.constant dense<0.000000e+00> : vector<32xf32>
    %409 = vector.multi_reduction <add>, %408, %cst_214 [0, 1] : vector<4x4x32xf32> to vector<32xf32>
    %cst_215 = arith.constant 1.600000e+01 : f32
    %410 = vector.broadcast %cst_215 : f32 to vector<32xf32>
    %411 = arith.divf %409, %410 : vector<32xf32>
    %c0_216 = arith.constant 0 : index
    %c19 = arith.constant 19 : index
    %c0_217 = arith.constant 0 : index
    %412 = vector.load %arg5[%c0_216, %c19, %c0_217] : memref<1x21x32xf32, #tpu.memory_space<vmem>>, vector<1x1x32xf32>
    %413 = vector.shape_cast %412 : vector<1x1x32xf32> to vector<32xf32>
    %414 = vector.shape_cast %411 : vector<32xf32> to vector<1x1x32xf32>
    tpu.vector_store %arg5[%c0_216, %c19, %c0_217], %414 {strides = array<i32>} : memref<1x21x32xf32, #tpu.memory_space<vmem>>, vector<1x1x32xf32>,
    %415 = vector.extract_strided_slice %390 {offsets = [0, 12, 0], sizes = [4, 4, 32], strides = [1, 1, 1]} : vector<4x16x32xf32> to vector<4x4x32xf32>
    %cst_218 = arith.constant dense<0.000000e+00> : vector<32xf32>
    %416 = vector.multi_reduction <add>, %415, %cst_218 [0, 1] : vector<4x4x32xf32> to vector<32xf32>
    %cst_219 = arith.constant 1.600000e+01 : f32
    %417 = vector.broadcast %cst_219 : f32 to vector<32xf32>
    %418 = arith.divf %416, %417 : vector<32xf32>
    %c0_220 = arith.constant 0 : index
    %c20 = arith.constant 20 : index
    %c0_221 = arith.constant 0 : index
    %419 = vector.load %arg5[%c0_220, %c20, %c0_221] : memref<1x21x32xf32, #tpu.memory_space<vmem>>, vector<1x1x32xf32>
    %420 = vector.shape_cast %419 : vector<1x1x32xf32> to vector<32xf32>
    %421 = vector.shape_cast %418 : vector<32xf32> to vector<1x1x32xf32>
    tpu.vector_store %arg5[%c0_220, %c20, %c0_221], %421 {strides = array<i32>} : memref<1x21x32xf32, #tpu.memory_space<vmem>>, vector<1x1x32xf32>,
    %422 = arith.addf %91, %98 : vector<32xf32>
    %423 = arith.addf %422, %193 : vector<32xf32>
    %424 = arith.addf %423, %200 : vector<32xf32>
    %cst_222 = arith.constant 2.500000e-01 : f32
    %425 = vector.broadcast %cst_222 : f32 to vector<32xf32>
    %426 = arith.mulf %424, %425 : vector<32xf32>
    %c0_223 = arith.constant 0 : index
    %c1_224 = arith.constant 1 : index
    %c0_225 = arith.constant 0 : index
    %427 = vector.load %arg5[%c0_223, %c1_224, %c0_225] : memref<1x21x32xf32, #tpu.memory_space<vmem>>, vector<1x1x32xf32>
    %428 = vector.shape_cast %427 : vector<1x1x32xf32> to vector<32xf32>
    %429 = vector.shape_cast %426 : vector<32xf32> to vector<1x1x32xf32>
    tpu.vector_store %arg5[%c0_223, %c1_224, %c0_225], %429 {strides = array<i32>} : memref<1x21x32xf32, #tpu.memory_space<vmem>>, vector<1x1x32xf32>,
    %430 = arith.addf %105, %112 : vector<32xf32>
    %431 = arith.addf %430, %207 : vector<32xf32>
    %432 = arith.addf %431, %214 : vector<32xf32>
    %cst_226 = arith.constant 2.500000e-01 : f32
    %433 = vector.broadcast %cst_226 : f32 to vector<32xf32>
    %434 = arith.mulf %432, %433 : vector<32xf32>
    %c0_227 = arith.constant 0 : index
    %c2_228 = arith.constant 2 : index
    %c0_229 = arith.constant 0 : index
    %435 = vector.load %arg5[%c0_227, %c2_228, %c0_229] : memref<1x21x32xf32, #tpu.memory_space<vmem>>, vector<1x1x32xf32>
    %436 = vector.shape_cast %435 : vector<1x1x32xf32> to vector<32xf32>
    %437 = vector.shape_cast %434 : vector<32xf32> to vector<1x1x32xf32>
    tpu.vector_store %arg5[%c0_227, %c2_228, %c0_229], %437 {strides = array<i32>} : memref<1x21x32xf32, #tpu.memory_space<vmem>>, vector<1x1x32xf32>,
    %438 = arith.addf %295, %302 : vector<32xf32>
    %439 = arith.addf %438, %397 : vector<32xf32>
    %440 = arith.addf %439, %404 : vector<32xf32>
    %cst_230 = arith.constant 2.500000e-01 : f32
    %441 = vector.broadcast %cst_230 : f32 to vector<32xf32>
    %442 = arith.mulf %440, %441 : vector<32xf32>
    %c0_231 = arith.constant 0 : index
    %c3 = arith.constant 3 : index
    %c0_232 = arith.constant 0 : index
    %443 = vector.load %arg5[%c0_231, %c3, %c0_232] : memref<1x21x32xf32, #tpu.memory_space<vmem>>, vector<1x1x32xf32>
    %444 = vector.shape_cast %443 : vector<1x1x32xf32> to vector<32xf32>
    %445 = vector.shape_cast %442 : vector<32xf32> to vector<1x1x32xf32>
    tpu.vector_store %arg5[%c0_231, %c3, %c0_232], %445 {strides = array<i32>} : memref<1x21x32xf32, #tpu.memory_space<vmem>>, vector<1x1x32xf32>,
    %446 = arith.addf %309, %316 : vector<32xf32>
    %447 = arith.addf %446, %411 : vector<32xf32>
    %448 = arith.addf %447, %418 : vector<32xf32>
    %cst_233 = arith.constant 2.500000e-01 : f32
    %449 = vector.broadcast %cst_233 : f32 to vector<32xf32>
    %450 = arith.mulf %448, %449 : vector<32xf32>
    %c0_234 = arith.constant 0 : index
    %c4_235 = arith.constant 4 : index
    %c0_236 = arith.constant 0 : index
    %451 = vector.load %arg5[%c0_234, %c4_235, %c0_236] : memref<1x21x32xf32, #tpu.memory_space<vmem>>, vector<1x1x32xf32>
    %452 = vector.shape_cast %451 : vector<1x1x32xf32> to vector<32xf32>
    %453 = vector.shape_cast %450 : vector<32xf32> to vector<1x1x32xf32>
    tpu.vector_store %arg5[%c0_234, %c4_235, %c0_236], %453 {strides = array<i32>} : memref<1x21x32xf32, #tpu.memory_space<vmem>>, vector<1x1x32xf32>,
    %cst_237 = arith.constant 0.000000e+00 : f32
    %454 = vector.broadcast %cst_237 : f32 to vector<32xf32>
    %455 = arith.addf %454, %91 : vector<32xf32>
    %456 = arith.addf %455, %98 : vector<32xf32>
    %457 = arith.addf %456, %105 : vector<32xf32>
    %458 = arith.addf %457, %112 : vector<32xf32>
    %459 = arith.addf %458, %193 : vector<32xf32>
    %460 = arith.addf %459, %200 : vector<32xf32>
    %461 = arith.addf %460, %207 : vector<32xf32>
    %462 = arith.addf %461, %214 : vector<32xf32>
    %463 = arith.addf %462, %295 : vector<32xf32>
    %464 = arith.addf %463, %302 : vector<32xf32>
    %465 = arith.addf %464, %309 : vector<32xf32>
    %466 = arith.addf %465, %316 : vector<32xf32>
    %467 = arith.addf %466, %397 : vector<32xf32>
    %468 = arith.addf %467, %404 : vector<32xf32>
    %469 = arith.addf %468, %411 : vector<32xf32>
    %470 = arith.addf %469, %418 : vector<32xf32>
    %cst_238 = arith.constant 6.250000e-02 : f32
    %471 = vector.broadcast %cst_238 : f32 to vector<32xf32>
    %472 = arith.mulf %470, %471 : vector<32xf32>
    %c0_239 = arith.constant 0 : index
    %c0_240 = arith.constant 0 : index
    %c0_241 = arith.constant 0 : index
    %473 = vector.load %arg5[%c0_239, %c0_240, %c0_241] : memref<1x21x32xf32, #tpu.memory_space<vmem>>, vector<1x1x32xf32>
    %474 = vector.shape_cast %473 : vector<1x1x32xf32> to vector<32xf32>
    %475 = vector.shape_cast %472 : vector<32xf32> to vector<1x1x32xf32>
    tpu.vector_store %arg5[%c0_239, %c0_240, %c0_241], %475 {strides = array<i32>} : memref<1x21x32xf32, #tpu.memory_space<vmem>>, vector<1x1x32xf32>,
    return
  }
  func.func @transform_0(%arg0: i32) -> (i32, i32, i32, i32) {
    %c0_i32 = arith.constant 0 : i32
    %c0_i32_0 = arith.constant 0 : i32
    %c0_i32_1 = arith.constant 0 : i32
    %c0_i32_2 = arith.constant 0 : i32
    return %arg0, %c0_i32, %c0_i32_0, %c0_i32_1 : i32, i32, i32, i32
  }
  func.func @transform_1(%arg0: i32) -> (i32, i32) {
    %c0_i32 = arith.constant 0 : i32
    %c0_i32_0 = arith.constant 0 : i32
    %c0_i32_1 = arith.constant 0 : i32
    return %c0_i32, %c0_i32_0 : i32, i32
  }
  func.func @transform_2(%arg0: i32) -> (i32, i32) {
    %c0_i32 = arith.constant 0 : i32
    %c0_i32_0 = arith.constant 0 : i32
    %c0_i32_1 = arith.constant 0 : i32
    return %c0_i32, %c0_i32_0 : i32, i32
  }
  func.func @transform_3(%arg0: i32) -> (i32, i32, i32, i32) {
    %c0_i32 = arith.constant 0 : i32
    %c0_i32_0 = arith.constant 0 : i32
    %c0_i32_1 = arith.constant 0 : i32
    %c0_i32_2 = arith.constant 0 : i32
    return %arg0, %c0_i32, %c0_i32_0, %c0_i32_1 : i32, i32, i32, i32
  }
  func.func @transform_4(%arg0: i32) -> (i32, i32, i32) {
    %c0_i32 = arith.constant 0 : i32
    %c0_i32_0 = arith.constant 0 : i32
    %c0_i32_1 = arith.constant 0 : i32
    return %arg0, %c0_i32, %c0_i32_0 : i32, i32, i32
  }
}

module attributes {stable_mosaic.version = 11 : i64} {
  func.func @_spa_fc_kernel(%arg0: i32, %arg1: memref<2x672xf32, #tpu.memory_space<vmem>>, %arg2: memref<672x2xf32, #tpu.memory_space<vmem>>, %arg3: memref<2x32xf32, #tpu.memory_space<vmem>>, %arg4: memref<2x32xf32, #tpu.memory_space<vmem>>) attributes {dimension_semantics = [#tpu.dimension_semantics<arbitrary>], iteration_bounds = array<i64: 1>, scalar_prefetch = 0 : i64, scratch_operands = 0 : i64, tpu.core_type = #tpu.core_type<tc>, window_params = [{pipeline_mode = #tpu.pipeline_mode<synchronous>, transform_indices = @transform_0, window_bounds = array<i64: 2, 672>}, {pipeline_mode = #tpu.pipeline_mode<synchronous>, transform_indices = @transform_1, window_bounds = array<i64: 672, 2>}, {pipeline_mode = #tpu.pipeline_mode<synchronous>, transform_indices = @transform_2, window_bounds = array<i64: 2, 32>}, {pipeline_mode = #tpu.pipeline_mode<synchronous>, transform_indices = @transform_3, window_bounds = array<i64: 2, 32>}]} {
    %c0 = arith.constant 0 : index
    %c0_0 = arith.constant 0 : index
    %0 = vector.load %arg1[%c0, %c0_0] : memref<2x672xf32, #tpu.memory_space<vmem>>, vector<2x672xf32>
    %c0_1 = arith.constant 0 : index
    %c0_2 = arith.constant 0 : index
    %1 = vector.load %arg2[%c0_1, %c0_2] : memref<672x2xf32, #tpu.memory_space<vmem>>, vector<672x2xf32>
    %cst = arith.constant dense<0.000000e+00> : vector<2x2xf32>
    %2 = tpu.matmul %0, %1, %cst {dimension_numbers = #tpu.dot_dimension_numbers<[1], [0], [0], [1], [0, 0, 1, 1], [], []>} : vector<2x672xf32>, vector<672x2xf32>, vector<2x2xf32> -> vector<2x2xf32>
    %cst_3 = arith.constant 0.000000e+00 : f32
    %3 = vector.broadcast %cst_3 : f32 to vector<2x2xf32>
    %4 = arith.maximumf %2, %3 : vector<2x2xf32>
    %c0_4 = arith.constant 0 : index
    %c0_5 = arith.constant 0 : index
    %5 = vector.load %arg3[%c0_4, %c0_5] : memref<2x32xf32, #tpu.memory_space<vmem>>, vector<2x32xf32>
    %cst_6 = arith.constant dense<0.000000e+00> : vector<2x32xf32>
    %6 = tpu.matmul %4, %5, %cst_6 {dimension_numbers = #tpu.dot_dimension_numbers<[1], [0], [0], [1], [0, 0, 1, 1], [], []>} : vector<2x2xf32>, vector<2x32xf32>, vector<2x32xf32> -> vector<2x32xf32>
    %7 = arith.negf %6 : vector<2x32xf32>
    %8 = math.exp %7 : vector<2x32xf32>
    %cst_7 = arith.constant 1.000000e+00 : f32
    %9 = vector.broadcast %cst_7 : f32 to vector<2x32xf32>
    %10 = arith.addf %9, %8 : vector<2x32xf32>
    %11 = arith.divf %9, %10 : vector<2x32xf32>
    %c0_8 = arith.constant 0 : index
    %c0_9 = arith.constant 0 : index
    %12 = vector.load %arg4[%c0_8, %c0_9] : memref<2x32xf32, #tpu.memory_space<vmem>>, vector<2x32xf32>
    tpu.vector_store %arg4[%c0_8, %c0_9], %11 {strides = array<i32>} : memref<2x32xf32, #tpu.memory_space<vmem>>, vector<2x32xf32>,
    return
  }
  func.func @transform_0(%arg0: i32) -> (i32, i32) {
    %c0_i32 = arith.constant 0 : i32
    %c0_i32_0 = arith.constant 0 : i32
    %c0_i32_1 = arith.constant 0 : i32
    return %c0_i32, %c0_i32_0 : i32, i32
  }
  func.func @transform_1(%arg0: i32) -> (i32, i32) {
    %c0_i32 = arith.constant 0 : i32
    %c0_i32_0 = arith.constant 0 : i32
    %c0_i32_1 = arith.constant 0 : i32
    return %c0_i32, %c0_i32_0 : i32, i32
  }
  func.func @transform_2(%arg0: i32) -> (i32, i32) {
    %c0_i32 = arith.constant 0 : i32
    %c0_i32_0 = arith.constant 0 : i32
    %c0_i32_1 = arith.constant 0 : i32
    return %c0_i32, %c0_i32_0 : i32, i32
  }
  func.func @transform_3(%arg0: i32) -> (i32, i32) {
    %c0_i32 = arith.constant 0 : i32
    %c0_i32_0 = arith.constant 0 : i32
    %c0_i32_1 = arith.constant 0 : i32
    return %c0_i32, %c0_i32_0 : i32, i32
  }
}

module attributes {stable_mosaic.version = 11 : i64} {
  func.func @kernel(%arg0: i32, %arg1: i32, %arg2: memref<1x256x32xf32, #tpu.memory_space<vmem>>, %arg3: memref<16x32xf32, #tpu.memory_space<vmem>>, %arg4: memref<16x1xf32, #tpu.memory_space<vmem>>, %arg5: memref<1x1x32xf32, #tpu.memory_space<vmem>>, %arg6: memref<1x16x256xf32, #tpu.memory_space<vmem>>, %arg7: memref<1x16x256xf32, #tpu.memory_space<vmem>>) attributes {dimension_semantics = [#tpu.dimension_semantics<parallel>, #tpu.dimension_semantics<parallel>], iteration_bounds = array<i64: 2, 1>, scalar_prefetch = 0 : i64, scratch_operands = 0 : i64, tpu.core_type = #tpu.core_type<tc>, window_params = [{transform_indices = @transform_0, window_bounds = array<i64: 1, 256, 32>}, {pipeline_mode = #tpu.pipeline_mode<synchronous>, transform_indices = @transform_1, window_bounds = array<i64: 16, 32>}, {pipeline_mode = #tpu.pipeline_mode<synchronous>, transform_indices = @transform_2, window_bounds = array<i64: 16, 1>}, {transform_indices = @transform_3, window_bounds = array<i64: 1, 1, 32>}, {transform_indices = @transform_4, window_bounds = array<i64: 1, 16, 256>}, {transform_indices = @transform_5, window_bounds = array<i64: 1, 16, 256>}]} {
    %c0 = arith.constant 0 : index
    %c0_0 = arith.constant 0 : index
    %c0_1 = arith.constant 0 : index
    %0 = vector.load %arg2[%c0, %c0_0, %c0_1] : memref<1x256x32xf32, #tpu.memory_space<vmem>>, vector<1x256x32xf32>
    %1 = vector.shape_cast %0 : vector<1x256x32xf32> to vector<256x32xf32>
    %c0_2 = arith.constant 0 : index
    %c0_3 = arith.constant 0 : index
    %c0_4 = arith.constant 0 : index
    %2 = vector.load %arg5[%c0_2, %c0_3, %c0_4] : memref<1x1x32xf32, #tpu.memory_space<vmem>>, vector<1x1x32xf32>
    %3 = vector.shape_cast %2 : vector<1x1x32xf32> to vector<1x32xf32>
    %4 = vector.broadcast %3 : vector<1x32xf32> to vector<256x32xf32>
    %5 = arith.mulf %1, %4 : vector<256x32xf32>
    %c0_5 = arith.constant 0 : index
    %c0_6 = arith.constant 0 : index
    %6 = vector.load %arg3[%c0_5, %c0_6] : memref<16x32xf32, #tpu.memory_space<vmem>>, vector<16x32xf32>
    %cst = arith.constant dense<0.000000e+00> : vector<16x256xf32>
    %7 = tpu.matmul %6, %5, %cst {dimension_numbers = #tpu.dot_dimension_numbers<[1], [1], [0], [0], [0, 0, 1, 0], [], []>} : vector<16x32xf32>, vector<256x32xf32>, vector<16x256xf32> -> vector<16x256xf32>
    %c0_7 = arith.constant 0 : index
    %c0_8 = arith.constant 0 : index
    %8 = vector.load %arg4[%c0_7, %c0_8] : memref<16x1xf32, #tpu.memory_space<vmem>>, vector<16x1xf32>
    %9 = vector.broadcast %8 : vector<16x1xf32> to vector<16x256xf32>
    %10 = arith.addf %7, %9 : vector<16x256xf32>
    %c0_9 = arith.constant 0 : index
    %c0_10 = arith.constant 0 : index
    %c0_11 = arith.constant 0 : index
    %11 = vector.load %arg6[%c0_9, %c0_10, %c0_11] : memref<1x16x256xf32, #tpu.memory_space<vmem>>, vector<1x16x256xf32>
    %12 = vector.shape_cast %11 : vector<1x16x256xf32> to vector<16x256xf32>
    %13 = arith.addf %10, %12 : vector<16x256xf32>
    %c0_12 = arith.constant 0 : index
    %c0_13 = arith.constant 0 : index
    %c0_14 = arith.constant 0 : index
    %14 = vector.load %arg7[%c0_12, %c0_13, %c0_14] : memref<1x16x256xf32, #tpu.memory_space<vmem>>, vector<1x16x256xf32>
    %15 = vector.shape_cast %14 : vector<1x16x256xf32> to vector<16x256xf32>
    %16 = vector.shape_cast %13 : vector<16x256xf32> to vector<1x16x256xf32>
    tpu.vector_store %arg7[%c0_12, %c0_13, %c0_14], %16 {strides = array<i32>} : memref<1x16x256xf32, #tpu.memory_space<vmem>>, vector<1x16x256xf32>,
    return
  }
  func.func @transform_0(%arg0: i32, %arg1: i32) -> (i32, i32, i32) {
    %c0_i32 = arith.constant 0 : i32
    %c0_i32_0 = arith.constant 0 : i32
    return %arg0, %arg1, %c0_i32 : i32, i32, i32
  }
  func.func @transform_1(%arg0: i32, %arg1: i32) -> (i32, i32) {
    %c0_i32 = arith.constant 0 : i32
    %c0_i32_0 = arith.constant 0 : i32
    %c0_i32_1 = arith.constant 0 : i32
    return %c0_i32, %c0_i32_0 : i32, i32
  }
  func.func @transform_2(%arg0: i32, %arg1: i32) -> (i32, i32) {
    %c0_i32 = arith.constant 0 : i32
    %c0_i32_0 = arith.constant 0 : i32
    %c0_i32_1 = arith.constant 0 : i32
    return %c0_i32, %c0_i32_0 : i32, i32
  }
  func.func @transform_3(%arg0: i32, %arg1: i32) -> (i32, i32, i32) {
    %c0_i32 = arith.constant 0 : i32
    %c0_i32_0 = arith.constant 0 : i32
    %c0_i32_1 = arith.constant 0 : i32
    return %arg0, %c0_i32, %c0_i32_0 : i32, i32, i32
  }
  func.func @transform_4(%arg0: i32, %arg1: i32) -> (i32, i32, i32) {
    %c0_i32 = arith.constant 0 : i32
    %c0_i32_0 = arith.constant 0 : i32
    return %arg0, %c0_i32, %arg1 : i32, i32, i32
  }
  func.func @transform_5(%arg0: i32, %arg1: i32) -> (i32, i32, i32) {
    %c0_i32 = arith.constant 0 : i32
    %c0_i32_0 = arith.constant 0 : i32
    return %arg0, %c0_i32, %arg1 : i32, i32, i32
  }
}

</mosaic_0001>

<llo_original>
// kernel: inverted_residual_forward.4
$region0: #{inverted_residual_forward.4}
  #allocation0 [shape = 'u32[]', space=smem, size = 0x4, offset = 0x4, fixed_abs, tag = 'smem constant byte address 0x4 - core index']
  #allocation1 [shape = 'u32[72,128]{1,0:T(1,128)}', space=vmem, size = 0x9000, scoped, tag = 'internal scratch']
  %s0 = inlined_call_operand.vmem [shape: f32[2,16,256], index: 0, kind: input, shape index: {}]
  %s1 = inlined_call_operand.vmem [shape: f32[16,32], index: 1, kind: input, shape index: {}]
  %s2 = inlined_call_operand.vmem [shape: f32[1,32], index: 2, kind: input, shape index: {}]
  %s3 = inlined_call_operand.vmem [shape: f32[2,256,32], index: 3, kind: output, shape index: {}]
  %s4 = sld [smem:[#allocation0]]
  $region45: #{inverted_residual_forward.4} parent=0
    _
  %s6 = ssub.s32 1, %s4
  %s7 = scalar_select 0, %s6, %s4
  loop: start=0, step=1, limit=4
  $region2: #{inverted_residual_forward.4} parent=0 // loop_pre_header
    _
  $region3: #{inverted_residual_forward.4} parent=0 // loop_header
    %s9 = sphi 0, %s13
    %p10 = scmp.ge.s32.totalorder %s9, 4
    %s16 = sphi 0, %s28
    %s17 = sphi 0, %s24
    %s18 = sphi 0, %s16
    %s19 = sphi 0, %s17
    %s20 = sphi 0, %s18
    %s21 = sphi 0, %s19
    %s33 = sphi 0, %s35
    %s36 = sphi 0, %s33
    %s37 = sphi 0, %s36
    %s53 = sphi 0, %s37
    %s57 = sphi 0, %s57
    %s59 = sphi 0, %s57
    %s60 = sphi 0, %s59
    %s74 = sphi 0, %s60
    %s78 = sphi 0, %s78
    %s80 = sphi 0, %s78
    %s81 = sphi 0, %s80
    %s95 = sphi 0, %s81
    %s103 = sphi 0, %s105
    %s106 = sphi 0, %s103
    %s107 = sphi 0, %s106
    %s123 = sphi 0, %s107
  $region4: #{inverted_residual_forward.4} parent=0 // loop_header_branch
    %12 = sbr.rel (%p10) target = $region8
  $region5: #{inverted_residual_forward.4} parent=0 // loop_body
    %s14 = ssub.s32 %s9, 1
    %s15 = ssub.s32 %s9, 2
    %s22 = sadd.s32 1, %s17
    %p23 = scmp.ge.s32.totalorder %s22, 1
    %s24 = scalar_select %p23, 0, %s22
    %s25 = sadd.s32 1, %s16
    %s26 = scalar_select %p23, %s25, %s16
    %p27 = scmp.ge.s32.totalorder %s26, 2
    %s28 = scalar_select %p27, 0, %s26
    %s29 = ssub.s32 %s16, %s28
    %s30 = ssub.s32 %s17, %s24
    %s31 = sor.u32 %s29, %s30
    %p32 = scmp.eq.s32.totalorder %s31, 0
    %s34 = sadd.s32 %s33, 1
    %s35 = scalar_select %p32, %s33, %s34
    %p38 = pneg %p32
    %p39 = scmp.eq.s32.totalorder %s9, 1
    %p40 = por %p38, %p39
    %p41 = scmp.ne.s32.totalorder %s33, %s36
    %p42 = scmp.eq.s32.totalorder %s9, 0
    %p43 = por %p41, %p42
    %p44 = scmp.ne.s32.totalorder %s33, %s36
    %p45 = scmp.eq.s32.totalorder %s14, 1
    %p46 = por %p44, %p45
    %p47 = scmp.ne.s32.totalorder %s36, %s37
    %p48 = scmp.eq.s32.totalorder %s14, 0
    %p49 = por %p47, %p48
    %p50 = scmp.ne.s32.totalorder %s36, %s37
    %p51 = scmp.eq.s32.totalorder %s15, 1
    %p52 = por %p50, %p51
    %p54 = scmp.ne.s32.totalorder %s37, %s53
    %p55 = scmp.eq.s32.totalorder %s15, 0
    %p56 = por %p54, %p55
    %s58 = sadd.s32 %s57, 1
    %p61 = scmp.eq.s32.totalorder %s9, 1
    %p62 = scmp.ne.s32.totalorder %s57, %s59
    %p63 = scmp.eq.s32.totalorder %s9, 0
    %p64 = por %p62, %p63
    %p65 = scmp.ne.s32.totalorder %s57, %s59
    %p66 = scmp.eq.s32.totalorder %s14, 1
    %p67 = por %p65, %p66
    %p68 = scmp.ne.s32.totalorder %s59, %s60
    %p69 = scmp.eq.s32.totalorder %s14, 0
    %p70 = por %p68, %p69
    %p71 = scmp.ne.s32.totalorder %s59, %s60
    %p72 = scmp.eq.s32.totalorder %s15, 1
    %p73 = por %p71, %p72
    %p75 = scmp.ne.s32.totalorder %s60, %s74
    %p76 = scmp.eq.s32.totalorder %s15, 0
    %p77 = por %p75, %p76
    %s79 = sadd.s32 %s78, 1
    %p82 = scmp.eq.s32.totalorder %s9, 1
    %p83 = scmp.ne.s32.totalorder %s78, %s80
    %p84 = scmp.eq.s32.totalorder %s9, 0
    %p85 = por %p83, %p84
    %p86 = scmp.ne.s32.totalorder %s78, %s80
    %p87 = scmp.eq.s32.totalorder %s14, 1
    %p88 = por %p86, %p87
    %p89 = scmp.ne.s32.totalorder %s80, %s81
    %p90 = scmp.eq.s32.totalorder %s14, 0
    %p91 = por %p89, %p90
    %p92 = scmp.ne.s32.totalorder %s80, %s81
    %p93 = scmp.eq.s32.totalorder %s15, 1
    %p94 = por %p92, %p93
    %p96 = scmp.ne.s32.totalorder %s81, %s95
    %p97 = scmp.eq.s32.totalorder %s15, 0
    %p98 = por %p96, %p97
    %s99 = ssub.s32 %s16, %s28
    %s100 = ssub.s32 %s17, %s24
    %s101 = sor.u32 %s99, %s100
    %p102 = scmp.eq.s32.totalorder %s101, 0
    %s104 = sadd.s32 %s103, 1
    %s105 = scalar_select %p102, %s103, %s104
    %p108 = pneg %p102
    %p109 = scmp.eq.s32.totalorder %s9, 1
    %p110 = por %p108, %p109
    %p111 = scmp.ne.s32.totalorder %s103, %s106
    %p112 = scmp.eq.s32.totalorder %s9, 0
    %p113 = por %p111, %p112
    %p114 = scmp.ne.s32.totalorder %s103, %s106
    %p115 = scmp.eq.s32.totalorder %s14, 1
    %p116 = por %p114, %p115
    %p117 = scmp.ne.s32.totalorder %s106, %s107
    %p118 = scmp.eq.s32.totalorder %s14, 0
    %p119 = por %p117, %p118
    %p120 = scmp.ne.s32.totalorder %s106, %s107
    %p121 = scmp.eq.s32.totalorder %s15, 1
    %p122 = por %p120, %p121
    %p124 = scmp.ne.s32.totalorder %s107, %s123
    %p125 = scmp.eq.s32.totalorder %s15, 0
    %p126 = por %p124, %p125
    %p127 = scmp.le.s32.totalorder 1, %s9
    %p128 = scmp.lt.s32.totalorder %s9, 3
    %p129 = pnand %p127, %p128
    %p130 = pneg %p129
    // Predicated region
    $region9: #{inverted_residual_forward.4} parent=5 // pred_check
      _
    $region10: #{inverted_residual_forward.4} parent=5 // pred_check_branch
      %132 = sbr.rel (%p129) target = $region12
    $region11: #{inverted_residual_forward.4} parent=5 // pred_region
      %s133 = ssub.s32 %s9, 1
      // Predicated region
      $region13: #{inverted_residual_forward.4} parent=11 // pred_check
        %p134 = pneg %p70
      $region14: #{inverted_residual_forward.4} parent=11 // pred_check_branch
        %136 = sbr.rel (%p134) target = $region16
      $region15: #{inverted_residual_forward.4} parent=11 // pred_region
        _
      $region16: #{inverted_residual_forward.4} parent=11 // pred_fallthru
        _
      // Predicated region
      $region17: #{inverted_residual_forward.4} parent=11 // pred_check
        %p137 = pneg %p91
      $region18: #{inverted_residual_forward.4} parent=11 // pred_check_branch
        %139 = sbr.rel (%p137) target = $region20
      $region19: #{inverted_residual_forward.4} parent=11 // pred_region
        _
      $region20: #{inverted_residual_forward.4} parent=11 // pred_fallthru
        _
    $region12: #{inverted_residual_forward.4} parent=5 // pred_fallthru
      _
    %p140 = scmp.lt.s32.totalorder %s9, 2
    // Predicated region
    $region21: #{inverted_residual_forward.4} parent=5 // pred_check
      %p141 = pneg %p140
    $region22: #{inverted_residual_forward.4} parent=5 // pred_check_branch
      %143 = sbr.rel (%p141) target = $region24
    $region23: #{inverted_residual_forward.4} parent=5 // pred_region
      // Predicated region
      $region25: #{inverted_residual_forward.4} parent=23 // pred_check
        %p144 = pneg %p43
      $region26: #{inverted_residual_forward.4} parent=23 // pred_check_branch
        %146 = sbr.rel (%p144) target = $region28
      $region27: #{inverted_residual_forward.4} parent=23 // pred_region
        %s147 = smul.u32 2, %s17
        %p148 = scmp.lt.s32.totalorder %s16, 1
        %s149 = scalar_select %p148, %s16, 1
        %p150 = scmp.lt.s32.totalorder %s147, 1
        %s151 = scalar_select %p150, %s147, 1
        %s152 = smul.addr %s149, 4
        %s153 = sadd.s32 %s151, %s152
        %s154 = smul.addr %s153, 8
        %s155 = scalar_lea.vmem %s0, %s154
        %s156 = smul.u32 2, %s17
      $region28: #{inverted_residual_forward.4} parent=23 // pred_fallthru
        _
    $region24: #{inverted_residual_forward.4} parent=5 // pred_fallthru
      _
    %p157 = scmp.le.s32.totalorder 1, %s9
    %p158 = scmp.lt.s32.totalorder %s9, 3
    %p159 = pnand %p157, %p158
    %p160 = pneg %p159
    // Predicated region
    $region29: #{inverted_residual_forward.4} parent=5 // pred_check
      _
    $region30: #{inverted_residual_forward.4} parent=5 // pred_check_branch
      %162 = sbr.rel (%p159) target = $region32
    $region31: #{inverted_residual_forward.4} parent=5 // pred_region
      %s163 = ssub.s32 %s9, 1
      %s164 = smul.u32 2, %s19
      %p165 = scmp.lt.s32.totalorder %s18, 1
      %s166 = scalar_select %p165, %s18, 1
      %p167 = scmp.lt.s32.totalorder %s164, 1
      %s168 = scalar_select %p167, %s164, 1
      %s169 = smul.addr %s166, 4
      %s170 = sadd.s32 %s168, %s169
      %s171 = smul.addr %s170, 8
      %s172 = scalar_lea.vmem %s0, %s171
      %p173 = pneg %p49
      %p174 = pneg %p46
      %p175 = pneg %p70
      %p176 = pneg %p67
      %p177 = pneg %p91
      %p178 = pneg %p88
      %p179 = pneg %p119
      %p180 = pneg %p116
      %s181 = smul.u32 32, %s19
      %p182 = scmp.lt.s32.totalorder %s18, 1
      %s183 = scalar_select %p182, %s18, 1
      %p184 = scmp.lt.s32.totalorder %s181, 31
      %s185 = scalar_select %p184, %s181, 31
      %s186 = smul.addr %s183, 32
      %s187 = sadd.s32 %s185, %s186
      %s188 = smul.addr %s187, 8
      %s189 = scalar_lea.vmem %s3, %s188
      %s190 = smul.u32 2, %s19
      %p191 = scmp.lt.s32.totalorder %s18, 1
      %s192 = scalar_select %p191, %s18, 1
      %p193 = scmp.lt.s32.totalorder %s190, 1
      %s194 = scalar_select %p193, %s190, 1
      %s195 = smul.addr %s192, 4
      %s196 = sadd.s32 %s194, %s195
      %s197 = smul.addr %s196, 8
      %s198 = scalar_lea.vmem %s0, %s197
      %s199 = smul.u32 2, %s19
      %s200 = smul.u32 32, %s19
      %p201 = scmp.lt.s32.totalorder %s18, 1
      %s202 = scalar_select %p201, %s18, 1
      %p203 = scmp.lt.s32.totalorder %s200, 31
      %s204 = scalar_select %p203, %s200, 31
      %s205 = smul.addr %s202, 32
      %s206 = sadd.s32 %s204, %s205
      %s207 = smul.addr %s206, 8
      %s208 = scalar_lea.vmem %s3, %s207
      %s209 = smul.u32 32, %s19
      %v210 = vld [vmem:[%s198] sm:$0xff]
      %v211 = vld [vmem:[%s198 + $0x8] sm:$0xff]
      %v212 = vld [vmem:[%s198 + $0x10] sm:$0xff]
      %v213 = vld [vmem:[%s198 + $0x18] sm:$0xff]
      %v214 = vld [vmem:[%s1] sm:$0xff]
      %v215 = vld [vmem:[%s1 + $0x8] sm:$0xff]
      %v216 = vld [vmem:[%s2] sm:$0x1]
      %v218 = vperm.slane %v216, 0
      %220 = vxpose.xlu0.b32.start [1/16] %v210, 128
      %221 = vxpose.xlu0.b32.cont [2/16] %v212, 128
      %222 = vxpose.xlu0.b32.cont [3/16] 0.0, 128
      %223 = vxpose.xlu0.b32.cont [4/16] 0.0, 128
      %224 = vxpose.xlu0.b32.cont [5/16] 0.0, 128
      %225 = vxpose.xlu0.b32.cont [6/16] 0.0, 128
      %226 = vxpose.xlu0.b32.cont [7/16] 0.0, 128
      %227 = vxpose.xlu0.b32.cont [8/16] 0.0, 128
      %228 = vxpose.xlu0.b32.cont [9/16] 0.0, 128
      %229 = vxpose.xlu0.b32.cont [10/16] 0.0, 128
      %230 = vxpose.xlu0.b32.cont [11/16] 0.0, 128
      %231 = vxpose.xlu0.b32.cont [12/16] 0.0, 128
      %232 = vxpose.xlu0.b32.cont [13/16] 0.0, 128
      %233 = vxpose.xlu0.b32.cont [14/16] 0.0, 128
      %234 = vxpose.xlu0.b32.cont [15/16] 0.0, 128
      %235 = vxpose.xlu0.b32.end [16/16] 0.0, 128
      %v236 = vpop.trf.xlu0
      %v237 = vpop.trf.xlu0
      %v238 = vpop.trf.xlu0
      %v239 = vpop.trf.xlu0
      %v240 = vpop.trf.xlu0
      %v241 = vpop.trf.xlu0
      %v242 = vpop.trf.xlu0
      %v243 = vpop.trf.xlu0
      %v244 = vpop.trf.xlu0
      %v245 = vpop.trf.xlu0
      %v246 = vpop.trf.xlu0
      %v247 = vpop.trf.xlu0
      %v248 = vpop.trf.xlu0
      %v249 = vpop.trf.xlu0
      %v250 = vpop.trf.xlu0
      %v251 = vpop.trf.xlu0
      %252 = vxpose.xlu0.b32.start [1/16] %v211, 128
      %253 = vxpose.xlu0.b32.cont [2/16] %v213, 128
      %254 = vxpose.xlu0.b32.cont [3/16] 0.0, 128
      %255 = vxpose.xlu0.b32.cont [4/16] 0.0, 128
      %256 = vxpose.xlu0.b32.cont [5/16] 0.0, 128
      %257 = vxpose.xlu0.b32.cont [6/16] 0.0, 128
      %258 = vxpose.xlu0.b32.cont [7/16] 0.0, 128
      %259 = vxpose.xlu0.b32.cont [8/16] 0.0, 128
      %260 = vxpose.xlu0.b32.cont [9/16] 0.0, 128
      %261 = vxpose.xlu0.b32.cont [10/16] 0.0, 128
      %262 = vxpose.xlu0.b32.cont [11/16] 0.0, 128
      %263 = vxpose.xlu0.b32.cont [12/16] 0.0, 128
      %264 = vxpose.xlu0.b32.cont [13/16] 0.0, 128
      %265 = vxpose.xlu0.b32.cont [14/16] 0.0, 128
      %266 = vxpose.xlu0.b32.cont [15/16] 0.0, 128
      %267 = vxpose.xlu0.b32.end [16/16] 0.0, 128
      %v268 = vpop.trf.xlu0
      %v269 = vpop.trf.xlu0
      %v270 = vpop.trf.xlu0
      %v271 = vpop.trf.xlu0
      %v272 = vpop.trf.xlu0
      %v273 = vpop.trf.xlu0
      %v274 = vpop.trf.xlu0
      %v275 = vpop.trf.xlu0
      %v276 = vpop.trf.xlu0
      %v277 = vpop.trf.xlu0
      %v278 = vpop.trf.xlu0
      %v279 = vpop.trf.xlu0
      %v280 = vpop.trf.xlu0
      %v281 = vpop.trf.xlu0
      %v282 = vpop.trf.xlu0
      %v283 = vpop.trf.xlu0
      %vm284 = vcmask 130048
      %v286 = vsel %vm284, %v236, 0
      %v289 = vsel %vm284, %v237, 0
      %v292 = vsel %vm284, %v238, 0
      %v295 = vsel %vm284, %v239, 0
      %v298 = vsel %vm284, %v240, 0
      %v301 = vsel %vm284, %v241, 0
      %v304 = vsel %vm284, %v242, 0
      %v307 = vsel %vm284, %v243, 0
      %v310 = vsel %vm284, %v244, 0
      %v313 = vsel %vm284, %v245, 0
      %v316 = vsel %vm284, %v246, 0
      %v319 = vsel %vm284, %v247, 0
      %v322 = vsel %vm284, %v248, 0
      %v325 = vsel %vm284, %v249, 0
      %v328 = vsel %vm284, %v250, 0
      %v331 = vsel %vm284, %v251, 0
      %v334 = vsel %vm284, %v268, 0
      %v337 = vsel %vm284, %v269, 0
      %v340 = vsel %vm284, %v270, 0
      %v343 = vsel %vm284, %v271, 0
      %v346 = vsel %vm284, %v272, 0
      %v349 = vsel %vm284, %v273, 0
      %v352 = vsel %vm284, %v274, 0
      %v355 = vsel %vm284, %v275, 0
      %v358 = vsel %vm284, %v276, 0
      %v361 = vsel %vm284, %v277, 0
      %v364 = vsel %vm284, %v278, 0
      %v367 = vsel %vm284, %v279, 0
      %v370 = vsel %vm284, %v280, 0
      %v373 = vsel %vm284, %v281, 0
      %v376 = vsel %vm284, %v282, 0
      %v379 = vsel %vm284, %v283, 0
      %381 = vmatpush.msra.mxu0 0.0
      %382 = vmatpush.msra.mxu0 0.0
      %383 = vmatpush.msra.mxu0 0.0
      %384 = vmatpush.msra.mxu0 0.0
      %385 = vmatpush.msra.mxu0 0.0
      %386 = vmatpush.msra.mxu0 0.0
      %387 = vmatpush.msra.mxu0 0.0
      %388 = vmatpush.msra.mxu0 0.0
      %389 = vmatpush.msra.mxu0 0.0
      %390 = vmatpush.msra.mxu0 0.0
      %391 = vmatpush.msra.mxu0 0.0
      %392 = vmatpush.msra.mxu0 0.0
      %393 = vmatpush.msra.mxu0 0.0
      %394 = vmatpush.msra.mxu0 0.0
      %395 = vmatpush.msra.mxu0 %v215
      %396 = vmatpush.msra.mxu0 %v214
      %397 = vmatmul.f32.gmra.mxu0 %v286
      %v398 = vpop.f32.mrf.mxu0
      %v399 = vadd.f32 %v218, %v398
      %400 = vmatmul.f32.gmra.mxu0 %v289
      %v401 = vpop.f32.mrf.mxu0
      %v402 = vadd.f32 %v218, %v401
      %403 = vmatmul.f32.gmra.mxu0 %v292
      %v404 = vpop.f32.mrf.mxu0
      %v405 = vadd.f32 %v218, %v404
      %406 = vmatmul.f32.gmra.mxu0 %v295
      %v407 = vpop.f32.mrf.mxu0
      %v408 = vadd.f32 %v218, %v407
      %409 = vmatmul.f32.gmra.mxu0 %v298
      %v410 = vpop.f32.mrf.mxu0
      %v411 = vadd.f32 %v218, %v410
      %412 = vmatmul.f32.gmra.mxu0 %v301
      %v413 = vpop.f32.mrf.mxu0
      %v414 = vadd.f32 %v218, %v413
      %415 = vmatmul.f32.gmra.mxu0 %v304
      %v416 = vpop.f32.mrf.mxu0
      %v417 = vadd.f32 %v218, %v416
      %418 = vmatmul.f32.gmra.mxu0 %v307
      %v419 = vpop.f32.mrf.mxu0
      %v420 = vadd.f32 %v218, %v419
      %421 = vmatmul.f32.gmra.mxu0 %v310
      %v422 = vpop.f32.mrf.mxu0
      %v423 = vadd.f32 %v218, %v422
      %424 = vmatmul.f32.gmra.mxu0 %v313
      %v425 = vpop.f32.mrf.mxu0
      %v426 = vadd.f32 %v218, %v425
      %427 = vmatmul.f32.gmra.mxu0 %v316
      %v428 = vpop.f32.mrf.mxu0
      %v429 = vadd.f32 %v218, %v428
      %430 = vmatmul.f32.gmra.mxu0 %v319
      %v431 = vpop.f32.mrf.mxu0
      %v432 = vadd.f32 %v218, %v431
      %433 = vmatmul.f32.gmra.mxu0 %v322
      %v434 = vpop.f32.mrf.mxu0
      %v435 = vadd.f32 %v218, %v434
      %436 = vmatmul.f32.gmra.mxu0 %v325
      %v437 = vpop.f32.mrf.mxu0
      %v438 = vadd.f32 %v218, %v437
      %439 = vmatmul.f32.gmra.mxu0 %v328
      %v440 = vpop.f32.mrf.mxu0
      %v441 = vadd.f32 %v218, %v440
      %442 = vmatmul.f32.gmra.mxu0 %v331
      %v443 = vpop.f32.mrf.mxu0
      %v444 = vadd.f32 %v218, %v443
      %445 = vmatmul.f32.gmra.mxu0 %v334
      %v446 = vpop.f32.mrf.mxu0
      %v447 = vadd.f32 %v218, %v446
      %448 = vmatmul.f32.gmra.mxu0 %v337
      %v449 = vpop.f32.mrf.mxu0
      %v450 = vadd.f32 %v218, %v449
      %451 = vmatmul.f32.gmra.mxu0 %v340
      %v452 = vpop.f32.mrf.mxu0
      %v453 = vadd.f32 %v218, %v452
      %454 = vmatmul.f32.gmra.mxu0 %v343
      %v455 = vpop.f32.mrf.mxu0
      %v456 = vadd.f32 %v218, %v455
      %457 = vmatmul.f32.gmra.mxu0 %v346
      %v458 = vpop.f32.mrf.mxu0
      %v459 = vadd.f32 %v218, %v458
      %460 = vmatmul.f32.gmra.mxu0 %v349
      %v461 = vpop.f32.mrf.mxu0
      %v462 = vadd.f32 %v218, %v461
      %463 = vmatmul.f32.gmra.mxu0 %v352
      %v464 = vpop.f32.mrf.mxu0
      %v465 = vadd.f32 %v218, %v464
      %466 = vmatmul.f32.gmra.mxu0 %v355
      %v467 = vpop.f32.mrf.mxu0
      %v468 = vadd.f32 %v218, %v467
      %469 = vmatmul.f32.gmra.mxu0 %v358
      %v470 = vpop.f32.mrf.mxu0
      %v471 = vadd.f32 %v218, %v470
      %472 = vmatmul.f32.gmra.mxu0 %v361
      %v473 = vpop.f32.mrf.mxu0
      %v474 = vadd.f32 %v218, %v473
      %475 = vmatmul.f32.gmra.mxu0 %v364
      %v476 = vpop.f32.mrf.mxu0
      %v477 = vadd.f32 %v218, %v476
      %478 = vmatmul.f32.gmra.mxu0 %v367
      %v479 = vpop.f32.mrf.mxu0
      %v480 = vadd.f32 %v218, %v479
      %481 = vmatmul.f32.gmra.mxu0 %v370
      %v482 = vpop.f32.mrf.mxu0
      %v483 = vadd.f32 %v218, %v482
      %484 = vmatmul.f32.gmra.mxu0 %v373
      %v485 = vpop.f32.mrf.mxu0
      %v486 = vadd.f32 %v218, %v485
      %487 = vmatmul.f32.gmra.mxu0 %v376
      %v488 = vpop.f32.mrf.mxu0
      %v489 = vadd.f32 %v218, %v488
      %490 = vmatmul.f32.gmra.mxu0 %v379
      %v491 = vpop.f32.mrf.mxu0
      %v492 = vadd.f32 %v218, %v491
      %493 = vdwg.mxu0
      %v494 = vmax.f32 %v399, 0.0
      %v495 = vmax.f32 %v402, 0.0
      %v496 = vmax.f32 %v405, 0.0
      %v497 = vmax.f32 %v408, 0.0
      %v498 = vmax.f32 %v411, 0.0
      %v499 = vmax.f32 %v414, 0.0
      %v500 = vmax.f32 %v417, 0.0
      %v501 = vmax.f32 %v420, 0.0
      %v502 = vmax.f32 %v423, 0.0
      %v503 = vmax.f32 %v426, 0.0
      %v504 = vmax.f32 %v429, 0.0
      %v505 = vmax.f32 %v432, 0.0
      %v506 = vmax.f32 %v435, 0.0
      %v507 = vmax.f32 %v438, 0.0
      %v508 = vmax.f32 %v441, 0.0
      %v509 = vmax.f32 %v444, 0.0
      %v510 = vmax.f32 %v447, 0.0
      %v511 = vmax.f32 %v450, 0.0
      %v512 = vmax.f32 %v453, 0.0
      %v513 = vmax.f32 %v456, 0.0
      %v514 = vmax.f32 %v459, 0.0
      %v515 = vmax.f32 %v462, 0.0
      %v516 = vmax.f32 %v465, 0.0
      %v517 = vmax.f32 %v468, 0.0
      %v518 = vmax.f32 %v471, 0.0
      %v519 = vmax.f32 %v474, 0.0
      %v520 = vmax.f32 %v477, 0.0
      %v521 = vmax.f32 %v480, 0.0
      %v522 = vmax.f32 %v483, 0.0
      %v523 = vmax.f32 %v486, 0.0
      %v524 = vmax.f32 %v489, 0.0
      %v525 = vmax.f32 %v492, 0.0
      %v526 = vmin.f32 %v494, 6.0
      %v527 = vmin.f32 %v495, 6.0
      %v528 = vmin.f32 %v496, 6.0
      %v529 = vmin.f32 %v497, 6.0
      %v530 = vmin.f32 %v498, 6.0
      %v531 = vmin.f32 %v499, 6.0
      %v532 = vmin.f32 %v500, 6.0
      %v533 = vmin.f32 %v501, 6.0
      %v534 = vmin.f32 %v502, 6.0
      %v535 = vmin.f32 %v503, 6.0
      %v536 = vmin.f32 %v504, 6.0
      %v537 = vmin.f32 %v505, 6.0
      %v538 = vmin.f32 %v506, 6.0
      %v539 = vmin.f32 %v507, 6.0
      %v540 = vmin.f32 %v508, 6.0
      %v541 = vmin.f32 %v509, 6.0
      %v542 = vmin.f32 %v510, 6.0
      %v543 = vmin.f32 %v511, 6.0
      %v544 = vmin.f32 %v512, 6.0
      %v545 = vmin.f32 %v513, 6.0
      %v546 = vmin.f32 %v514, 6.0
      %v547 = vmin.f32 %v515, 6.0
      %v548 = vmin.f32 %v516, 6.0
      %v549 = vmin.f32 %v517, 6.0
      %v550 = vmin.f32 %v518, 6.0
      %v551 = vmin.f32 %v519, 6.0
      %v552 = vmin.f32 %v520, 6.0
      %v553 = vmin.f32 %v521, 6.0
      %v554 = vmin.f32 %v522, 6.0
      %v555 = vmin.f32 %v523, 6.0
      %v556 = vmin.f32 %v524, 6.0
      %v557 = vmin.f32 %v525, 6.0
      %vm558 = vcmask 261120
      %559 = vst.msk [vmem:[%s208] sm:$0xff] %vm558, %v526
      %560 = vst.msk [vmem:[%s208 + $0x8] sm:$0xff] %vm558, %v527
      %561 = vst.msk [vmem:[%s208 + $0x10] sm:$0xff] %vm558, %v528
      %562 = vst.msk [vmem:[%s208 + $0x18] sm:$0xff] %vm558, %v529
      %563 = vst.msk [vmem:[%s208 + $0x20] sm:$0xff] %vm558, %v530
      %564 = vst.msk [vmem:[%s208 + $0x28] sm:$0xff] %vm558, %v531
      %565 = vst.msk [vmem:[%s208 + $0x30] sm:$0xff] %vm558, %v532
      %566 = vst.msk [vmem:[%s208 + $0x38] sm:$0xff] %vm558, %v533
      %567 = vst.msk [vmem:[%s208 + $0x40] sm:$0xff] %vm558, %v534
      %568 = vst.msk [vmem:[%s208 + $0x48] sm:$0xff] %vm558, %v535
      %569 = vst.msk [vmem:[%s208 + $0x50] sm:$0xff] %vm558, %v536
      %570 = vst.msk [vmem:[%s208 + $0x58] sm:$0xff] %vm558, %v537
      %571 = vst.msk [vmem:[%s208 + $0x60] sm:$0xff] %vm558, %v538
      %572 = vst.msk [vmem:[%s208 + $0x68] sm:$0xff] %vm558, %v539
      %573 = vst.msk [vmem:[%s208 + $0x70] sm:$0xff] %vm558, %v540
      %574 = vst.msk [vmem:[%s208 + $0x78] sm:$0xff] %vm558, %v541
      %575 = vst.msk [vmem:[%s208 + $0x80] sm:$0xff] %vm558, %v542
      %576 = vst.msk [vmem:[%s208 + $0x88] sm:$0xff] %vm558, %v543
      %577 = vst.msk [vmem:[%s208 + $0x90] sm:$0xff] %vm558, %v544
      %578 = vst.msk [vmem:[%s208 + $0x98] sm:$0xff] %vm558, %v545
      %579 = vst.msk [vmem:[%s208 + $0xa0] sm:$0xff] %vm558, %v546
      %580 = vst.msk [vmem:[%s208 + $0xa8] sm:$0xff] %vm558, %v547
      %581 = vst.msk [vmem:[%s208 + $0xb0] sm:$0xff] %vm558, %v548
      %582 = vst.msk [vmem:[%s208 + $0xb8] sm:$0xff] %vm558, %v549
      %583 = vst.msk [vmem:[%s208 + $0xc0] sm:$0xff] %vm558, %v550
      %584 = vst.msk [vmem:[%s208 + $0xc8] sm:$0xff] %vm558, %v551
      %585 = vst.msk [vmem:[%s208 + $0xd0] sm:$0xff] %vm558, %v552
      %586 = vst.msk [vmem:[%s208 + $0xd8] sm:$0xff] %vm558, %v553
      %587 = vst.msk [vmem:[%s208 + $0xe0] sm:$0xff] %vm558, %v554
      %588 = vst.msk [vmem:[%s208 + $0xe8] sm:$0xff] %vm558, %v555
      %589 = vst.msk [vmem:[%s208 + $0xf0] sm:$0xff] %vm558, %v556
      %590 = vst.msk [vmem:[%s208 + $0xf8] sm:$0xff] %vm558, %v557
      %s591 = smul.u32 32, %s19
      %p592 = scmp.lt.s32.totalorder %s18, 1
      %s593 = scalar_select %p592, %s18, 1
      %p594 = scmp.lt.s32.totalorder %s591, 31
      %s595 = scalar_select %p594, %s591, 31
      %s596 = smul.addr %s593, 32
      %s597 = sadd.s32 %s595, %s596
      %s598 = smul.addr %s597, 8
      %s599 = scalar_lea.vmem %s3, %s598
      // Predicated region
      $region33: #{inverted_residual_forward.4} parent=31 // pred_check
        %p600 = pneg %p116
      $region34: #{inverted_residual_forward.4} parent=31 // pred_check_branch
        %602 = sbr.rel (%p600) target = $region36
      $region35: #{inverted_residual_forward.4} parent=31 // pred_region
        %s603 = smul.u32 32, %s19
      $region36: #{inverted_residual_forward.4} parent=31 // pred_fallthru
        _
    $region32: #{inverted_residual_forward.4} parent=5 // pred_fallthru
      _
    %p604 = scmp.le.s32.totalorder 2, %s9
    // Predicated region
    $region37: #{inverted_residual_forward.4} parent=5 // pred_check
      %p605 = pneg %p604
    $region38: #{inverted_residual_forward.4} parent=5 // pred_check_branch
      %607 = sbr.rel (%p605) target = $region40
    $region39: #{inverted_residual_forward.4} parent=5 // pred_region
      %s608 = ssub.s32 %s9, 2
      // Predicated region
      $region41: #{inverted_residual_forward.4} parent=39 // pred_check
        %p609 = pneg %p122
      $region42: #{inverted_residual_forward.4} parent=39 // pred_check_branch
        %611 = sbr.rel (%p609) target = $region44
      $region43: #{inverted_residual_forward.4} parent=39 // pred_region
        %s612 = smul.u32 32, %s21
        %p613 = scmp.lt.s32.totalorder %s20, 1
        %s614 = scalar_select %p613, %s20, 1
        %p615 = scmp.lt.s32.totalorder %s612, 31
        %s616 = scalar_select %p615, %s612, 31
        %s617 = smul.addr %s614, 32
        %s618 = sadd.s32 %s616, %s617
        %s619 = smul.addr %s618, 8
        %s620 = scalar_lea.vmem %s3, %s619
      $region44: #{inverted_residual_forward.4} parent=39 // pred_fallthru
        _
    $region40: #{inverted_residual_forward.4} parent=5 // pred_fallthru
      _
  $region6: #{inverted_residual_forward.4} parent=0 // loop_footer
    %s13 = sadd.s32 1, %s9
  $region7: #{inverted_residual_forward.4} parent=0 // loop_footer_branch
    %8 = sbr.rel target = $region3
  $region8: #{inverted_residual_forward.4} parent=0 // loop_exit
    _

// kernel: inverted_residual_forward.6
$region0: #{inverted_residual_forward.6}
  #allocation0 [shape = 'u32[]', space=smem, size = 0x4, offset = 0x4, fixed_abs, tag = 'smem constant byte address 0x4 - core index']
  #allocation1 [shape = 'u32[72,128]{1,0:T(1,128)}', space=vmem, size = 0x9000, scoped, tag = 'internal scratch']
  %s0 = inlined_call_operand.vmem [shape: f32[2,672], index: 0, kind: input, shape index: {}]
  %s1 = inlined_call_operand.vmem [shape: f32[672,2], index: 1, kind: input, shape index: {}]
  %s2 = inlined_call_operand.vmem [shape: f32[2,32], index: 2, kind: input, shape index: {}]
  %s3 = inlined_call_operand.vmem [shape: f32[2,32], index: 3, kind: output, shape index: {}]
  %s4 = sld [smem:[#allocation0]]
  $region22: #{inverted_residual_forward.6} parent=0
    _
  %s6 = ssub.s32 1, %s4
  %s7 = scalar_select 0, %s6, %s4
  // Predicated region
  $region2: #{inverted_residual_forward.6} parent=0 // pred_check
    _
  $region3: #{inverted_residual_forward.6} parent=0 // pred_check_branch
    %9 = sbr.rel (0) target = $region5
  $region4: #{inverted_residual_forward.6} parent=0 // pred_region
    _
  $region5: #{inverted_residual_forward.6} parent=0 // pred_fallthru
    _
  // Predicated region
  $region6: #{inverted_residual_forward.6} parent=0 // pred_check
    _
  $region7: #{inverted_residual_forward.6} parent=0 // pred_check_branch
    %11 = sbr.rel (0) target = $region9
  $region8: #{inverted_residual_forward.6} parent=0 // pred_region
    _
  $region9: #{inverted_residual_forward.6} parent=0 // pred_fallthru
    _
  // Predicated region
  $region10: #{inverted_residual_forward.6} parent=0 // pred_check
    _
  $region11: #{inverted_residual_forward.6} parent=0 // pred_check_branch
    %13 = sbr.rel (0) target = $region13
  $region12: #{inverted_residual_forward.6} parent=0 // pred_region
    _
  $region13: #{inverted_residual_forward.6} parent=0 // pred_fallthru
    _
  %v14 = vld [vmem:[%s0] sm:$0xff]
  %v15 = vld [vmem:[%s0 + $0x8] sm:$0xf]
  %v16 = vld [vmem:[%s1] sm:$0xff]
  %v17 = vld [vmem:[%s1 + $0x8] sm:$0xff]
  %v18 = vld [vmem:[%s1 + $0x10] sm:$0xff]
  %v19 = vld [vmem:[%s1 + $0x18] sm:$0xff]
  %v20 = vld [vmem:[%s1 + $0x20] sm:$0xff]
  %v21 = vld [vmem:[%s1 + $0x28] sm:$0xff]
  %v22 = vld [vmem:[%s1 + $0x30] sm:$0xff]
  %v23 = vld [vmem:[%s1 + $0x38] sm:$0xff]
  %v24 = vld [vmem:[%s1 + $0x40] sm:$0xff]
  %v25 = vld [vmem:[%s1 + $0x48] sm:$0xff]
  %v26 = vld [vmem:[%s1 + $0x50] sm:$0xff]
  %v27 = vld [vmem:[%s1 + $0x58] sm:$0xff]
  %v28 = vld [vmem:[%s1 + $0x60] sm:$0xff]
  %v29 = vld [vmem:[%s1 + $0x68] sm:$0xff]
  %v30 = vld [vmem:[%s1 + $0x70] sm:$0xff]
  %v31 = vld [vmem:[%s1 + $0x78] sm:$0xff]
  %v32 = vld [vmem:[%s1 + $0x80] sm:$0xff]
  %v33 = vld [vmem:[%s1 + $0x88] sm:$0xff]
  %v34 = vld [vmem:[%s1 + $0x90] sm:$0xff]
  %v35 = vld [vmem:[%s1 + $0x98] sm:$0xff]
  %v36 = vld [vmem:[%s1 + $0xa0] sm:$0xff]
  %v37 = vld [vmem:[%s1 + $0xa8] sm:$0xff]
  %v38 = vld [vmem:[%s1 + $0xb0] sm:$0xff]
  %v39 = vld [vmem:[%s1 + $0xb8] sm:$0xff]
  %v40 = vld [vmem:[%s1 + $0xc0] sm:$0xff]
  %v41 = vld [vmem:[%s1 + $0xc8] sm:$0xff]
  %v42 = vld [vmem:[%s1 + $0xd0] sm:$0xff]
  %v43 = vld [vmem:[%s1 + $0xd8] sm:$0xff]
  %v44 = vld [vmem:[%s1 + $0xe0] sm:$0xff]
  %v45 = vld [vmem:[%s1 + $0xe8] sm:$0xff]
  %v46 = vld [vmem:[%s1 + $0xf0] sm:$0xff]
  %v47 = vld [vmem:[%s1 + $0xf8] sm:$0xff]
  %v48 = vld [vmem:[%s1 + $0x100] sm:$0xff]
  %v49 = vld [vmem:[%s1 + $0x108] sm:$0xff]
  %v50 = vld [vmem:[%s1 + $0x110] sm:$0xff]
  %v51 = vld [vmem:[%s1 + $0x118] sm:$0xff]
  %v52 = vld [vmem:[%s1 + $0x120] sm:$0xff]
  %v53 = vld [vmem:[%s1 + $0x128] sm:$0xff]
  %v54 = vld [vmem:[%s1 + $0x130] sm:$0xff]
  %v55 = vld [vmem:[%s1 + $0x138] sm:$0xff]
  %v56 = vld [vmem:[%s1 + $0x140] sm:$0xff]
  %v57 = vld [vmem:[%s1 + $0x148] sm:$0xff]
  %v58 = vld [vmem:[%s1 + $0x150] sm:$0xff]
  %v59 = vld [vmem:[%s1 + $0x158] sm:$0xff]
  %v60 = vld [vmem:[%s1 + $0x160] sm:$0xff]
  %v61 = vld [vmem:[%s1 + $0x168] sm:$0xff]
  %v62 = vld [vmem:[%s1 + $0x170] sm:$0xff]
  %v63 = vld [vmem:[%s1 + $0x178] sm:$0xff]
  %v64 = vld [vmem:[%s1 + $0x180] sm:$0xff]
  %v65 = vld [vmem:[%s1 + $0x188] sm:$0xff]
  %v66 = vld [vmem:[%s1 + $0x190] sm:$0xff]
  %v67 = vld [vmem:[%s1 + $0x198] sm:$0xff]
  %v68 = vld [vmem:[%s1 + $0x1a0] sm:$0xff]
  %v69 = vld [vmem:[%s1 + $0x1a8] sm:$0xff]
  %v70 = vld [vmem:[%s1 + $0x1b0] sm:$0xff]
  %v71 = vld [vmem:[%s1 + $0x1b8] sm:$0xff]
  %v72 = vld [vmem:[%s1 + $0x1c0] sm:$0xff]
  %v73 = vld [vmem:[%s1 + $0x1c8] sm:$0xff]
  %v74 = vld [vmem:[%s1 + $0x1d0] sm:$0xff]
  %v75 = vld [vmem:[%s1 + $0x1d8] sm:$0xff]
  %v76 = vld [vmem:[%s1 + $0x1e0] sm:$0xff]
  %v77 = vld [vmem:[%s1 + $0x1e8] sm:$0xff]
  %v78 = vld [vmem:[%s1 + $0x1f0] sm:$0xff]
  %v79 = vld [vmem:[%s1 + $0x1f8] sm:$0xff]
  %v80 = vld [vmem:[%s1 + $0x200] sm:$0xff]
  %v81 = vld [vmem:[%s1 + $0x208] sm:$0xff]
  %v82 = vld [vmem:[%s1 + $0x210] sm:$0xff]
  %v83 = vld [vmem:[%s1 + $0x218] sm:$0xff]
  %v84 = vld [vmem:[%s1 + $0x220] sm:$0xff]
  %v85 = vld [vmem:[%s1 + $0x228] sm:$0xff]
  %v86 = vld [vmem:[%s1 + $0x230] sm:$0xff]
  %v87 = vld [vmem:[%s1 + $0x238] sm:$0xff]
  %v88 = vld [vmem:[%s1 + $0x240] sm:$0xff]
  %v89 = vld [vmem:[%s1 + $0x248] sm:$0xff]
  %v90 = vld [vmem:[%s1 + $0x250] sm:$0xff]
  %v91 = vld [vmem:[%s1 + $0x258] sm:$0xff]
  %v92 = vld [vmem:[%s1 + $0x260] sm:$0xff]
  %v93 = vld [vmem:[%s1 + $0x268] sm:$0xff]
  %v94 = vld [vmem:[%s1 + $0x270] sm:$0xff]
  %v95 = vld [vmem:[%s1 + $0x278] sm:$0xff]
  %v96 = vld [vmem:[%s1 + $0x280] sm:$0xff]
  %v97 = vld [vmem:[%s1 + $0x288] sm:$0xff]
  %v98 = vld [vmem:[%s1 + $0x290] sm:$0xff]
  %v99 = vld [vmem:[%s1 + $0x298] sm:$0xff]
  %102 = vst [vmem:[#allocation1] ss:$4 sm:$0xff] %v14
  %s103 = scalar_lea.vmem [#allocation1], 32
  %104 = vst [vmem:[%s103] ss:$4 sm:$0xff] %v15
  %v105 = vld.sshfl [vmem:[#allocation1] sm:$0xff pattern:$0x73625140]
  %v106 = vld.sshfl [vmem:[#allocation1 + $0x8] sm:$0xff pattern:$0x73625140]
  %v107 = vld.sshfl [vmem:[#allocation1 + $0x10] sm:$0xff pattern:$0x73625140]
  %v108 = vld.sshfl [vmem:[#allocation1 + $0x18] sm:$0xff pattern:$0x73625140]
  %v109 = vld.sshfl [vmem:[#allocation1 + $0x20] sm:$0xff pattern:$0x73625140]
  %v110 = vld.sshfl [vmem:[#allocation1 + $0x28] sm:$0xff pattern:$0x73625140]
  %vm116 = vcmask 261120
  %v117 = vsel %vm116, %v110, 0
  %119 = vmatpush.msra.mxu0 %v31
  %120 = vmatpush.msra.mxu0 %v30
  %121 = vmatpush.msra.mxu0 %v29
  %122 = vmatpush.msra.mxu0 %v28
  %123 = vmatpush.msra.mxu0 %v27
  %124 = vmatpush.msra.mxu0 %v26
  %125 = vmatpush.msra.mxu0 %v25
  %126 = vmatpush.msra.mxu0 %v24
  %127 = vmatpush.msra.mxu0 %v23
  %128 = vmatpush.msra.mxu0 %v22
  %129 = vmatpush.msra.mxu0 %v21
  %130 = vmatpush.msra.mxu0 %v20
  %131 = vmatpush.msra.mxu0 %v19
  %132 = vmatpush.msra.mxu0 %v18
  %133 = vmatpush.msra.mxu0 %v17
  %134 = vmatpush.msra.mxu0 %v16
  %135 = vmatmul.f32.gmra.mxu0 %v105
  %v136 = vpop.f32.mrf.mxu0
  %v137 = vadd.f32 0.0, %v136
  %138 = vdwg.mxu0
  %139 = vmatpush.msra.mxu0 %v47
  %140 = vmatpush.msra.mxu0 %v46
  %141 = vmatpush.msra.mxu0 %v45
  %142 = vmatpush.msra.mxu0 %v44
  %143 = vmatpush.msra.mxu0 %v43
  %144 = vmatpush.msra.mxu0 %v42
  %145 = vmatpush.msra.mxu0 %v41
  %146 = vmatpush.msra.mxu0 %v40
  %147 = vmatpush.msra.mxu0 %v39
  %148 = vmatpush.msra.mxu0 %v38
  %149 = vmatpush.msra.mxu0 %v37
  %150 = vmatpush.msra.mxu0 %v36
  %151 = vmatpush.msra.mxu0 %v35
  %152 = vmatpush.msra.mxu0 %v34
  %153 = vmatpush.msra.mxu0 %v33
  %154 = vmatpush.msra.mxu0 %v32
  %155 = vmatmul.f32.gmra.mxu0 %v106
  %v156 = vpop.f32.mrf.mxu0
  %v157 = vadd.f32 %v137, %v156
  %158 = vdwg.mxu0
  %159 = vmatpush.msra.mxu0 %v63
  %160 = vmatpush.msra.mxu0 %v62
  %161 = vmatpush.msra.mxu0 %v61
  %162 = vmatpush.msra.mxu0 %v60
  %163 = vmatpush.msra.mxu0 %v59
  %164 = vmatpush.msra.mxu0 %v58
  %165 = vmatpush.msra.mxu0 %v57
  %166 = vmatpush.msra.mxu0 %v56
  %167 = vmatpush.msra.mxu0 %v55
  %168 = vmatpush.msra.mxu0 %v54
  %169 = vmatpush.msra.mxu0 %v53
  %170 = vmatpush.msra.mxu0 %v52
  %171 = vmatpush.msra.mxu0 %v51
  %172 = vmatpush.msra.mxu0 %v50
  %173 = vmatpush.msra.mxu0 %v49
  %174 = vmatpush.msra.mxu0 %v48
  %175 = vmatmul.f32.gmra.mxu0 %v107
  %v176 = vpop.f32.mrf.mxu0
  %v177 = vadd.f32 %v157, %v176
  %178 = vdwg.mxu0
  %179 = vmatpush.msra.mxu0 %v79
  %180 = vmatpush.msra.mxu0 %v78
  %181 = vmatpush.msra.mxu0 %v77
  %182 = vmatpush.msra.mxu0 %v76
  %183 = vmatpush.msra.mxu0 %v75
  %184 = vmatpush.msra.mxu0 %v74
  %185 = vmatpush.msra.mxu0 %v73
  %186 = vmatpush.msra.mxu0 %v72
  %187 = vmatpush.msra.mxu0 %v71
  %188 = vmatpush.msra.mxu0 %v70
  %189 = vmatpush.msra.mxu0 %v69
  %190 = vmatpush.msra.mxu0 %v68
  %191 = vmatpush.msra.mxu0 %v67
  %192 = vmatpush.msra.mxu0 %v66
  %193 = vmatpush.msra.mxu0 %v65
  %194 = vmatpush.msra.mxu0 %v64
  %195 = vmatmul.f32.gmra.mxu0 %v108
  %v196 = vpop.f32.mrf.mxu0
  %v197 = vadd.f32 %v177, %v196
  %198 = vdwg.mxu0
  %199 = vmatpush.msra.mxu0 %v95
  %200 = vmatpush.msra.mxu0 %v94
  %201 = vmatpush.msra.mxu0 %v93
  %202 = vmatpush.msra.mxu0 %v92
  %203 = vmatpush.msra.mxu0 %v91
  %204 = vmatpush.msra.mxu0 %v90
  %205 = vmatpush.msra.mxu0 %v89
  %206 = vmatpush.msra.mxu0 %v88
  %207 = vmatpush.msra.mxu0 %v87
  %208 = vmatpush.msra.mxu0 %v86
  %209 = vmatpush.msra.mxu0 %v85
  %210 = vmatpush.msra.mxu0 %v84
  %211 = vmatpush.msra.mxu0 %v83
  %212 = vmatpush.msra.mxu0 %v82
  %213 = vmatpush.msra.mxu0 %v81
  %214 = vmatpush.msra.mxu0 %v80
  %215 = vmatmul.f32.gmra.mxu0 %v109
  %v216 = vpop.f32.mrf.mxu0
  %v217 = vadd.f32 %v197, %v216
  %218 = vdwg.mxu0
  %219 = vmatpush.msra.mxu0 0.0
  %220 = vmatpush.msra.mxu0 0.0
  %221 = vmatpush.msra.mxu0 0.0
  %222 = vmatpush.msra.mxu0 0.0
  %223 = vmatpush.msra.mxu0 0.0
  %224 = vmatpush.msra.mxu0 0.0
  %225 = vmatpush.msra.mxu0 0.0
  %226 = vmatpush.msra.mxu0 0.0
  %227 = vmatpush.msra.mxu0 0.0
  %228 = vmatpush.msra.mxu0 0.0
  %229 = vmatpush.msra.mxu0 0.0
  %230 = vmatpush.msra.mxu0 0.0
  %231 = vmatpush.msra.mxu0 %v99
  %232 = vmatpush.msra.mxu0 %v98
  %233 = vmatpush.msra.mxu0 %v97
  %234 = vmatpush.msra.mxu0 %v96
  %235 = vmatmul.f32.gmra.mxu0 %v117
  %v236 = vpop.f32.mrf.mxu0
  %v237 = vadd.f32 %v217, %v236
  %238 = vdwg.mxu0
  %v239 = vmax.f32 %v237, 0.0
  %v240 = vld [vmem:[%s2] sm:$0x3]
  %vm241 = vcmask 15360
  %v243 = vsel %vm241, %v239, 0
  %vm245 = vcmask 1041408
  %v247 = vsel %vm245, %v240, 0
  %249 = vmatpush.msra.mxu0 0.0
  %250 = vmatpush.msra.mxu0 0.0
  %251 = vmatpush.msra.mxu0 0.0
  %252 = vmatpush.msra.mxu0 0.0
  %253 = vmatpush.msra.mxu0 0.0
  %254 = vmatpush.msra.mxu0 0.0
  %255 = vmatpush.msra.mxu0 0.0
  %256 = vmatpush.msra.mxu0 0.0
  %257 = vmatpush.msra.mxu0 0.0
  %258 = vmatpush.msra.mxu0 0.0
  %259 = vmatpush.msra.mxu0 0.0
  %260 = vmatpush.msra.mxu0 0.0
  %261 = vmatpush.msra.mxu0 0.0
  %262 = vmatpush.msra.mxu0 0.0
  %263 = vmatpush.msra.mxu0 0.0
  %264 = vmatpush.msra.mxu0 %v247
  %265 = vmatmul.f32.gmra.mxu0 %v243
  %v266 = vpop.f32.mrf.mxu0
  %v267 = vadd.f32 0.0, %v266
  %268 = vdwg.mxu0
  %v269 = vxor.u32 %v267, 2147483648
  %v270 = vmul.f32 %v269, 1.442695
  %v271 = vpow.pop %v270
  %v272 = vadd.f32 %v271, 1.0
  %v273 = vrcp.pop %v272
  %v274 = vmul.f32 %v272, %v273
  %v275 = vsub.f32 1.0, %v274
  %v276 = vmul.f32 %v273, %v275
  %v277 = vadd.f32 %v273, %v276
  %vm278 = vweird.f32 %v272
  %vm279 = vweird.f32 %v273
  %vm280 = vmor %vm278, %vm279
  %v281 = vsel %vm280, %v273, %v277
  %v282 = vand.u32 2147483647, %v272
  %vm283 = vcmp.eq.f32.partialorder %v282, 8.507059e+37
  %v284 = vand.u32 %v272, 2147483648
  %v285 = vor.u32 1.1754944e-38, %v284
  %v286 = vsel %vm283, %v285, %v281
  %v287 = vmul.f32 1.0, %v286
  %vm288 = vcmask 254976
  %289 = vst.msk [vmem:[%s3] sm:$0x3] %vm288, %v287
  // Predicated region
  $region14: #{inverted_residual_forward.6} parent=0 // pred_check
    _
  $region15: #{inverted_residual_forward.6} parent=0 // pred_check_branch
    %291 = sbr.rel (0) target = $region17
  $region16: #{inverted_residual_forward.6} parent=0 // pred_region
    _
  $region17: #{inverted_residual_forward.6} parent=0 // pred_fallthru
    _
  // Predicated region
  $region18: #{inverted_residual_forward.6} parent=0 // pred_check
    _
  $region19: #{inverted_residual_forward.6} parent=0 // pred_check_branch
    %293 = sbr.rel (0) target = $region21
  $region20: #{inverted_residual_forward.6} parent=0 // pred_region
    _
  $region21: #{inverted_residual_forward.6} parent=0 // pred_fallthru
    _

// kernel: inverted_residual_forward.7
$region0: #{inverted_residual_forward.7}
  #allocation0 [shape = 'u32[]', space=smem, size = 0x4, offset = 0x4, fixed_abs, tag = 'smem constant byte address 0x4 - core index']
  #allocation1 [shape = 'u32[72,128]{1,0:T(1,128)}', space=vmem, size = 0x9000, scoped, tag = 'internal scratch']
  %s0 = inlined_call_operand.vmem [shape: f32[2,256,32], index: 0, kind: input, shape index: {}]
  %s1 = inlined_call_operand.vmem [shape: f32[16,32], index: 1, kind: input, shape index: {}]
  %s2 = inlined_call_operand.vmem [shape: f32[16,1], index: 2, kind: input, shape index: {}]
  %s3 = inlined_call_operand.vmem [shape: f32[2,1,32], index: 3, kind: input, shape index: {}]
  %s4 = inlined_call_operand.vmem [shape: f32[2,16,256], index: 4, kind: input, shape index: {}]
  %s5 = inlined_call_operand.vmem [shape: f32[2,16,256], index: 5, kind: output, shape index: {}]
  %s6 = sld [smem:[#allocation0]]
  $region53: #{inverted_residual_forward.7} parent=0
    _
  %s8 = ssub.s32 1, %s6
  %s9 = scalar_select 0, %s8, %s6
  loop: start=0, step=1, limit=4
  $region2: #{inverted_residual_forward.7} parent=0 // loop_pre_header
    _
  $region3: #{inverted_residual_forward.7} parent=0 // loop_header
    %s11 = sphi 0, %s15
    %p12 = scmp.ge.s32.totalorder %s11, 4
    %s18 = sphi 0, %s30
    %s19 = sphi 0, %s26
    %s20 = sphi 0, %s18
    %s21 = sphi 0, %s19
    %s22 = sphi 0, %s20
    %s23 = sphi 0, %s21
    %s35 = sphi 0, %s37
    %s38 = sphi 0, %s35
    %s39 = sphi 0, %s38
    %s55 = sphi 0, %s39
    %s59 = sphi 0, %s59
    %s61 = sphi 0, %s59
    %s62 = sphi 0, %s61
    %s76 = sphi 0, %s62
    %s80 = sphi 0, %s80
    %s82 = sphi 0, %s80
    %s83 = sphi 0, %s82
    %s97 = sphi 0, %s83
    %s103 = sphi 0, %s105
    %s106 = sphi 0, %s103
    %s107 = sphi 0, %s106
    %s123 = sphi 0, %s107
    %s131 = sphi 0, %s133
    %s134 = sphi 0, %s131
    %s135 = sphi 0, %s134
    %s151 = sphi 0, %s135
    %s159 = sphi 0, %s161
    %s162 = sphi 0, %s159
    %s163 = sphi 0, %s162
    %s179 = sphi 0, %s163
  $region4: #{inverted_residual_forward.7} parent=0 // loop_header_branch
    %14 = sbr.rel (%p12) target = $region8
  $region5: #{inverted_residual_forward.7} parent=0 // loop_body
    %s16 = ssub.s32 %s11, 1
    %s17 = ssub.s32 %s11, 2
    %s24 = sadd.s32 1, %s19
    %p25 = scmp.ge.s32.totalorder %s24, 1
    %s26 = scalar_select %p25, 0, %s24
    %s27 = sadd.s32 1, %s18
    %s28 = scalar_select %p25, %s27, %s18
    %p29 = scmp.ge.s32.totalorder %s28, 2
    %s30 = scalar_select %p29, 0, %s28
    %s31 = ssub.s32 %s18, %s30
    %s32 = ssub.s32 %s19, %s26
    %s33 = sor.u32 %s31, %s32
    %p34 = scmp.eq.s32.totalorder %s33, 0
    %s36 = sadd.s32 %s35, 1
    %s37 = scalar_select %p34, %s35, %s36
    %p40 = pneg %p34
    %p41 = scmp.eq.s32.totalorder %s11, 1
    %p42 = por %p40, %p41
    %p43 = scmp.ne.s32.totalorder %s35, %s38
    %p44 = scmp.eq.s32.totalorder %s11, 0
    %p45 = por %p43, %p44
    %p46 = scmp.ne.s32.totalorder %s35, %s38
    %p47 = scmp.eq.s32.totalorder %s16, 1
    %p48 = por %p46, %p47
    %p49 = scmp.ne.s32.totalorder %s38, %s39
    %p50 = scmp.eq.s32.totalorder %s16, 0
    %p51 = por %p49, %p50
    %p52 = scmp.ne.s32.totalorder %s38, %s39
    %p53 = scmp.eq.s32.totalorder %s17, 1
    %p54 = por %p52, %p53
    %p56 = scmp.ne.s32.totalorder %s39, %s55
    %p57 = scmp.eq.s32.totalorder %s17, 0
    %p58 = por %p56, %p57
    %s60 = sadd.s32 %s59, 1
    %p63 = scmp.eq.s32.totalorder %s11, 1
    %p64 = scmp.ne.s32.totalorder %s59, %s61
    %p65 = scmp.eq.s32.totalorder %s11, 0
    %p66 = por %p64, %p65
    %p67 = scmp.ne.s32.totalorder %s59, %s61
    %p68 = scmp.eq.s32.totalorder %s16, 1
    %p69 = por %p67, %p68
    %p70 = scmp.ne.s32.totalorder %s61, %s62
    %p71 = scmp.eq.s32.totalorder %s16, 0
    %p72 = por %p70, %p71
    %p73 = scmp.ne.s32.totalorder %s61, %s62
    %p74 = scmp.eq.s32.totalorder %s17, 1
    %p75 = por %p73, %p74
    %p77 = scmp.ne.s32.totalorder %s62, %s76
    %p78 = scmp.eq.s32.totalorder %s17, 0
    %p79 = por %p77, %p78
    %s81 = sadd.s32 %s80, 1
    %p84 = scmp.eq.s32.totalorder %s11, 1
    %p85 = scmp.ne.s32.totalorder %s80, %s82
    %p86 = scmp.eq.s32.totalorder %s11, 0
    %p87 = por %p85, %p86
    %p88 = scmp.ne.s32.totalorder %s80, %s82
    %p89 = scmp.eq.s32.totalorder %s16, 1
    %p90 = por %p88, %p89
    %p91 = scmp.ne.s32.totalorder %s82, %s83
    %p92 = scmp.eq.s32.totalorder %s16, 0
    %p93 = por %p91, %p92
    %p94 = scmp.ne.s32.totalorder %s82, %s83
    %p95 = scmp.eq.s32.totalorder %s17, 1
    %p96 = por %p94, %p95
    %p98 = scmp.ne.s32.totalorder %s83, %s97
    %p99 = scmp.eq.s32.totalorder %s17, 0
    %p100 = por %p98, %p99
    %s101 = ssub.s32 %s18, %s30
    %p102 = scmp.eq.s32.totalorder %s101, 0
    %s104 = sadd.s32 %s103, 1
    %s105 = scalar_select %p102, %s103, %s104
    %p108 = pneg %p102
    %p109 = scmp.eq.s32.totalorder %s11, 1
    %p110 = por %p108, %p109
    %p111 = scmp.ne.s32.totalorder %s103, %s106
    %p112 = scmp.eq.s32.totalorder %s11, 0
    %p113 = por %p111, %p112
    %p114 = scmp.ne.s32.totalorder %s103, %s106
    %p115 = scmp.eq.s32.totalorder %s16, 1
    %p116 = por %p114, %p115
    %p117 = scmp.ne.s32.totalorder %s106, %s107
    %p118 = scmp.eq.s32.totalorder %s16, 0
    %p119 = por %p117, %p118
    %p120 = scmp.ne.s32.totalorder %s106, %s107
    %p121 = scmp.eq.s32.totalorder %s17, 1
    %p122 = por %p120, %p121
    %p124 = scmp.ne.s32.totalorder %s107, %s123
    %p125 = scmp.eq.s32.totalorder %s17, 0
    %p126 = por %p124, %p125
    %s127 = ssub.s32 %s18, %s30
    %s128 = ssub.s32 %s19, %s26
    %s129 = sor.u32 %s127, %s128
    %p130 = scmp.eq.s32.totalorder %s129, 0
    %s132 = sadd.s32 %s131, 1
    %s133 = scalar_select %p130, %s131, %s132
    %p136 = pneg %p130
    %p137 = scmp.eq.s32.totalorder %s11, 1
    %p138 = por %p136, %p137
    %p139 = scmp.ne.s32.totalorder %s131, %s134
    %p140 = scmp.eq.s32.totalorder %s11, 0
    %p141 = por %p139, %p140
    %p142 = scmp.ne.s32.totalorder %s131, %s134
    %p143 = scmp.eq.s32.totalorder %s16, 1
    %p144 = por %p142, %p143
    %p145 = scmp.ne.s32.totalorder %s134, %s135
    %p146 = scmp.eq.s32.totalorder %s16, 0
    %p147 = por %p145, %p146
    %p148 = scmp.ne.s32.totalorder %s134, %s135
    %p149 = scmp.eq.s32.totalorder %s17, 1
    %p150 = por %p148, %p149
    %p152 = scmp.ne.s32.totalorder %s135, %s151
    %p153 = scmp.eq.s32.totalorder %s17, 0
    %p154 = por %p152, %p153
    %s155 = ssub.s32 %s18, %s30
    %s156 = ssub.s32 %s19, %s26
    %s157 = sor.u32 %s155, %s156
    %p158 = scmp.eq.s32.totalorder %s157, 0
    %s160 = sadd.s32 %s159, 1
    %s161 = scalar_select %p158, %s159, %s160
    %p164 = pneg %p158
    %p165 = scmp.eq.s32.totalorder %s11, 1
    %p166 = por %p164, %p165
    %p167 = scmp.ne.s32.totalorder %s159, %s162
    %p168 = scmp.eq.s32.totalorder %s11, 0
    %p169 = por %p167, %p168
    %p170 = scmp.ne.s32.totalorder %s159, %s162
    %p171 = scmp.eq.s32.totalorder %s16, 1
    %p172 = por %p170, %p171
    %p173 = scmp.ne.s32.totalorder %s162, %s163
    %p174 = scmp.eq.s32.totalorder %s16, 0
    %p175 = por %p173, %p174
    %p176 = scmp.ne.s32.totalorder %s162, %s163
    %p177 = scmp.eq.s32.totalorder %s17, 1
    %p178 = por %p176, %p177
    %p180 = scmp.ne.s32.totalorder %s163, %s179
    %p181 = scmp.eq.s32.totalorder %s17, 0
    %p182 = por %p180, %p181
    %p183 = scmp.le.s32.totalorder 1, %s11
    %p184 = scmp.lt.s32.totalorder %s11, 3
    %p185 = pnand %p183, %p184
    %p186 = pneg %p185
    // Predicated region
    $region9: #{inverted_residual_forward.7} parent=5 // pred_check
      _
    $region10: #{inverted_residual_forward.7} parent=5 // pred_check_branch
      %188 = sbr.rel (%p185) target = $region12
    $region11: #{inverted_residual_forward.7} parent=5 // pred_region
      %s189 = ssub.s32 %s11, 1
      // Predicated region
      $region13: #{inverted_residual_forward.7} parent=11 // pred_check
        %p190 = pneg %p72
      $region14: #{inverted_residual_forward.7} parent=11 // pred_check_branch
        %192 = sbr.rel (%p190) target = $region16
      $region15: #{inverted_residual_forward.7} parent=11 // pred_region
        _
      $region16: #{inverted_residual_forward.7} parent=11 // pred_fallthru
        _
      // Predicated region
      $region17: #{inverted_residual_forward.7} parent=11 // pred_check
        %p193 = pneg %p93
      $region18: #{inverted_residual_forward.7} parent=11 // pred_check_branch
        %195 = sbr.rel (%p193) target = $region20
      $region19: #{inverted_residual_forward.7} parent=11 // pred_region
        _
      $region20: #{inverted_residual_forward.7} parent=11 // pred_fallthru
        _
    $region12: #{inverted_residual_forward.7} parent=5 // pred_fallthru
      _
    %p196 = scmp.lt.s32.totalorder %s11, 2
    // Predicated region
    $region21: #{inverted_residual_forward.7} parent=5 // pred_check
      %p197 = pneg %p196
    $region22: #{inverted_residual_forward.7} parent=5 // pred_check_branch
      %199 = sbr.rel (%p197) target = $region24
    $region23: #{inverted_residual_forward.7} parent=5 // pred_region
      // Predicated region
      $region25: #{inverted_residual_forward.7} parent=23 // pred_check
        %p200 = pneg %p45
      $region26: #{inverted_residual_forward.7} parent=23 // pred_check_branch
        %202 = sbr.rel (%p200) target = $region28
      $region27: #{inverted_residual_forward.7} parent=23 // pred_region
        %s203 = smul.u32 32, %s19
        %p204 = scmp.lt.s32.totalorder %s18, 1
        %s205 = scalar_select %p204, %s18, 1
        %p206 = scmp.lt.s32.totalorder %s203, 31
        %s207 = scalar_select %p206, %s203, 31
        %s208 = smul.addr %s205, 32
        %s209 = sadd.s32 %s207, %s208
        %s210 = smul.addr %s209, 8
        %s211 = scalar_lea.vmem %s0, %s210
        %s212 = smul.u32 32, %s19
      $region28: #{inverted_residual_forward.7} parent=23 // pred_fallthru
        _
      // Predicated region
      $region29: #{inverted_residual_forward.7} parent=23 // pred_check
        %p213 = pneg %p113
      $region30: #{inverted_residual_forward.7} parent=23 // pred_check_branch
        %215 = sbr.rel (%p213) target = $region32
      $region31: #{inverted_residual_forward.7} parent=23 // pred_region
        %p216 = scmp.lt.s32.totalorder %s18, 1
        %s217 = scalar_select %p216, %s18, 1
        %s218 = scalar_lea.vmem %s3, %s217
      $region32: #{inverted_residual_forward.7} parent=23 // pred_fallthru
        _
      // Predicated region
      $region33: #{inverted_residual_forward.7} parent=23 // pred_check
        %p219 = pneg %p141
      $region34: #{inverted_residual_forward.7} parent=23 // pred_check_branch
        %221 = sbr.rel (%p219) target = $region36
      $region35: #{inverted_residual_forward.7} parent=23 // pred_region
        %s222 = smul.u32 2, %s19
        %p223 = scmp.lt.s32.totalorder %s18, 1
        %s224 = scalar_select %p223, %s18, 1
        %p225 = scmp.lt.s32.totalorder %s222, 1
        %s226 = scalar_select %p225, %s222, 1
        %s227 = smul.addr %s224, 4
        %s228 = sadd.s32 %s226, %s227
        %s229 = smul.addr %s228, 8
        %s230 = scalar_lea.vmem %s4, %s229
        %s231 = smul.u32 2, %s19
      $region36: #{inverted_residual_forward.7} parent=23 // pred_fallthru
        _
    $region24: #{inverted_residual_forward.7} parent=5 // pred_fallthru
      _
    %p232 = scmp.le.s32.totalorder 1, %s11
    %p233 = scmp.lt.s32.totalorder %s11, 3
    %p234 = pnand %p232, %p233
    %p235 = pneg %p234
    // Predicated region
    $region37: #{inverted_residual_forward.7} parent=5 // pred_check
      _
    $region38: #{inverted_residual_forward.7} parent=5 // pred_check_branch
      %237 = sbr.rel (%p234) target = $region40
    $region39: #{inverted_residual_forward.7} parent=5 // pred_region
      %s238 = ssub.s32 %s11, 1
      %s239 = smul.u32 32, %s21
      %p240 = scmp.lt.s32.totalorder %s20, 1
      %s241 = scalar_select %p240, %s20, 1
      %p242 = scmp.lt.s32.totalorder %s239, 31
      %s243 = scalar_select %p242, %s239, 31
      %s244 = smul.addr %s241, 32
      %s245 = sadd.s32 %s243, %s244
      %s246 = smul.addr %s245, 8
      %s247 = scalar_lea.vmem %s0, %s246
      %p248 = pneg %p51
      %p249 = pneg %p48
      %p250 = pneg %p72
      %p251 = pneg %p69
      %p252 = pneg %p93
      %p253 = pneg %p90
      %p254 = scmp.lt.s32.totalorder %s20, 1
      %s255 = scalar_select %p254, %s20, 1
      %s256 = scalar_lea.vmem %s3, %s255
      %p257 = pneg %p119
      %p258 = pneg %p116
      %s259 = smul.u32 2, %s21
      %p260 = scmp.lt.s32.totalorder %s20, 1
      %s261 = scalar_select %p260, %s20, 1
      %p262 = scmp.lt.s32.totalorder %s259, 1
      %s263 = scalar_select %p262, %s259, 1
      %s264 = smul.addr %s261, 4
      %s265 = sadd.s32 %s263, %s264
      %s266 = smul.addr %s265, 8
      %s267 = scalar_lea.vmem %s4, %s266
      %p268 = pneg %p147
      %p269 = pneg %p144
      %p270 = pneg %p175
      %p271 = pneg %p172
      %s272 = smul.u32 2, %s21
      %p273 = scmp.lt.s32.totalorder %s20, 1
      %s274 = scalar_select %p273, %s20, 1
      %p275 = scmp.lt.s32.totalorder %s272, 1
      %s276 = scalar_select %p275, %s272, 1
      %s277 = smul.addr %s274, 4
      %s278 = sadd.s32 %s276, %s277
      %s279 = smul.addr %s278, 8
      %s280 = scalar_lea.vmem %s5, %s279
      %s281 = smul.u32 32, %s21
      %p282 = scmp.lt.s32.totalorder %s20, 1
      %s283 = scalar_select %p282, %s20, 1
      %p284 = scmp.lt.s32.totalorder %s281, 31
      %s285 = scalar_select %p284, %s281, 31
      %s286 = smul.addr %s283, 32
      %s287 = sadd.s32 %s285, %s286
      %s288 = smul.addr %s287, 8
      %s289 = scalar_lea.vmem %s0, %s288
      %s290 = smul.u32 32, %s21
      %p291 = scmp.lt.s32.totalorder %s20, 1
      %s292 = scalar_select %p291, %s20, 1
      %s293 = scalar_lea.vmem %s3, %s292
      %s294 = smul.u32 2, %s21
      %p295 = scmp.lt.s32.totalorder %s20, 1
      %s296 = scalar_select %p295, %s20, 1
      %p297 = scmp.lt.s32.totalorder %s294, 1
      %s298 = scalar_select %p297, %s294, 1
      %s299 = smul.addr %s296, 4
      %s300 = sadd.s32 %s298, %s299
      %s301 = smul.addr %s300, 8
      %s302 = scalar_lea.vmem %s4, %s301
      %s303 = smul.u32 2, %s21
      %s304 = smul.u32 2, %s21
      %p305 = scmp.lt.s32.totalorder %s20, 1
      %s306 = scalar_select %p305, %s20, 1
      %p307 = scmp.lt.s32.totalorder %s304, 1
      %s308 = scalar_select %p307, %s304, 1
      %s309 = smul.addr %s306, 4
      %s310 = sadd.s32 %s308, %s309
      %s311 = smul.addr %s310, 8
      %s312 = scalar_lea.vmem %s5, %s311
      %s313 = smul.u32 2, %s21
      %v314 = vld [vmem:[%s289] sm:$0xff]
      %v315 = vld [vmem:[%s289 + $0x8] sm:$0xff]
      %v316 = vld [vmem:[%s289 + $0x10] sm:$0xff]
      %v317 = vld [vmem:[%s289 + $0x18] sm:$0xff]
      %v318 = vld [vmem:[%s289 + $0x20] sm:$0xff]
      %v319 = vld [vmem:[%s289 + $0x28] sm:$0xff]
      %v320 = vld [vmem:[%s289 + $0x30] sm:$0xff]
      %v321 = vld [vmem:[%s289 + $0x38] sm:$0xff]
      %v322 = vld [vmem:[%s289 + $0x40] sm:$0xff]
      %v323 = vld [vmem:[%s289 + $0x48] sm:$0xff]
      %v324 = vld [vmem:[%s289 + $0x50] sm:$0xff]
      %v325 = vld [vmem:[%s289 + $0x58] sm:$0xff]
      %v326 = vld [vmem:[%s289 + $0x60] sm:$0xff]
      %v327 = vld [vmem:[%s289 + $0x68] sm:$0xff]
      %v328 = vld [vmem:[%s289 + $0x70] sm:$0xff]
      %v329 = vld [vmem:[%s289 + $0x78] sm:$0xff]
      %v330 = vld [vmem:[%s289 + $0x80] sm:$0xff]
      %v331 = vld [vmem:[%s289 + $0x88] sm:$0xff]
      %v332 = vld [vmem:[%s289 + $0x90] sm:$0xff]
      %v333 = vld [vmem:[%s289 + $0x98] sm:$0xff]
      %v334 = vld [vmem:[%s289 + $0xa0] sm:$0xff]
      %v335 = vld [vmem:[%s289 + $0xa8] sm:$0xff]
      %v336 = vld [vmem:[%s289 + $0xb0] sm:$0xff]
      %v337 = vld [vmem:[%s289 + $0xb8] sm:$0xff]
      %v338 = vld [vmem:[%s289 + $0xc0] sm:$0xff]
      %v339 = vld [vmem:[%s289 + $0xc8] sm:$0xff]
      %v340 = vld [vmem:[%s289 + $0xd0] sm:$0xff]
      %v341 = vld [vmem:[%s289 + $0xd8] sm:$0xff]
      %v342 = vld [vmem:[%s289 + $0xe0] sm:$0xff]
      %v343 = vld [vmem:[%s289 + $0xe8] sm:$0xff]
      %v344 = vld [vmem:[%s289 + $0xf0] sm:$0xff]
      %v345 = vld [vmem:[%s289 + $0xf8] sm:$0xff]
      %v346 = vld [vmem:[%s293] sm:$0x1]
      %v348 = vperm.slane %v346, 0
      %v350 = vmul.f32 %v314, %v348
      %v351 = vmul.f32 %v315, %v348
      %v352 = vmul.f32 %v316, %v348
      %v353 = vmul.f32 %v317, %v348
      %v354 = vmul.f32 %v318, %v348
      %v355 = vmul.f32 %v319, %v348
      %v356 = vmul.f32 %v320, %v348
      %v357 = vmul.f32 %v321, %v348
      %v358 = vmul.f32 %v322, %v348
      %v359 = vmul.f32 %v323, %v348
      %v360 = vmul.f32 %v324, %v348
      %v361 = vmul.f32 %v325, %v348
      %v362 = vmul.f32 %v326, %v348
      %v363 = vmul.f32 %v327, %v348
      %v364 = vmul.f32 %v328, %v348
      %v365 = vmul.f32 %v329, %v348
      %v366 = vmul.f32 %v330, %v348
      %v367 = vmul.f32 %v331, %v348
      %v368 = vmul.f32 %v332, %v348
      %v369 = vmul.f32 %v333, %v348
      %v370 = vmul.f32 %v334, %v348
      %v371 = vmul.f32 %v335, %v348
      %v372 = vmul.f32 %v336, %v348
      %v373 = vmul.f32 %v337, %v348
      %v374 = vmul.f32 %v338, %v348
      %v375 = vmul.f32 %v339, %v348
      %v376 = vmul.f32 %v340, %v348
      %v377 = vmul.f32 %v341, %v348
      %v378 = vmul.f32 %v342, %v348
      %v379 = vmul.f32 %v343, %v348
      %v380 = vmul.f32 %v344, %v348
      %v381 = vmul.f32 %v345, %v348
      %v382 = vld [vmem:[%s1] sm:$0xff]
      %v383 = vld [vmem:[%s1 + $0x8] sm:$0xff]
      %v384 = vld [vmem:[%s2] sm:$0xff]
      %v385 = vld [vmem:[%s2 + $0x8] sm:$0xff]
      %387 = vset.pattern.permute.xlu0 0
      %388 = vperm.xlu0 %387, %v384
      %v389 = vpop.permute.xlu0 %388
      %392 = vset.pattern.permute.xlu0 0
      %393 = vperm.xlu0 %392, %v385
      %v394 = vpop.permute.xlu0 %393
      %vm396 = vcmask 261120
      %v398 = vsel %vm396, %v382, 0
      %v401 = vsel %vm396, %v383, 0
      %v404 = vsel %vm396, %v350, 0
      %v407 = vsel %vm396, %v351, 0
      %v410 = vsel %vm396, %v352, 0
      %v413 = vsel %vm396, %v353, 0
      %v416 = vsel %vm396, %v354, 0
      %v419 = vsel %vm396, %v355, 0
      %v422 = vsel %vm396, %v356, 0
      %v425 = vsel %vm396, %v357, 0
      %v428 = vsel %vm396, %v358, 0
      %v431 = vsel %vm396, %v359, 0
      %v434 = vsel %vm396, %v360, 0
      %v437 = vsel %vm396, %v361, 0
      %v440 = vsel %vm396, %v362, 0
      %v443 = vsel %vm396, %v363, 0
      %v446 = vsel %vm396, %v364, 0
      %v449 = vsel %vm396, %v365, 0
      %v452 = vsel %vm396, %v366, 0
      %v455 = vsel %vm396, %v367, 0
      %v458 = vsel %vm396, %v368, 0
      %v461 = vsel %vm396, %v369, 0
      %v464 = vsel %vm396, %v370, 0
      %v467 = vsel %vm396, %v371, 0
      %v470 = vsel %vm396, %v372, 0
      %v473 = vsel %vm396, %v373, 0
      %v476 = vsel %vm396, %v374, 0
      %v479 = vsel %vm396, %v375, 0
      %v482 = vsel %vm396, %v376, 0
      %v485 = vsel %vm396, %v377, 0
      %v488 = vsel %vm396, %v378, 0
      %v491 = vsel %vm396, %v379, 0
      %v494 = vsel %vm396, %v380, 0
      %v497 = vsel %vm396, %v381, 0
      %499 = vmatpush.xpose.msra.mxu0 %v449
      %500 = vmatpush.xpose.msra.mxu0 %v446
      %501 = vmatpush.xpose.msra.mxu0 %v443
      %502 = vmatpush.xpose.msra.mxu0 %v440
      %503 = vmatpush.xpose.msra.mxu0 %v437
      %504 = vmatpush.xpose.msra.mxu0 %v434
      %505 = vmatpush.xpose.msra.mxu0 %v431
      %506 = vmatpush.xpose.msra.mxu0 %v428
      %507 = vmatpush.xpose.msra.mxu0 %v425
      %508 = vmatpush.xpose.msra.mxu0 %v422
      %509 = vmatpush.xpose.msra.mxu0 %v419
      %510 = vmatpush.xpose.msra.mxu0 %v416
      %511 = vmatpush.xpose.msra.mxu0 %v413
      %512 = vmatpush.xpose.msra.mxu0 %v410
      %513 = vmatpush.xpose.msra.mxu0 %v407
      %514 = vmatpush.xpose.msra.mxu0 %v404
      %515 = vmatmul.f32.gmra.mxu0 %v398
      %v516 = vpop.f32.mrf.mxu0
      %v517 = vadd.f32 %v389, %v516
      %518 = vmatmul.f32.gmra.mxu0 %v401
      %v519 = vpop.f32.mrf.mxu0
      %v520 = vadd.f32 %v394, %v519
      %521 = vdwg.mxu0
      %522 = vmatpush.xpose.msra.mxu0 %v497
      %523 = vmatpush.xpose.msra.mxu0 %v494
      %524 = vmatpush.xpose.msra.mxu0 %v491
      %525 = vmatpush.xpose.msra.mxu0 %v488
      %526 = vmatpush.xpose.msra.mxu0 %v485
      %527 = vmatpush.xpose.msra.mxu0 %v482
      %528 = vmatpush.xpose.msra.mxu0 %v479
      %529 = vmatpush.xpose.msra.mxu0 %v476
      %530 = vmatpush.xpose.msra.mxu0 %v473
      %531 = vmatpush.xpose.msra.mxu0 %v470
      %532 = vmatpush.xpose.msra.mxu0 %v467
      %533 = vmatpush.xpose.msra.mxu0 %v464
      %534 = vmatpush.xpose.msra.mxu0 %v461
      %535 = vmatpush.xpose.msra.mxu0 %v458
      %536 = vmatpush.xpose.msra.mxu0 %v455
      %537 = vmatpush.xpose.msra.mxu0 %v452
      %538 = vmatmul.f32.gmra.mxu0 %v398
      %v539 = vpop.f32.mrf.mxu0
      %v540 = vadd.f32 %v389, %v539
      %541 = vmatmul.f32.gmra.mxu0 %v401
      %v542 = vpop.f32.mrf.mxu0
      %v543 = vadd.f32 %v394, %v542
      %544 = vdwg.mxu0
      %v545 = vld [vmem:[%s302] sm:$0xff]
      %v546 = vld [vmem:[%s302 + $0x8] sm:$0xff]
      %v547 = vld [vmem:[%s302 + $0x10] sm:$0xff]
      %v548 = vld [vmem:[%s302 + $0x18] sm:$0xff]
      %v549 = vadd.f32 %v517, %v545
      %v550 = vadd.f32 %v540, %v546
      %v551 = vadd.f32 %v520, %v547
      %v552 = vadd.f32 %v543, %v548
      %553 = vst [vmem:[%s312] sm:$0xff] %v549
      %554 = vst [vmem:[%s312 + $0x8] sm:$0xff] %v550
      %555 = vst [vmem:[%s312 + $0x10] sm:$0xff] %v551
      %556 = vst [vmem:[%s312 + $0x18] sm:$0xff] %v552
      %s557 = smul.u32 2, %s21
      %p558 = scmp.lt.s32.totalorder %s20, 1
      %s559 = scalar_select %p558, %s20, 1
      %p560 = scmp.lt.s32.totalorder %s557, 1
      %s561 = scalar_select %p560, %s557, 1
      %s562 = smul.addr %s559, 4
      %s563 = sadd.s32 %s561, %s562
      %s564 = smul.addr %s563, 8
      %s565 = scalar_lea.vmem %s5, %s564
      // Predicated region
      $region41: #{inverted_residual_forward.7} parent=39 // pred_check
        %p566 = pneg %p172
      $region42: #{inverted_residual_forward.7} parent=39 // pred_check_branch
        %568 = sbr.rel (%p566) target = $region44
      $region43: #{inverted_residual_forward.7} parent=39 // pred_region
        %s569 = smul.u32 2, %s21
      $region44: #{inverted_residual_forward.7} parent=39 // pred_fallthru
        _
    $region40: #{inverted_residual_forward.7} parent=5 // pred_fallthru
      _
    %p570 = scmp.le.s32.totalorder 2, %s11
    // Predicated region
    $region45: #{inverted_residual_forward.7} parent=5 // pred_check
      %p571 = pneg %p570
    $region46: #{inverted_residual_forward.7} parent=5 // pred_check_branch
      %573 = sbr.rel (%p571) target = $region48
    $region47: #{inverted_residual_forward.7} parent=5 // pred_region
      %s574 = ssub.s32 %s11, 2
      // Predicated region
      $region49: #{inverted_residual_forward.7} parent=47 // pred_check
        %p575 = pneg %p178
      $region50: #{inverted_residual_forward.7} parent=47 // pred_check_branch
        %577 = sbr.rel (%p575) target = $region52
      $region51: #{inverted_residual_forward.7} parent=47 // pred_region
        %s578 = smul.u32 2, %s23
        %p579 = scmp.lt.s32.totalorder %s22, 1
        %s580 = scalar_select %p579, %s22, 1
        %p581 = scmp.lt.s32.totalorder %s578, 1
        %s582 = scalar_select %p581, %s578, 1
        %s583 = smul.addr %s580, 4
        %s584 = sadd.s32 %s582, %s583
        %s585 = smul.addr %s584, 8
        %s586 = scalar_lea.vmem %s5, %s585
      $region52: #{inverted_residual_forward.7} parent=47 // pred_fallthru
        _
    $region48: #{inverted_residual_forward.7} parent=5 // pred_fallthru
      _
  $region6: #{inverted_residual_forward.7} parent=0 // loop_footer
    %s15 = sadd.s32 1, %s11
  $region7: #{inverted_residual_forward.7} parent=0 // loop_footer_branch
    %10 = sbr.rel target = $region3
  $region8: #{inverted_residual_forward.7} parent=0 // loop_exit
    _

// kernel: inverted_residual_forward.5
$region0: #{inverted_residual_forward.5}
  #allocation0 [shape = 'u32[]', space=smem, size = 0x4, offset = 0x4, fixed_abs, tag = 'smem constant byte address 0x4 - core index']
  #allocation1 [shape = 'u32[72,128]{1,0:T(1,128)}', space=vmem, size = 0x9000, scoped, tag = 'internal scratch']
  #allocation2 [shape = 'f32[18,18,32]{2,1,0:T(8,128)}', space=vmem, size = 0x36000, scoped, tag = 'scratch operand']
  %s0 = inlined_call_operand.vmem [shape: f32[2,16,16,32], index: 0, kind: input, shape index: {}]
  %s1 = inlined_call_operand.vmem [shape: f32[9,32], index: 1, kind: input, shape index: {}]
  %s2 = inlined_call_operand.vmem [shape: f32[1,32], index: 2, kind: input, shape index: {}]
  %s3 = inlined_call_operand.vmem [shape: f32[2,16,16,32], index: 3, kind: output, shape index: {0}]
  %s4 = inlined_call_operand.vmem [shape: f32[2,21,32], index: 4, kind: output, shape index: {1}]
  %5 = xla_tuple %s3, %s4
  %s6 = sld [smem:[#allocation0]]
  $region53: #{inverted_residual_forward.5} parent=0
    _
  %s8 = ssub.s32 1, %s6
  %s9 = scalar_select 0, %s8, %s6
  loop: start=0, step=1, limit=4
  $region2: #{inverted_residual_forward.5} parent=0 // loop_pre_header
    _
  $region3: #{inverted_residual_forward.5} parent=0 // loop_header
    %s11 = sphi 0, %s15
    %p12 = scmp.ge.s32.totalorder %s11, 4
    %s21 = sphi 0, %s23
    %s24 = sphi 0, %s21
    %s25 = sphi 0, %s24
    %s41 = sphi 0, %s25
    %s45 = sphi 0, %s45
    %s47 = sphi 0, %s45
    %s48 = sphi 0, %s47
    %s62 = sphi 0, %s48
    %s66 = sphi 0, %s66
    %s68 = sphi 0, %s66
    %s69 = sphi 0, %s68
    %s83 = sphi 0, %s69
    %s89 = sphi 0, %s91
    %s92 = sphi 0, %s89
    %s93 = sphi 0, %s92
    %s109 = sphi 0, %s93
    %s115 = sphi 0, %s117
    %s118 = sphi 0, %s115
    %s119 = sphi 0, %s118
    %s135 = sphi 0, %s119
  $region4: #{inverted_residual_forward.5} parent=0 // loop_header_branch
    %14 = sbr.rel (%p12) target = $region8
  $region5: #{inverted_residual_forward.5} parent=0 // loop_body
    %s16 = ssub.s32 %s11, 1
    %s17 = ssub.s32 %s11, 2
    %s18 = sadd.s32 %s11, 1
    %s19 = ssub.s32 %s11, %s18
    %p20 = scmp.eq.s32.totalorder %s19, 0
    %s22 = sadd.s32 %s21, 1
    %s23 = scalar_select %p20, %s21, %s22
    %p26 = pneg %p20
    %p27 = scmp.eq.s32.totalorder %s11, 1
    %p28 = por %p26, %p27
    %p29 = scmp.ne.s32.totalorder %s21, %s24
    %p30 = scmp.eq.s32.totalorder %s11, 0
    %p31 = por %p29, %p30
    %p32 = scmp.ne.s32.totalorder %s21, %s24
    %p33 = scmp.eq.s32.totalorder %s16, 1
    %p34 = por %p32, %p33
    %p35 = scmp.ne.s32.totalorder %s24, %s25
    %p36 = scmp.eq.s32.totalorder %s16, 0
    %p37 = por %p35, %p36
    %p38 = scmp.ne.s32.totalorder %s24, %s25
    %p39 = scmp.eq.s32.totalorder %s17, 1
    %p40 = por %p38, %p39
    %p42 = scmp.ne.s32.totalorder %s25, %s41
    %p43 = scmp.eq.s32.totalorder %s17, 0
    %p44 = por %p42, %p43
    %s46 = sadd.s32 %s45, 1
    %p49 = scmp.eq.s32.totalorder %s11, 1
    %p50 = scmp.ne.s32.totalorder %s45, %s47
    %p51 = scmp.eq.s32.totalorder %s11, 0
    %p52 = por %p50, %p51
    %p53 = scmp.ne.s32.totalorder %s45, %s47
    %p54 = scmp.eq.s32.totalorder %s16, 1
    %p55 = por %p53, %p54
    %p56 = scmp.ne.s32.totalorder %s47, %s48
    %p57 = scmp.eq.s32.totalorder %s16, 0
    %p58 = por %p56, %p57
    %p59 = scmp.ne.s32.totalorder %s47, %s48
    %p60 = scmp.eq.s32.totalorder %s17, 1
    %p61 = por %p59, %p60
    %p63 = scmp.ne.s32.totalorder %s48, %s62
    %p64 = scmp.eq.s32.totalorder %s17, 0
    %p65 = por %p63, %p64
    %s67 = sadd.s32 %s66, 1
    %p70 = scmp.eq.s32.totalorder %s11, 1
    %p71 = scmp.ne.s32.totalorder %s66, %s68
    %p72 = scmp.eq.s32.totalorder %s11, 0
    %p73 = por %p71, %p72
    %p74 = scmp.ne.s32.totalorder %s66, %s68
    %p75 = scmp.eq.s32.totalorder %s16, 1
    %p76 = por %p74, %p75
    %p77 = scmp.ne.s32.totalorder %s68, %s69
    %p78 = scmp.eq.s32.totalorder %s16, 0
    %p79 = por %p77, %p78
    %p80 = scmp.ne.s32.totalorder %s68, %s69
    %p81 = scmp.eq.s32.totalorder %s17, 1
    %p82 = por %p80, %p81
    %p84 = scmp.ne.s32.totalorder %s69, %s83
    %p85 = scmp.eq.s32.totalorder %s17, 0
    %p86 = por %p84, %p85
    %s87 = ssub.s32 %s11, %s18
    %p88 = scmp.eq.s32.totalorder %s87, 0
    %s90 = sadd.s32 %s89, 1
    %s91 = scalar_select %p88, %s89, %s90
    %p94 = pneg %p88
    %p95 = scmp.eq.s32.totalorder %s11, 1
    %p96 = por %p94, %p95
    %p97 = scmp.ne.s32.totalorder %s89, %s92
    %p98 = scmp.eq.s32.totalorder %s11, 0
    %p99 = por %p97, %p98
    %p100 = scmp.ne.s32.totalorder %s89, %s92
    %p101 = scmp.eq.s32.totalorder %s16, 1
    %p102 = por %p100, %p101
    %p103 = scmp.ne.s32.totalorder %s92, %s93
    %p104 = scmp.eq.s32.totalorder %s16, 0
    %p105 = por %p103, %p104
    %p106 = scmp.ne.s32.totalorder %s92, %s93
    %p107 = scmp.eq.s32.totalorder %s17, 1
    %p108 = por %p106, %p107
    %p110 = scmp.ne.s32.totalorder %s93, %s109
    %p111 = scmp.eq.s32.totalorder %s17, 0
    %p112 = por %p110, %p111
    %s113 = ssub.s32 %s11, %s18
    %p114 = scmp.eq.s32.totalorder %s113, 0
    %s116 = sadd.s32 %s115, 1
    %s117 = scalar_select %p114, %s115, %s116
    %p120 = pneg %p114
    %p121 = scmp.eq.s32.totalorder %s11, 1
    %p122 = por %p120, %p121
    %p123 = scmp.ne.s32.totalorder %s115, %s118
    %p124 = scmp.eq.s32.totalorder %s11, 0
    %p125 = por %p123, %p124
    %p126 = scmp.ne.s32.totalorder %s115, %s118
    %p127 = scmp.eq.s32.totalorder %s16, 1
    %p128 = por %p126, %p127
    %p129 = scmp.ne.s32.totalorder %s118, %s119
    %p130 = scmp.eq.s32.totalorder %s16, 0
    %p131 = por %p129, %p130
    %p132 = scmp.ne.s32.totalorder %s118, %s119
    %p133 = scmp.eq.s32.totalorder %s17, 1
    %p134 = por %p132, %p133
    %p136 = scmp.ne.s32.totalorder %s119, %s135
    %p137 = scmp.eq.s32.totalorder %s17, 0
    %p138 = por %p136, %p137
    %p139 = scmp.le.s32.totalorder 1, %s11
    %p140 = scmp.lt.s32.totalorder %s11, 3
    %p141 = pnand %p139, %p140
    %p142 = pneg %p141
    // Predicated region
    $region9: #{inverted_residual_forward.5} parent=5 // pred_check
      _
    $region10: #{inverted_residual_forward.5} parent=5 // pred_check_branch
      %144 = sbr.rel (%p141) target = $region12
    $region11: #{inverted_residual_forward.5} parent=5 // pred_region
      %s145 = ssub.s32 %s11, 1
      // Predicated region
      $region13: #{inverted_residual_forward.5} parent=11 // pred_check
        %p146 = pneg %p58
      $region14: #{inverted_residual_forward.5} parent=11 // pred_check_branch
        %148 = sbr.rel (%p146) target = $region16
      $region15: #{inverted_residual_forward.5} parent=11 // pred_region
        _
      $region16: #{inverted_residual_forward.5} parent=11 // pred_fallthru
        _
      // Predicated region
      $region17: #{inverted_residual_forward.5} parent=11 // pred_check
        %p149 = pneg %p79
      $region18: #{inverted_residual_forward.5} parent=11 // pred_check_branch
        %151 = sbr.rel (%p149) target = $region20
      $region19: #{inverted_residual_forward.5} parent=11 // pred_region
        _
      $region20: #{inverted_residual_forward.5} parent=11 // pred_fallthru
        _
    $region12: #{inverted_residual_forward.5} parent=5 // pred_fallthru
      _
    %p152 = scmp.lt.s32.totalorder %s11, 2
    // Predicated region
    $region21: #{inverted_residual_forward.5} parent=5 // pred_check
      %p153 = pneg %p152
    $region22: #{inverted_residual_forward.5} parent=5 // pred_check_branch
      %155 = sbr.rel (%p153) target = $region24
    $region23: #{inverted_residual_forward.5} parent=5 // pred_region
      // Predicated region
      $region25: #{inverted_residual_forward.5} parent=23 // pred_check
        %p156 = pneg %p31
      $region26: #{inverted_residual_forward.5} parent=23 // pred_check_branch
        %158 = sbr.rel (%p156) target = $region28
      $region27: #{inverted_residual_forward.5} parent=23 // pred_region
        %p159 = scmp.lt.s32.totalorder %s11, 1
        %s160 = scalar_select %p159, %s11, 1
        %s161 = smul.addr %s160, 32
        %s162 = smul.addr %s161, 8
        %s163 = scalar_lea.vmem %s0, %s162
      $region28: #{inverted_residual_forward.5} parent=23 // pred_fallthru
        _
    $region24: #{inverted_residual_forward.5} parent=5 // pred_fallthru
      _
    %p164 = scmp.le.s32.totalorder 1, %s11
    %p165 = scmp.lt.s32.totalorder %s11, 3
    %p166 = pnand %p164, %p165
    %p167 = pneg %p166
    // Predicated region
    $region29: #{inverted_residual_forward.5} parent=5 // pred_check
      _
    $region30: #{inverted_residual_forward.5} parent=5 // pred_check_branch
      %169 = sbr.rel (%p166) target = $region32
    $region31: #{inverted_residual_forward.5} parent=5 // pred_region
      %s170 = ssub.s32 %s11, 1
      %p171 = scmp.lt.s32.totalorder %s16, 1
      %s172 = scalar_select %p171, %s16, 1
      %s173 = smul.addr %s172, 32
      %s174 = smul.addr %s173, 8
      %s175 = scalar_lea.vmem %s0, %s174
      %p176 = pneg %p37
      %p177 = pneg %p34
      %p178 = pneg %p58
      %p179 = pneg %p55
      %p180 = pneg %p79
      %p181 = pneg %p76
      %p182 = pneg %p105
      %p183 = pneg %p102
      %p184 = scmp.lt.s32.totalorder %s16, 1
      %s185 = scalar_select %p184, %s16, 1
      %s186 = smul.addr %s185, 32
      %s187 = smul.addr %s186, 8
      %s188 = scalar_lea.vmem %s3, %s187
      %p189 = pneg %p131
      %p190 = pneg %p128
      %p191 = scmp.lt.s32.totalorder %s16, 1
      %s192 = scalar_select %p191, %s16, 1
      %s193 = smul.addr %s192, 3
      %s194 = smul.addr %s193, 8
      %s195 = scalar_lea.vmem %s4, %s194
      %p196 = scmp.lt.s32.totalorder %s16, 1
      %s197 = scalar_select %p196, %s16, 1
      %s198 = smul.addr %s197, 32
      %s199 = smul.addr %s198, 8
      %s200 = scalar_lea.vmem %s0, %s199
      %p201 = scmp.lt.s32.totalorder %s16, 1
      %s202 = scalar_select %p201, %s16, 1
      %s203 = smul.addr %s202, 32
      %s204 = smul.addr %s203, 8
      %s205 = scalar_lea.vmem %s3, %s204
      %p206 = scmp.lt.s32.totalorder %s16, 1
      %s207 = scalar_select %p206, %s16, 1
      %s208 = smul.addr %s207, 3
      %s209 = smul.addr %s208, 8
      %s210 = scalar_lea.vmem %s4, %s209
      %vm211 = vcmask 261120
      %212 = vst.msk [vmem:[#allocation2] sm:$0xff] %vm211, 0.0
      %213 = vst.msk [vmem:[#allocation2 + $0x8] sm:$0xff] %vm211, 0.0
      %vm214 = vcmask 254976
      %215 = vst.msk [vmem:[#allocation2 + $0x10] sm:$0x3] %vm214, 0.0
      %s216 = scalar_lea.vmem [#allocation2], 408
      %217 = vst.msk [vmem:[%s216] sm:$0xff] %vm211, 0.0
      %218 = vst.msk [vmem:[%s216 + $0x8] sm:$0xff] %vm211, 0.0
      %219 = vst.msk [vmem:[%s216 + $0x10] sm:$0x3] %vm214, 0.0
      %vm220 = vcmask 253952
      %221 = vst.msk [vmem:[#allocation2] sm:$0x1] %vm220, 0.0
      %222 = vst.msk [vmem:[#allocation2 + $0x18] sm:$0x1] %vm220, 0.0
      %223 = vst.msk [vmem:[#allocation2 + $0x30] sm:$0x1] %vm220, 0.0
      %224 = vst.msk [vmem:[#allocation2 + $0x48] sm:$0x1] %vm220, 0.0
      %225 = vst.msk [vmem:[#allocation2 + $0x60] sm:$0x1] %vm220, 0.0
      %226 = vst.msk [vmem:[#allocation2 + $0x78] sm:$0x1] %vm220, 0.0
      %227 = vst.msk [vmem:[#allocation2 + $0x90] sm:$0x1] %vm220, 0.0
      %228 = vst.msk [vmem:[#allocation2 + $0xa8] sm:$0x1] %vm220, 0.0
      %229 = vst.msk [vmem:[#allocation2 + $0xc0] sm:$0x1] %vm220, 0.0
      %230 = vst.msk [vmem:[#allocation2 + $0xd8] sm:$0x1] %vm220, 0.0
      %231 = vst.msk [vmem:[#allocation2 + $0xf0] sm:$0x1] %vm220, 0.0
      %232 = vst.msk [vmem:[#allocation2 + $0x108] sm:$0x1] %vm220, 0.0
      %233 = vst.msk [vmem:[#allocation2 + $0x120] sm:$0x1] %vm220, 0.0
      %234 = vst.msk [vmem:[#allocation2 + $0x138] sm:$0x1] %vm220, 0.0
      %235 = vst.msk [vmem:[#allocation2 + $0x150] sm:$0x1] %vm220, 0.0
      %236 = vst.msk [vmem:[#allocation2 + $0x168] sm:$0x1] %vm220, 0.0
      %237 = vst.msk [vmem:[#allocation2 + $0x180] sm:$0x1] %vm220, 0.0
      %238 = vst.msk [vmem:[#allocation2 + $0x198] sm:$0x1] %vm220, 0.0
      %239 = vst.msk [vmem:[#allocation2 + $0x11] sm:$0x1] %vm220, 0.0
      %240 = vst.msk [vmem:[#allocation2 + $0x29] sm:$0x1] %vm220, 0.0
      %241 = vst.msk [vmem:[#allocation2 + $0x41] sm:$0x1] %vm220, 0.0
      %242 = vst.msk [vmem:[#allocation2 + $0x59] sm:$0x1] %vm220, 0.0
      %243 = vst.msk [vmem:[#allocation2 + $0x71] sm:$0x1] %vm220, 0.0
      %244 = vst.msk [vmem:[#allocation2 + $0x89] sm:$0x1] %vm220, 0.0
      %245 = vst.msk [vmem:[#allocation2 + $0xa1] sm:$0x1] %vm220, 0.0
      %246 = vst.msk [vmem:[#allocation2 + $0xb9] sm:$0x1] %vm220, 0.0
      %247 = vst.msk [vmem:[#allocation2 + $0xd1] sm:$0x1] %vm220, 0.0
      %248 = vst.msk [vmem:[#allocation2 + $0xe9] sm:$0x1] %vm220, 0.0
      %249 = vst.msk [vmem:[#allocation2 + $0x101] sm:$0x1] %vm220, 0.0
      %250 = vst.msk [vmem:[#allocation2 + $0x119] sm:$0x1] %vm220, 0.0
      %251 = vst.msk [vmem:[#allocation2 + $0x131] sm:$0x1] %vm220, 0.0
      %252 = vst.msk [vmem:[#allocation2 + $0x149] sm:$0x1] %vm220, 0.0
      %253 = vst.msk [vmem:[#allocation2 + $0x161] sm:$0x1] %vm220, 0.0
      %254 = vst.msk [vmem:[#allocation2 + $0x179] sm:$0x1] %vm220, 0.0
      %255 = vst.msk [vmem:[#allocation2 + $0x191] sm:$0x1] %vm220, 0.0
      %256 = vst.msk [vmem:[#allocation2 + $0x1a9] sm:$0x1] %vm220, 0.0
      %v257 = vld [vmem:[%s200] sm:$0xff]
      %v258 = vld [vmem:[%s200 + $0x8] sm:$0xff]
      %v259 = vld [vmem:[%s200 + $0x10] sm:$0xff]
      %v260 = vld [vmem:[%s200 + $0x18] sm:$0xff]
      %v261 = vld [vmem:[%s200 + $0x20] sm:$0xff]
      %v262 = vld [vmem:[%s200 + $0x28] sm:$0xff]
      %v263 = vld [vmem:[%s200 + $0x30] sm:$0xff]
      %v264 = vld [vmem:[%s200 + $0x38] sm:$0xff]
      %v265 = vld [vmem:[%s200 + $0x40] sm:$0xff]
      %v266 = vld [vmem:[%s200 + $0x48] sm:$0xff]
      %v267 = vld [vmem:[%s200 + $0x50] sm:$0xff]
      %v268 = vld [vmem:[%s200 + $0x58] sm:$0xff]
      %v269 = vld [vmem:[%s200 + $0x60] sm:$0xff]
      %v270 = vld [vmem:[%s200 + $0x68] sm:$0xff]
      %v271 = vld [vmem:[%s200 + $0x70] sm:$0xff]
      %v272 = vld [vmem:[%s200 + $0x78] sm:$0xff]
      %v273 = vld [vmem:[%s200 + $0x80] sm:$0xff]
      %v274 = vld [vmem:[%s200 + $0x88] sm:$0xff]
      %v275 = vld [vmem:[%s200 + $0x90] sm:$0xff]
      %v276 = vld [vmem:[%s200 + $0x98] sm:$0xff]
      %v277 = vld [vmem:[%s200 + $0xa0] sm:$0xff]
      %v278 = vld [vmem:[%s200 + $0xa8] sm:$0xff]
      %v279 = vld [vmem:[%s200 + $0xb0] sm:$0xff]
      %v280 = vld [vmem:[%s200 + $0xb8] sm:$0xff]
      %v281 = vld [vmem:[%s200 + $0xc0] sm:$0xff]
      %v282 = vld [vmem:[%s200 + $0xc8] sm:$0xff]
      %v283 = vld [vmem:[%s200 + $0xd0] sm:$0xff]
      %v284 = vld [vmem:[%s200 + $0xd8] sm:$0xff]
      %v285 = vld [vmem:[%s200 + $0xe0] sm:$0xff]
      %v286 = vld [vmem:[%s200 + $0xe8] sm:$0xff]
      %v287 = vld [vmem:[%s200 + $0xf0] sm:$0xff]
      %v288 = vld [vmem:[%s200 + $0xf8] sm:$0xff]
      %s289 = scalar_lea.vmem [#allocation2], 24
      %290 = vst.msk [vmem:[%s289 + $0x1] sm:$0xff] %vm211, %v257
      %291 = vst.msk [vmem:[%s289 + $0x9] sm:$0xff] %vm211, %v258
      %292 = vst.msk [vmem:[%s289 + $0x19] sm:$0xff] %vm211, %v259
      %293 = vst.msk [vmem:[%s289 + $0x21] sm:$0xff] %vm211, %v260
      %294 = vst.msk [vmem:[%s289 + $0x31] sm:$0xff] %vm211, %v261
      %295 = vst.msk [vmem:[%s289 + $0x39] sm:$0xff] %vm211, %v262
      %296 = vst.msk [vmem:[%s289 + $0x49] sm:$0xff] %vm211, %v263
      %297 = vst.msk [vmem:[%s289 + $0x51] sm:$0xff] %vm211, %v264
      %298 = vst.msk [vmem:[%s289 + $0x61] sm:$0xff] %vm211, %v265
      %299 = vst.msk [vmem:[%s289 + $0x69] sm:$0xff] %vm211, %v266
      %300 = vst.msk [vmem:[%s289 + $0x79] sm:$0xff] %vm211, %v267
      %301 = vst.msk [vmem:[%s289 + $0x81] sm:$0xff] %vm211, %v268
      %302 = vst.msk [vmem:[%s289 + $0x91] sm:$0xff] %vm211, %v269
      %303 = vst.msk [vmem:[%s289 + $0x99] sm:$0xff] %vm211, %v270
      %304 = vst.msk [vmem:[%s289 + $0xa9] sm:$0xff] %vm211, %v271
      %305 = vst.msk [vmem:[%s289 + $0xb1] sm:$0xff] %vm211, %v272
      %306 = vst.msk [vmem:[%s289 + $0xc1] sm:$0xff] %vm211, %v273
      %307 = vst.msk [vmem:[%s289 + $0xc9] sm:$0xff] %vm211, %v274
      %308 = vst.msk [vmem:[%s289 + $0xd9] sm:$0xff] %vm211, %v275
      %309 = vst.msk [vmem:[%s289 + $0xe1] sm:$0xff] %vm211, %v276
      %310 = vst.msk [vmem:[%s289 + $0xf1] sm:$0xff] %vm211, %v277
      %311 = vst.msk [vmem:[%s289 + $0xf9] sm:$0xff] %vm211, %v278
      %312 = vst.msk [vmem:[%s289 + $0x109] sm:$0xff] %vm211, %v279
      %313 = vst.msk [vmem:[%s289 + $0x111] sm:$0xff] %vm211, %v280
      %314 = vst.msk [vmem:[%s289 + $0x121] sm:$0xff] %vm211, %v281
      %315 = vst.msk [vmem:[%s289 + $0x129] sm:$0xff] %vm211, %v282
      %316 = vst.msk [vmem:[%s289 + $0x139] sm:$0xff] %vm211, %v283
      %317 = vst.msk [vmem:[%s289 + $0x141] sm:$0xff] %vm211, %v284
      %318 = vst.msk [vmem:[%s289 + $0x151] sm:$0xff] %vm211, %v285
      %319 = vst.msk [vmem:[%s289 + $0x159] sm:$0xff] %vm211, %v286
      %320 = vst.msk [vmem:[%s289 + $0x169] sm:$0xff] %vm211, %v287
      %321 = vst.msk [vmem:[%s289 + $0x171] sm:$0xff] %vm211, %v288
      %v322 = vld [vmem:[%s1] sm:$0xff]
      %v323 = vld [vmem:[%s1 + $0x8] sm:$0x1]
      %v324 = vld [vmem:[%s2] sm:$0x1]
      %v325 = vld [vmem:[#allocation2] sm:$0xff]
      %v326 = vld [vmem:[#allocation2 + $0x8] sm:$0xff]
      %v327 = vld [vmem:[#allocation2 + $0x18] sm:$0xff]
      %v328 = vld [vmem:[#allocation2 + $0x20] sm:$0xff]
      %v329 = vld [vmem:[#allocation2 + $0x30] sm:$0xff]
      %v330 = vld [vmem:[#allocation2 + $0x38] sm:$0xff]
      %v331 = vld [vmem:[#allocation2 + $0x48] sm:$0xff]
      %v332 = vld [vmem:[#allocation2 + $0x50] sm:$0xff]
      %v333 = vperm.slane %v322, 0
      %v334 = vmul.f32 %v325, %v333
      %v335 = vmul.f32 %v326, %v333
      %v336 = vmul.f32 %v327, %v333
      %v337 = vmul.f32 %v328, %v333
      %v338 = vmul.f32 %v329, %v333
      %v339 = vmul.f32 %v330, %v333
      %v340 = vmul.f32 %v331, %v333
      %v341 = vmul.f32 %v332, %v333
      %v342 = vadd.f32 %v334, 0.0
      %v343 = vadd.f32 %v335, 0.0
      %v344 = vadd.f32 %v336, 0.0
      %v345 = vadd.f32 %v337, 0.0
      %v346 = vadd.f32 %v338, 0.0
      %v347 = vadd.f32 %v339, 0.0
      %v348 = vadd.f32 %v340, 0.0
      %v349 = vadd.f32 %v341, 0.0
      %v350 = vld [vmem:[#allocation2 + $0x1] sm:$0xff]
      %v351 = vld [vmem:[#allocation2 + $0x9] sm:$0xff]
      %v352 = vld [vmem:[#allocation2 + $0x19] sm:$0xff]
      %v353 = vld [vmem:[#allocation2 + $0x21] sm:$0xff]
      %v354 = vld [vmem:[#allocation2 + $0x31] sm:$0xff]
      %v355 = vld [vmem:[#allocation2 + $0x39] sm:$0xff]
      %v356 = vld [vmem:[#allocation2 + $0x49] sm:$0xff]
      %v357 = vld [vmem:[#allocation2 + $0x51] sm:$0xff]
      %v358 = vperm.slane %v322, 1
      %v359 = vmul.f32 %v350, %v358
      %v360 = vmul.f32 %v351, %v358
      %v361 = vmul.f32 %v352, %v358
      %v362 = vmul.f32 %v353, %v358
      %v363 = vmul.f32 %v354, %v358
      %v364 = vmul.f32 %v355, %v358
      %v365 = vmul.f32 %v356, %v358
      %v366 = vmul.f32 %v357, %v358
      %v367 = vadd.f32 %v342, %v359
      %v368 = vadd.f32 %v343, %v360
      %v369 = vadd.f32 %v344, %v361
      %v370 = vadd.f32 %v345, %v362
      %v371 = vadd.f32 %v346, %v363
      %v372 = vadd.f32 %v347, %v364
      %v373 = vadd.f32 %v348, %v365
      %v374 = vadd.f32 %v349, %v366
      %v375 = vld [vmem:[#allocation2 + $0x2] sm:$0xff]
      %v376 = vld [vmem:[#allocation2 + $0xa] sm:$0xff]
      %v377 = vld [vmem:[#allocation2 + $0x1a] sm:$0xff]
      %v378 = vld [vmem:[#allocation2 + $0x22] sm:$0xff]
      %v379 = vld [vmem:[#allocation2 + $0x32] sm:$0xff]
      %v380 = vld [vmem:[#allocation2 + $0x3a] sm:$0xff]
      %v381 = vld [vmem:[#allocation2 + $0x4a] sm:$0xff]
      %v382 = vld [vmem:[#allocation2 + $0x52] sm:$0xff]
      %v383 = vperm.slane %v322, 2
      %v384 = vmul.f32 %v375, %v383
      %v385 = vmul.f32 %v376, %v383
      %v386 = vmul.f32 %v377, %v383
      %v387 = vmul.f32 %v378, %v383
      %v388 = vmul.f32 %v379, %v383
      %v389 = vmul.f32 %v380, %v383
      %v390 = vmul.f32 %v381, %v383
      %v391 = vmul.f32 %v382, %v383
      %v392 = vadd.f32 %v367, %v384
      %v393 = vadd.f32 %v368, %v385
      %v394 = vadd.f32 %v369, %v386
      %v395 = vadd.f32 %v370, %v387
      %v396 = vadd.f32 %v371, %v388
      %v397 = vadd.f32 %v372, %v389
      %v398 = vadd.f32 %v373, %v390
      %v399 = vadd.f32 %v374, %v391
      %v400 = vld [vmem:[%s289] sm:$0xff]
      %v401 = vld [vmem:[%s289 + $0x8] sm:$0xff]
      %v402 = vld [vmem:[%s289 + $0x18] sm:$0xff]
      %v403 = vld [vmem:[%s289 + $0x20] sm:$0xff]
      %v404 = vld [vmem:[%s289 + $0x30] sm:$0xff]
      %v405 = vld [vmem:[%s289 + $0x38] sm:$0xff]
      %v406 = vld [vmem:[%s289 + $0x48] sm:$0xff]
      %v407 = vld [vmem:[%s289 + $0x50] sm:$0xff]
      %v408 = vperm.slane %v322, 3
      %v409 = vmul.f32 %v400, %v408
      %v410 = vmul.f32 %v401, %v408
      %v411 = vmul.f32 %v402, %v408
      %v412 = vmul.f32 %v403, %v408
      %v413 = vmul.f32 %v404, %v408
      %v414 = vmul.f32 %v405, %v408
      %v415 = vmul.f32 %v406, %v408
      %v416 = vmul.f32 %v407, %v408
      %v417 = vadd.f32 %v392, %v409
      %v418 = vadd.f32 %v393, %v410
      %v419 = vadd.f32 %v394, %v411
      %v420 = vadd.f32 %v395, %v412
      %v421 = vadd.f32 %v396, %v413
      %v422 = vadd.f32 %v397, %v414
      %v423 = vadd.f32 %v398, %v415
      %v424 = vadd.f32 %v399, %v416
      %v425 = vld [vmem:[%s289 + $0x1] sm:$0xff]
      %v426 = vld [vmem:[%s289 + $0x9] sm:$0xff]
      %v427 = vld [vmem:[%s289 + $0x19] sm:$0xff]
      %v428 = vld [vmem:[%s289 + $0x21] sm:$0xff]
      %v429 = vld [vmem:[%s289 + $0x31] sm:$0xff]
      %v430 = vld [vmem:[%s289 + $0x39] sm:$0xff]
      %v431 = vld [vmem:[%s289 + $0x49] sm:$0xff]
      %v432 = vld [vmem:[%s289 + $0x51] sm:$0xff]
      %v433 = vperm.slane %v322, 4
      %v434 = vmul.f32 %v425, %v433
      %v435 = vmul.f32 %v426, %v433
      %v436 = vmul.f32 %v427, %v433
      %v437 = vmul.f32 %v428, %v433
      %v438 = vmul.f32 %v429, %v433
      %v439 = vmul.f32 %v430, %v433
      %v440 = vmul.f32 %v431, %v433
      %v441 = vmul.f32 %v432, %v433
      %v442 = vadd.f32 %v417, %v434
      %v443 = vadd.f32 %v418, %v435
      %v444 = vadd.f32 %v419, %v436
      %v445 = vadd.f32 %v420, %v437
      %v446 = vadd.f32 %v421, %v438
      %v447 = vadd.f32 %v422, %v439
      %v448 = vadd.f32 %v423, %v440
      %v449 = vadd.f32 %v424, %v441
      %v450 = vld [vmem:[%s289 + $0x2] sm:$0xff]
      %v451 = vld [vmem:[%s289 + $0xa] sm:$0xff]
      %v452 = vld [vmem:[%s289 + $0x1a] sm:$0xff]
      %v453 = vld [vmem:[%s289 + $0x22] sm:$0xff]
      %v454 = vld [vmem:[%s289 + $0x32] sm:$0xff]
      %v455 = vld [vmem:[%s289 + $0x3a] sm:$0xff]
      %v456 = vld [vmem:[%s289 + $0x4a] sm:$0xff]
      %v457 = vld [vmem:[%s289 + $0x52] sm:$0xff]
      %v458 = vperm.slane %v322, 5
      %v459 = vmul.f32 %v450, %v458
      %v460 = vmul.f32 %v451, %v458
      %v461 = vmul.f32 %v452, %v458
      %v462 = vmul.f32 %v453, %v458
      %v463 = vmul.f32 %v454, %v458
      %v464 = vmul.f32 %v455, %v458
      %v465 = vmul.f32 %v456, %v458
      %v466 = vmul.f32 %v457, %v458
      %v467 = vadd.f32 %v442, %v459
      %v468 = vadd.f32 %v443, %v460
      %v469 = vadd.f32 %v444, %v461
      %v470 = vadd.f32 %v445, %v462
      %v471 = vadd.f32 %v446, %v463
      %v472 = vadd.f32 %v447, %v464
      %v473 = vadd.f32 %v448, %v465
      %v474 = vadd.f32 %v449, %v466
      %s475 = scalar_lea.vmem [#allocation2], 48
      %v476 = vld [vmem:[%s475] sm:$0xff]
      %v477 = vld [vmem:[%s475 + $0x8] sm:$0xff]
      %v478 = vld [vmem:[%s475 + $0x18] sm:$0xff]
      %v479 = vld [vmem:[%s475 + $0x20] sm:$0xff]
      %v480 = vld [vmem:[%s475 + $0x30] sm:$0xff]
      %v481 = vld [vmem:[%s475 + $0x38] sm:$0xff]
      %v482 = vld [vmem:[%s475 + $0x48] sm:$0xff]
      %v483 = vld [vmem:[%s475 + $0x50] sm:$0xff]
      %v484 = vperm.slane %v322, 6
      %v485 = vmul.f32 %v476, %v484
      %v486 = vmul.f32 %v477, %v484
      %v487 = vmul.f32 %v478, %v484
      %v488 = vmul.f32 %v479, %v484
      %v489 = vmul.f32 %v480, %v484
      %v490 = vmul.f32 %v481, %v484
      %v491 = vmul.f32 %v482, %v484
      %v492 = vmul.f32 %v483, %v484
      %v493 = vadd.f32 %v467, %v485
      %v494 = vadd.f32 %v468, %v486
      %v495 = vadd.f32 %v469, %v487
      %v496 = vadd.f32 %v470, %v488
      %v497 = vadd.f32 %v471, %v489
      %v498 = vadd.f32 %v472, %v490
      %v499 = vadd.f32 %v473, %v491
      %v500 = vadd.f32 %v474, %v492
      %v501 = vld [vmem:[%s475 + $0x1] sm:$0xff]
      %v502 = vld [vmem:[%s475 + $0x9] sm:$0xff]
      %v503 = vld [vmem:[%s475 + $0x19] sm:$0xff]
      %v504 = vld [vmem:[%s475 + $0x21] sm:$0xff]
      %v505 = vld [vmem:[%s475 + $0x31] sm:$0xff]
      %v506 = vld [vmem:[%s475 + $0x39] sm:$0xff]
      %v507 = vld [vmem:[%s475 + $0x49] sm:$0xff]
      %v508 = vld [vmem:[%s475 + $0x51] sm:$0xff]
      %v509 = vperm.slane %v322, 7
      %v510 = vmul.f32 %v501, %v509
      %v511 = vmul.f32 %v502, %v509
      %v512 = vmul.f32 %v503, %v509
      %v513 = vmul.f32 %v504, %v509
      %v514 = vmul.f32 %v505, %v509
      %v515 = vmul.f32 %v506, %v509
      %v516 = vmul.f32 %v507, %v509
      %v517 = vmul.f32 %v508, %v509
      %v518 = vadd.f32 %v493, %v510
      %v519 = vadd.f32 %v494, %v511
      %v520 = vadd.f32 %v495, %v512
      %v521 = vadd.f32 %v496, %v513
      %v522 = vadd.f32 %v497, %v514
      %v523 = vadd.f32 %v498, %v515
      %v524 = vadd.f32 %v499, %v516
      %v525 = vadd.f32 %v500, %v517
      %v526 = vld [vmem:[%s475 + $0x2] sm:$0xff]
      %v527 = vld [vmem:[%s475 + $0xa] sm:$0xff]
      %v528 = vld [vmem:[%s475 + $0x1a] sm:$0xff]
      %v529 = vld [vmem:[%s475 + $0x22] sm:$0xff]
      %v530 = vld [vmem:[%s475 + $0x32] sm:$0xff]
      %v531 = vld [vmem:[%s475 + $0x3a] sm:$0xff]
      %v532 = vld [vmem:[%s475 + $0x4a] sm:$0xff]
      %v533 = vld [vmem:[%s475 + $0x52] sm:$0xff]
      %v534 = vperm.slane %v323, 0
      %v535 = vmul.f32 %v526, %v534
      %v536 = vmul.f32 %v527, %v534
      %v537 = vmul.f32 %v528, %v534
      %v538 = vmul.f32 %v529, %v534
      %v539 = vmul.f32 %v530, %v534
      %v540 = vmul.f32 %v531, %v534
      %v541 = vmul.f32 %v532, %v534
      %v542 = vmul.f32 %v533, %v534
      %v543 = vadd.f32 %v518, %v535
      %v544 = vadd.f32 %v519, %v536
      %v545 = vadd.f32 %v520, %v537
      %v546 = vadd.f32 %v521, %v538
      %v547 = vadd.f32 %v522, %v539
      %v548 = vadd.f32 %v523, %v540
      %v549 = vadd.f32 %v524, %v541
      %v550 = vadd.f32 %v525, %v542
      %v552 = vperm.slane %v324, 0
      %v554 = vadd.f32 %v543, %v552
      %v555 = vadd.f32 %v544, %v552
      %v556 = vadd.f32 %v545, %v552
      %v557 = vadd.f32 %v546, %v552
      %v558 = vadd.f32 %v547, %v552
      %v559 = vadd.f32 %v548, %v552
      %v560 = vadd.f32 %v549, %v552
      %v561 = vadd.f32 %v550, %v552
      %v562 = vmax.f32 %v554, 0.0
      %v563 = vmax.f32 %v555, 0.0
      %v564 = vmax.f32 %v556, 0.0
      %v565 = vmax.f32 %v557, 0.0
      %v566 = vmax.f32 %v558, 0.0
      %v567 = vmax.f32 %v559, 0.0
      %v568 = vmax.f32 %v560, 0.0
      %v569 = vmax.f32 %v561, 0.0
      %v570 = vmin.f32 %v562, 6.0
      %v571 = vmin.f32 %v563, 6.0
      %v572 = vmin.f32 %v564, 6.0
      %v573 = vmin.f32 %v565, 6.0
      %v574 = vmin.f32 %v566, 6.0
      %v575 = vmin.f32 %v567, 6.0
      %v576 = vmin.f32 %v568, 6.0
      %v577 = vmin.f32 %v569, 6.0
      %578 = vst.msk [vmem:[%s205] sm:$0xff] %vm211, %v570
      %579 = vst.msk [vmem:[%s205 + $0x8] sm:$0xff] %vm211, %v571
      %580 = vst.msk [vmem:[%s205 + $0x10] sm:$0xff] %vm211, %v572
      %581 = vst.msk [vmem:[%s205 + $0x18] sm:$0xff] %vm211, %v573
      %582 = vst.msk [vmem:[%s205 + $0x20] sm:$0xff] %vm211, %v574
      %583 = vst.msk [vmem:[%s205 + $0x28] sm:$0xff] %vm211, %v575
      %584 = vst.msk [vmem:[%s205 + $0x30] sm:$0xff] %vm211, %v576
      %585 = vst.msk [vmem:[%s205 + $0x38] sm:$0xff] %vm211, %v577
      %vm586 = vcmask 257024
      %v587 = vsel %vm586, %v570, 0.0
      %v588 = vsel %vm586, %v572, 0.0
      %v589 = vadd.f32 %v587, %v588
      %v590 = vsel %vm586, %v574, 0.0
      %v591 = vadd.f32 %v589, %v590
      %v592 = vsel %vm586, %v576, 0.0
      %v593 = vadd.f32 %v591, %v592
      %v594 = vrot.slane %v593, 4
      %v595 = vadd.f32 %v593, %v594
      %v596 = vrot.slane %v595, 2
      %v597 = vadd.f32 %v595, %v596
      %v598 = vrot.slane %v597, 1
      %v599 = vadd.f32 %v597, %v598
      %v600 = vrcp.pop 16.0
      %v601 = vmul.f32 16.0, %v600
      %v602 = vsub.f32 1.0, %v601
      %v603 = vmul.f32 %v600, %v602
      %v604 = vadd.f32 %v600, %v603
      %vm605 = vweird.f32 %v600
      %v606 = vsel %vm605, %v600, %v604
      %v607 = vmul.f32 %v599, %v606
      %608 = vst.msk [vmem:[%s210 + $0x5] sm:$0x1] %vm220, %v607
      %v613 = vrot.slane %v570, 4
      %v614 = vrot.slane %v572, 4
      %v615 = vrot.slane %v574, 4
      %v616 = vrot.slane %v576, 4
      %v621 = vsel %vm586, %v613, 0.0
      %v622 = vsel %vm586, %v614, 0.0
      %v623 = vadd.f32 %v621, %v622
      %v624 = vsel %vm586, %v615, 0.0
      %v625 = vadd.f32 %v623, %v624
      %v626 = vsel %vm586, %v616, 0.0
      %v627 = vadd.f32 %v625, %v626
      %v628 = vrot.slane %v627, 4
      %v629 = vadd.f32 %v627, %v628
      %v630 = vrot.slane %v629, 2
      %v631 = vadd.f32 %v629, %v630
      %v632 = vrot.slane %v631, 1
      %v633 = vadd.f32 %v631, %v632
      %v634 = vmul.f32 %v633, %v606
      %635 = vst.msk [vmem:[%s210 + $0x6] sm:$0x1] %vm220, %v634
      %v636 = vsel %vm586, %v571, 0.0
      %v637 = vsel %vm586, %v573, 0.0
      %v638 = vadd.f32 %v636, %v637
      %v639 = vsel %vm586, %v575, 0.0
      %v640 = vadd.f32 %v638, %v639
      %v641 = vsel %vm586, %v577, 0.0
      %v642 = vadd.f32 %v640, %v641
      %v643 = vrot.slane %v642, 4
      %v644 = vadd.f32 %v642, %v643
      %v645 = vrot.slane %v644, 2
      %v646 = vadd.f32 %v644, %v645
      %v647 = vrot.slane %v646, 1
      %v648 = vadd.f32 %v646, %v647
      %v649 = vmul.f32 %v648, %v606
      %650 = vst.msk [vmem:[%s210 + $0x7] sm:$0x1] %vm220, %v649
      %v655 = vrot.slane %v571, 4
      %v656 = vrot.slane %v573, 4
      %v657 = vrot.slane %v575, 4
      %v658 = vrot.slane %v577, 4
      %v663 = vsel %vm586, %v655, 0.0
      %v664 = vsel %vm586, %v656, 0.0
      %v665 = vadd.f32 %v663, %v664
      %v666 = vsel %vm586, %v657, 0.0
      %v667 = vadd.f32 %v665, %v666
      %v668 = vsel %vm586, %v658, 0.0
      %v669 = vadd.f32 %v667, %v668
      %v670 = vrot.slane %v669, 4
      %v671 = vadd.f32 %v669, %v670
      %v672 = vrot.slane %v671, 2
      %v673 = vadd.f32 %v671, %v672
      %v674 = vrot.slane %v673, 1
      %v675 = vadd.f32 %v673, %v674
      %v676 = vmul.f32 %v675, %v606
      %677 = vst.msk [vmem:[%s210 + $0x8] sm:$0x1] %vm220, %v676
      %s678 = scalar_lea.vmem [#allocation2], 96
      %v679 = vld [vmem:[%s678] sm:$0xff]
      %v680 = vld [vmem:[%s678 + $0x8] sm:$0xff]
      %v681 = vld [vmem:[%s678 + $0x18] sm:$0xff]
      %v682 = vld [vmem:[%s678 + $0x20] sm:$0xff]
      %v683 = vld [vmem:[%s678 + $0x30] sm:$0xff]
      %v684 = vld [vmem:[%s678 + $0x38] sm:$0xff]
      %v685 = vld [vmem:[%s678 + $0x48] sm:$0xff]
      %v686 = vld [vmem:[%s678 + $0x50] sm:$0xff]
      %v687 = vmul.f32 %v679, %v333
      %v688 = vmul.f32 %v680, %v333
      %v689 = vmul.f32 %v681, %v333
      %v690 = vmul.f32 %v682, %v333
      %v691 = vmul.f32 %v683, %v333
      %v692 = vmul.f32 %v684, %v333
      %v693 = vmul.f32 %v685, %v333
      %v694 = vmul.f32 %v686, %v333
      %v695 = vadd.f32 %v687, 0.0
      %v696 = vadd.f32 %v688, 0.0
      %v697 = vadd.f32 %v689, 0.0
      %v698 = vadd.f32 %v690, 0.0
      %v699 = vadd.f32 %v691, 0.0
      %v700 = vadd.f32 %v692, 0.0
      %v701 = vadd.f32 %v693, 0.0
      %v702 = vadd.f32 %v694, 0.0
      %v703 = vld [vmem:[%s678 + $0x1] sm:$0xff]
      %v704 = vld [vmem:[%s678 + $0x9] sm:$0xff]
      %v705 = vld [vmem:[%s678 + $0x19] sm:$0xff]
      %v706 = vld [vmem:[%s678 + $0x21] sm:$0xff]
      %v707 = vld [vmem:[%s678 + $0x31] sm:$0xff]
      %v708 = vld [vmem:[%s678 + $0x39] sm:$0xff]
      %v709 = vld [vmem:[%s678 + $0x49] sm:$0xff]
      %v710 = vld [vmem:[%s678 + $0x51] sm:$0xff]
      %v711 = vmul.f32 %v703, %v358
      %v712 = vmul.f32 %v704, %v358
      %v713 = vmul.f32 %v705, %v358
      %v714 = vmul.f32 %v706, %v358
      %v715 = vmul.f32 %v707, %v358
      %v716 = vmul.f32 %v708, %v358
      %v717 = vmul.f32 %v709, %v358
      %v718 = vmul.f32 %v710, %v358
      %v719 = vadd.f32 %v695, %v711
      %v720 = vadd.f32 %v696, %v712
      %v721 = vadd.f32 %v697, %v713
      %v722 = vadd.f32 %v698, %v714
      %v723 = vadd.f32 %v699, %v715
      %v724 = vadd.f32 %v700, %v716
      %v725 = vadd.f32 %v701, %v717
      %v726 = vadd.f32 %v702, %v718
      %v727 = vld [vmem:[%s678 + $0x2] sm:$0xff]
      %v728 = vld [vmem:[%s678 + $0xa] sm:$0xff]
      %v729 = vld [vmem:[%s678 + $0x1a] sm:$0xff]
      %v730 = vld [vmem:[%s678 + $0x22] sm:$0xff]
      %v731 = vld [vmem:[%s678 + $0x32] sm:$0xff]
      %v732 = vld [vmem:[%s678 + $0x3a] sm:$0xff]
      %v733 = vld [vmem:[%s678 + $0x4a] sm:$0xff]
      %v734 = vld [vmem:[%s678 + $0x52] sm:$0xff]
      %v735 = vmul.f32 %v727, %v383
      %v736 = vmul.f32 %v728, %v383
      %v737 = vmul.f32 %v729, %v383
      %v738 = vmul.f32 %v730, %v383
      %v739 = vmul.f32 %v731, %v383
      %v740 = vmul.f32 %v732, %v383
      %v741 = vmul.f32 %v733, %v383
      %v742 = vmul.f32 %v734, %v383
      %v743 = vadd.f32 %v719, %v735
      %v744 = vadd.f32 %v720, %v736
      %v745 = vadd.f32 %v721, %v737
      %v746 = vadd.f32 %v722, %v738
      %v747 = vadd.f32 %v723, %v739
      %v748 = vadd.f32 %v724, %v740
      %v749 = vadd.f32 %v725, %v741
      %v750 = vadd.f32 %v726, %v742
      %s751 = scalar_lea.vmem [#allocation2], 120
      %v752 = vld [vmem:[%s751] sm:$0xff]
      %v753 = vld [vmem:[%s751 + $0x8] sm:$0xff]
      %v754 = vld [vmem:[%s751 + $0x18] sm:$0xff]
      %v755 = vld [vmem:[%s751 + $0x20] sm:$0xff]
      %v756 = vld [vmem:[%s751 + $0x30] sm:$0xff]
      %v757 = vld [vmem:[%s751 + $0x38] sm:$0xff]
      %v758 = vld [vmem:[%s751 + $0x48] sm:$0xff]
      %v759 = vld [vmem:[%s751 + $0x50] sm:$0xff]
      %v760 = vmul.f32 %v752, %v408
      %v761 = vmul.f32 %v753, %v408
      %v762 = vmul.f32 %v754, %v408
      %v763 = vmul.f32 %v755, %v408
      %v764 = vmul.f32 %v756, %v408
      %v765 = vmul.f32 %v757, %v408
      %v766 = vmul.f32 %v758, %v408
      %v767 = vmul.f32 %v759, %v408
      %v768 = vadd.f32 %v743, %v760
      %v769 = vadd.f32 %v744, %v761
      %v770 = vadd.f32 %v745, %v762
      %v771 = vadd.f32 %v746, %v763
      %v772 = vadd.f32 %v747, %v764
      %v773 = vadd.f32 %v748, %v765
      %v774 = vadd.f32 %v749, %v766
      %v775 = vadd.f32 %v750, %v767
      %v776 = vld [vmem:[%s751 + $0x1] sm:$0xff]
      %v777 = vld [vmem:[%s751 + $0x9] sm:$0xff]
      %v778 = vld [vmem:[%s751 + $0x19] sm:$0xff]
      %v779 = vld [vmem:[%s751 + $0x21] sm:$0xff]
      %v780 = vld [vmem:[%s751 + $0x31] sm:$0xff]
      %v781 = vld [vmem:[%s751 + $0x39] sm:$0xff]
      %v782 = vld [vmem:[%s751 + $0x49] sm:$0xff]
      %v783 = vld [vmem:[%s751 + $0x51] sm:$0xff]
      %v784 = vmul.f32 %v776, %v433
      %v785 = vmul.f32 %v777, %v433
      %v786 = vmul.f32 %v778, %v433
      %v787 = vmul.f32 %v779, %v433
      %v788 = vmul.f32 %v780, %v433
      %v789 = vmul.f32 %v781, %v433
      %v790 = vmul.f32 %v782, %v433
      %v791 = vmul.f32 %v783, %v433
      %v792 = vadd.f32 %v768, %v784
      %v793 = vadd.f32 %v769, %v785
      %v794 = vadd.f32 %v770, %v786
      %v795 = vadd.f32 %v771, %v787
      %v796 = vadd.f32 %v772, %v788
      %v797 = vadd.f32 %v773, %v789
      %v798 = vadd.f32 %v774, %v790
      %v799 = vadd.f32 %v775, %v791
      %v800 = vld [vmem:[%s751 + $0x2] sm:$0xff]
      %v801 = vld [vmem:[%s751 + $0xa] sm:$0xff]
      %v802 = vld [vmem:[%s751 + $0x1a] sm:$0xff]
      %v803 = vld [vmem:[%s751 + $0x22] sm:$0xff]
      %v804 = vld [vmem:[%s751 + $0x32] sm:$0xff]
      %v805 = vld [vmem:[%s751 + $0x3a] sm:$0xff]
      %v806 = vld [vmem:[%s751 + $0x4a] sm:$0xff]
      %v807 = vld [vmem:[%s751 + $0x52] sm:$0xff]
      %v808 = vmul.f32 %v800, %v458
      %v809 = vmul.f32 %v801, %v458
      %v810 = vmul.f32 %v802, %v458
      %v811 = vmul.f32 %v803, %v458
      %v812 = vmul.f32 %v804, %v458
      %v813 = vmul.f32 %v805, %v458
      %v814 = vmul.f32 %v806, %v458
      %v815 = vmul.f32 %v807, %v458
      %v816 = vadd.f32 %v792, %v808
      %v817 = vadd.f32 %v793, %v809
      %v818 = vadd.f32 %v794, %v810
      %v819 = vadd.f32 %v795, %v811
      %v820 = vadd.f32 %v796, %v812
      %v821 = vadd.f32 %v797, %v813
      %v822 = vadd.f32 %v798, %v814
      %v823 = vadd.f32 %v799, %v815
      %s824 = scalar_lea.vmem [#allocation2], 144
      %v825 = vld [vmem:[%s824] sm:$0xff]
      %v826 = vld [vmem:[%s824 + $0x8] sm:$0xff]
      %v827 = vld [vmem:[%s824 + $0x18] sm:$0xff]
      %v828 = vld [vmem:[%s824 + $0x20] sm:$0xff]
      %v829 = vld [vmem:[%s824 + $0x30] sm:$0xff]
      %v830 = vld [vmem:[%s824 + $0x38] sm:$0xff]
      %v831 = vld [vmem:[%s824 + $0x48] sm:$0xff]
      %v832 = vld [vmem:[%s824 + $0x50] sm:$0xff]
      %v833 = vmul.f32 %v825, %v484
      %v834 = vmul.f32 %v826, %v484
      %v835 = vmul.f32 %v827, %v484
      %v836 = vmul.f32 %v828, %v484
      %v837 = vmul.f32 %v829, %v484
      %v838 = vmul.f32 %v830, %v484
      %v839 = vmul.f32 %v831, %v484
      %v840 = vmul.f32 %v832, %v484
      %v841 = vadd.f32 %v816, %v833
      %v842 = vadd.f32 %v817, %v834
      %v843 = vadd.f32 %v818, %v835
      %v844 = vadd.f32 %v819, %v836
      %v845 = vadd.f32 %v820, %v837
      %v846 = vadd.f32 %v821, %v838
      %v847 = vadd.f32 %v822, %v839
      %v848 = vadd.f32 %v823, %v840
      %v849 = vld [vmem:[%s824 + $0x1] sm:$0xff]
      %v850 = vld [vmem:[%s824 + $0x9] sm:$0xff]
      %v851 = vld [vmem:[%s824 + $0x19] sm:$0xff]
      %v852 = vld [vmem:[%s824 + $0x21] sm:$0xff]
      %v853 = vld [vmem:[%s824 + $0x31] sm:$0xff]
      %v854 = vld [vmem:[%s824 + $0x39] sm:$0xff]
      %v855 = vld [vmem:[%s824 + $0x49] sm:$0xff]
      %v856 = vld [vmem:[%s824 + $0x51] sm:$0xff]
      %v857 = vmul.f32 %v849, %v509
      %v858 = vmul.f32 %v850, %v509
      %v859 = vmul.f32 %v851, %v509
      %v860 = vmul.f32 %v852, %v509
      %v861 = vmul.f32 %v853, %v509
      %v862 = vmul.f32 %v854, %v509
      %v863 = vmul.f32 %v855, %v509
      %v864 = vmul.f32 %v856, %v509
      %v865 = vadd.f32 %v841, %v857
      %v866 = vadd.f32 %v842, %v858
      %v867 = vadd.f32 %v843, %v859
      %v868 = vadd.f32 %v844, %v860
      %v869 = vadd.f32 %v845, %v861
      %v870 = vadd.f32 %v846, %v862
      %v871 = vadd.f32 %v847, %v863
      %v872 = vadd.f32 %v848, %v864
      %v873 = vld [vmem:[%s824 + $0x2] sm:$0xff]
      %v874 = vld [vmem:[%s824 + $0xa] sm:$0xff]
      %v875 = vld [vmem:[%s824 + $0x1a] sm:$0xff]
      %v876 = vld [vmem:[%s824 + $0x22] sm:$0xff]
      %v877 = vld [vmem:[%s824 + $0x32] sm:$0xff]
      %v878 = vld [vmem:[%s824 + $0x3a] sm:$0xff]
      %v879 = vld [vmem:[%s824 + $0x4a] sm:$0xff]
      %v880 = vld [vmem:[%s824 + $0x52] sm:$0xff]
      %v881 = vmul.f32 %v873, %v534
      %v882 = vmul.f32 %v874, %v534
      %v883 = vmul.f32 %v875, %v534
      %v884 = vmul.f32 %v876, %v534
      %v885 = vmul.f32 %v877, %v534
      %v886 = vmul.f32 %v878, %v534
      %v887 = vmul.f32 %v879, %v534
      %v888 = vmul.f32 %v880, %v534
      %v889 = vadd.f32 %v865, %v881
      %v890 = vadd.f32 %v866, %v882
      %v891 = vadd.f32 %v867, %v883
      %v892 = vadd.f32 %v868, %v884
      %v893 = vadd.f32 %v869, %v885
      %v894 = vadd.f32 %v870, %v886
      %v895 = vadd.f32 %v871, %v887
      %v896 = vadd.f32 %v872, %v888
      %v897 = vadd.f32 %v889, %v552
      %v898 = vadd.f32 %v890, %v552
      %v899 = vadd.f32 %v891, %v552
      %v900 = vadd.f32 %v892, %v552
      %v901 = vadd.f32 %v893, %v552
      %v902 = vadd.f32 %v894, %v552
      %v903 = vadd.f32 %v895, %v552
      %v904 = vadd.f32 %v896, %v552
      %v905 = vmax.f32 %v897, 0.0
      %v906 = vmax.f32 %v898, 0.0
      %v907 = vmax.f32 %v899, 0.0
      %v908 = vmax.f32 %v900, 0.0
      %v909 = vmax.f32 %v901, 0.0
      %v910 = vmax.f32 %v902, 0.0
      %v911 = vmax.f32 %v903, 0.0
      %v912 = vmax.f32 %v904, 0.0
      %v913 = vmin.f32 %v905, 6.0
      %v914 = vmin.f32 %v906, 6.0
      %v915 = vmin.f32 %v907, 6.0
      %v916 = vmin.f32 %v908, 6.0
      %v917 = vmin.f32 %v909, 6.0
      %v918 = vmin.f32 %v910, 6.0
      %v919 = vmin.f32 %v911, 6.0
      %v920 = vmin.f32 %v912, 6.0
      %s921 = scalar_lea.vmem %s205, 64
      %922 = vst.msk [vmem:[%s921] sm:$0xff] %vm211, %v913
      %923 = vst.msk [vmem:[%s921 + $0x8] sm:$0xff] %vm211, %v914
      %924 = vst.msk [vmem:[%s921 + $0x10] sm:$0xff] %vm211, %v915
      %925 = vst.msk [vmem:[%s921 + $0x18] sm:$0xff] %vm211, %v916
      %926 = vst.msk [vmem:[%s921 + $0x20] sm:$0xff] %vm211, %v917
      %927 = vst.msk [vmem:[%s921 + $0x28] sm:$0xff] %vm211, %v918
      %928 = vst.msk [vmem:[%s921 + $0x30] sm:$0xff] %vm211, %v919
      %929 = vst.msk [vmem:[%s921 + $0x38] sm:$0xff] %vm211, %v920
      %v930 = vsel %vm586, %v913, 0.0
      %v931 = vsel %vm586, %v915, 0.0
      %v932 = vadd.f32 %v930, %v931
      %v933 = vsel %vm586, %v917, 0.0
      %v934 = vadd.f32 %v932, %v933
      %v935 = vsel %vm586, %v919, 0.0
      %v936 = vadd.f32 %v934, %v935
      %v937 = vrot.slane %v936, 4
      %v938 = vadd.f32 %v936, %v937
      %v939 = vrot.slane %v938, 2
      %v940 = vadd.f32 %v938, %v939
      %v941 = vrot.slane %v940, 1
      %v942 = vadd.f32 %v940, %v941
      %v943 = vmul.f32 %v942, %v606
      %944 = vst.msk [vmem:[%s210 + $0x9] sm:$0x1] %vm220, %v943
      %v949 = vrot.slane %v913, 4
      %v950 = vrot.slane %v915, 4
      %v951 = vrot.slane %v917, 4
      %v952 = vrot.slane %v919, 4
      %v957 = vsel %vm586, %v949, 0.0
      %v958 = vsel %vm586, %v950, 0.0
      %v959 = vadd.f32 %v957, %v958
      %v960 = vsel %vm586, %v951, 0.0
      %v961 = vadd.f32 %v959, %v960
      %v962 = vsel %vm586, %v952, 0.0
      %v963 = vadd.f32 %v961, %v962
      %v964 = vrot.slane %v963, 4
      %v965 = vadd.f32 %v963, %v964
      %v966 = vrot.slane %v965, 2
      %v967 = vadd.f32 %v965, %v966
      %v968 = vrot.slane %v967, 1
      %v969 = vadd.f32 %v967, %v968
      %v970 = vmul.f32 %v969, %v606
      %971 = vst.msk [vmem:[%s210 + $0xa] sm:$0x1] %vm220, %v970
      %v972 = vsel %vm586, %v914, 0.0
      %v973 = vsel %vm586, %v916, 0.0
      %v974 = vadd.f32 %v972, %v973
      %v975 = vsel %vm586, %v918, 0.0
      %v976 = vadd.f32 %v974, %v975
      %v977 = vsel %vm586, %v920, 0.0
      %v978 = vadd.f32 %v976, %v977
      %v979 = vrot.slane %v978, 4
      %v980 = vadd.f32 %v978, %v979
      %v981 = vrot.slane %v980, 2
      %v982 = vadd.f32 %v980, %v981
      %v983 = vrot.slane %v982, 1
      %v984 = vadd.f32 %v982, %v983
      %v985 = vmul.f32 %v984, %v606
      %986 = vst.msk [vmem:[%s210 + $0xb] sm:$0x1] %vm220, %v985
      %v991 = vrot.slane %v914, 4
      %v992 = vrot.slane %v916, 4
      %v993 = vrot.slane %v918, 4
      %v994 = vrot.slane %v920, 4
      %v999 = vsel %vm586, %v991, 0.0
      %v1000 = vsel %vm586, %v992, 0.0
      %v1001 = vadd.f32 %v999, %v1000
      %v1002 = vsel %vm586, %v993, 0.0
      %v1003 = vadd.f32 %v1001, %v1002
      %v1004 = vsel %vm586, %v994, 0.0
      %v1005 = vadd.f32 %v1003, %v1004
      %v1006 = vrot.slane %v1005, 4
      %v1007 = vadd.f32 %v1005, %v1006
      %v1008 = vrot.slane %v1007, 2
      %v1009 = vadd.f32 %v1007, %v1008
      %v1010 = vrot.slane %v1009, 1
      %v1011 = vadd.f32 %v1009, %v1010
      %v1012 = vmul.f32 %v1011, %v606
      %1013 = vst.msk [vmem:[%s210 + $0xc] sm:$0x1] %vm220, %v1012
      %s1014 = scalar_lea.vmem [#allocation2], 192
      %v1015 = vld [vmem:[%s1014] sm:$0xff]
      %v1016 = vld [vmem:[%s1014 + $0x8] sm:$0xff]
      %v1017 = vld [vmem:[%s1014 + $0x18] sm:$0xff]
      %v1018 = vld [vmem:[%s1014 + $0x20] sm:$0xff]
      %v1019 = vld [vmem:[%s1014 + $0x30] sm:$0xff]
      %v1020 = vld [vmem:[%s1014 + $0x38] sm:$0xff]
      %v1021 = vld [vmem:[%s1014 + $0x48] sm:$0xff]
      %v1022 = vld [vmem:[%s1014 + $0x50] sm:$0xff]
      %v1023 = vmul.f32 %v1015, %v333
      %v1024 = vmul.f32 %v1016, %v333
      %v1025 = vmul.f32 %v1017, %v333
      %v1026 = vmul.f32 %v1018, %v333
      %v1027 = vmul.f32 %v1019, %v333
      %v1028 = vmul.f32 %v1020, %v333
      %v1029 = vmul.f32 %v1021, %v333
      %v1030 = vmul.f32 %v1022, %v333
      %v1031 = vadd.f32 %v1023, 0.0
      %v1032 = vadd.f32 %v1024, 0.0
      %v1033 = vadd.f32 %v1025, 0.0
      %v1034 = vadd.f32 %v1026, 0.0
      %v1035 = vadd.f32 %v1027, 0.0
      %v1036 = vadd.f32 %v1028, 0.0
      %v1037 = vadd.f32 %v1029, 0.0
      %v1038 = vadd.f32 %v1030, 0.0
      %v1039 = vld [vmem:[%s1014 + $0x1] sm:$0xff]
      %v1040 = vld [vmem:[%s1014 + $0x9] sm:$0xff]
      %v1041 = vld [vmem:[%s1014 + $0x19] sm:$0xff]
      %v1042 = vld [vmem:[%s1014 + $0x21] sm:$0xff]
      %v1043 = vld [vmem:[%s1014 + $0x31] sm:$0xff]
      %v1044 = vld [vmem:[%s1014 + $0x39] sm:$0xff]
      %v1045 = vld [vmem:[%s1014 + $0x49] sm:$0xff]
      %v1046 = vld [vmem:[%s1014 + $0x51] sm:$0xff]
      %v1047 = vmul.f32 %v1039, %v358
      %v1048 = vmul.f32 %v1040, %v358
      %v1049 = vmul.f32 %v1041, %v358
      %v1050 = vmul.f32 %v1042, %v358
      %v1051 = vmul.f32 %v1043, %v358
      %v1052 = vmul.f32 %v1044, %v358
      %v1053 = vmul.f32 %v1045, %v358
      %v1054 = vmul.f32 %v1046, %v358
      %v1055 = vadd.f32 %v1031, %v1047
      %v1056 = vadd.f32 %v1032, %v1048
      %v1057 = vadd.f32 %v1033, %v1049
      %v1058 = vadd.f32 %v1034, %v1050
      %v1059 = vadd.f32 %v1035, %v1051
      %v1060 = vadd.f32 %v1036, %v1052
      %v1061 = vadd.f32 %v1037, %v1053
      %v1062 = vadd.f32 %v1038, %v1054
      %v1063 = vld [vmem:[%s1014 + $0x2] sm:$0xff]
      %v1064 = vld [vmem:[%s1014 + $0xa] sm:$0xff]
      %v1065 = vld [vmem:[%s1014 + $0x1a] sm:$0xff]
      %v1066 = vld [vmem:[%s1014 + $0x22] sm:$0xff]
      %v1067 = vld [vmem:[%s1014 + $0x32] sm:$0xff]
      %v1068 = vld [vmem:[%s1014 + $0x3a] sm:$0xff]
      %v1069 = vld [vmem:[%s1014 + $0x4a] sm:$0xff]
      %v1070 = vld [vmem:[%s1014 + $0x52] sm:$0xff]
      %v1071 = vmul.f32 %v1063, %v383
      %v1072 = vmul.f32 %v1064, %v383
      %v1073 = vmul.f32 %v1065, %v383
      %v1074 = vmul.f32 %v1066, %v383
      %v1075 = vmul.f32 %v1067, %v383
      %v1076 = vmul.f32 %v1068, %v383
      %v1077 = vmul.f32 %v1069, %v383
      %v1078 = vmul.f32 %v1070, %v383
      %v1079 = vadd.f32 %v1055, %v1071
      %v1080 = vadd.f32 %v1056, %v1072
      %v1081 = vadd.f32 %v1057, %v1073
      %v1082 = vadd.f32 %v1058, %v1074
      %v1083 = vadd.f32 %v1059, %v1075
      %v1084 = vadd.f32 %v1060, %v1076
      %v1085 = vadd.f32 %v1061, %v1077
      %v1086 = vadd.f32 %v1062, %v1078
      %s1087 = scalar_lea.vmem [#allocation2], 216
      %v1088 = vld [vmem:[%s1087] sm:$0xff]
      %v1089 = vld [vmem:[%s1087 + $0x8] sm:$0xff]
      %v1090 = vld [vmem:[%s1087 + $0x18] sm:$0xff]
      %v1091 = vld [vmem:[%s1087 + $0x20] sm:$0xff]
      %v1092 = vld [vmem:[%s1087 + $0x30] sm:$0xff]
      %v1093 = vld [vmem:[%s1087 + $0x38] sm:$0xff]
      %v1094 = vld [vmem:[%s1087 + $0x48] sm:$0xff]
      %v1095 = vld [vmem:[%s1087 + $0x50] sm:$0xff]
      %v1096 = vmul.f32 %v1088, %v408
      %v1097 = vmul.f32 %v1089, %v408
      %v1098 = vmul.f32 %v1090, %v408
      %v1099 = vmul.f32 %v1091, %v408
      %v1100 = vmul.f32 %v1092, %v408
      %v1101 = vmul.f32 %v1093, %v408
      %v1102 = vmul.f32 %v1094, %v408
      %v1103 = vmul.f32 %v1095, %v408
      %v1104 = vadd.f32 %v1079, %v1096
      %v1105 = vadd.f32 %v1080, %v1097
      %v1106 = vadd.f32 %v1081, %v1098
      %v1107 = vadd.f32 %v1082, %v1099
      %v1108 = vadd.f32 %v1083, %v1100
      %v1109 = vadd.f32 %v1084, %v1101
      %v1110 = vadd.f32 %v1085, %v1102
      %v1111 = vadd.f32 %v1086, %v1103
      %v1112 = vld [vmem:[%s1087 + $0x1] sm:$0xff]
      %v1113 = vld [vmem:[%s1087 + $0x9] sm:$0xff]
      %v1114 = vld [vmem:[%s1087 + $0x19] sm:$0xff]
      %v1115 = vld [vmem:[%s1087 + $0x21] sm:$0xff]
      %v1116 = vld [vmem:[%s1087 + $0x31] sm:$0xff]
      %v1117 = vld [vmem:[%s1087 + $0x39] sm:$0xff]
      %v1118 = vld [vmem:[%s1087 + $0x49] sm:$0xff]
      %v1119 = vld [vmem:[%s1087 + $0x51] sm:$0xff]
      %v1120 = vmul.f32 %v1112, %v433
      %v1121 = vmul.f32 %v1113, %v433
      %v1122 = vmul.f32 %v1114, %v433
      %v1123 = vmul.f32 %v1115, %v433
      %v1124 = vmul.f32 %v1116, %v433
      %v1125 = vmul.f32 %v1117, %v433
      %v1126 = vmul.f32 %v1118, %v433
      %v1127 = vmul.f32 %v1119, %v433
      %v1128 = vadd.f32 %v1104, %v1120
      %v1129 = vadd.f32 %v1105, %v1121
      %v1130 = vadd.f32 %v1106, %v1122
      %v1131 = vadd.f32 %v1107, %v1123
      %v1132 = vadd.f32 %v1108, %v1124
      %v1133 = vadd.f32 %v1109, %v1125
      %v1134 = vadd.f32 %v1110, %v1126
      %v1135 = vadd.f32 %v1111, %v1127
      %v1136 = vld [vmem:[%s1087 + $0x2] sm:$0xff]
      %v1137 = vld [vmem:[%s1087 + $0xa] sm:$0xff]
      %v1138 = vld [vmem:[%s1087 + $0x1a] sm:$0xff]
      %v1139 = vld [vmem:[%s1087 + $0x22] sm:$0xff]
      %v1140 = vld [vmem:[%s1087 + $0x32] sm:$0xff]
      %v1141 = vld [vmem:[%s1087 + $0x3a] sm:$0xff]
      %v1142 = vld [vmem:[%s1087 + $0x4a] sm:$0xff]
      %v1143 = vld [vmem:[%s1087 + $0x52] sm:$0xff]
      %v1144 = vmul.f32 %v1136, %v458
      %v1145 = vmul.f32 %v1137, %v458
      %v1146 = vmul.f32 %v1138, %v458
      %v1147 = vmul.f32 %v1139, %v458
      %v1148 = vmul.f32 %v1140, %v458
      %v1149 = vmul.f32 %v1141, %v458
      %v1150 = vmul.f32 %v1142, %v458
      %v1151 = vmul.f32 %v1143, %v458
      %v1152 = vadd.f32 %v1128, %v1144
      %v1153 = vadd.f32 %v1129, %v1145
      %v1154 = vadd.f32 %v1130, %v1146
      %v1155 = vadd.f32 %v1131, %v1147
      %v1156 = vadd.f32 %v1132, %v1148
      %v1157 = vadd.f32 %v1133, %v1149
      %v1158 = vadd.f32 %v1134, %v1150
      %v1159 = vadd.f32 %v1135, %v1151
      %s1160 = scalar_lea.vmem [#allocation2], 240
      %v1161 = vld [vmem:[%s1160] sm:$0xff]
      %v1162 = vld [vmem:[%s1160 + $0x8] sm:$0xff]
      %v1163 = vld [vmem:[%s1160 + $0x18] sm:$0xff]
      %v1164 = vld [vmem:[%s1160 + $0x20] sm:$0xff]
      %v1165 = vld [vmem:[%s1160 + $0x30] sm:$0xff]
      %v1166 = vld [vmem:[%s1160 + $0x38] sm:$0xff]
      %v1167 = vld [vmem:[%s1160 + $0x48] sm:$0xff]
      %v1168 = vld [vmem:[%s1160 + $0x50] sm:$0xff]
      %v1169 = vmul.f32 %v1161, %v484
      %v1170 = vmul.f32 %v1162, %v484
      %v1171 = vmul.f32 %v1163, %v484
      %v1172 = vmul.f32 %v1164, %v484
      %v1173 = vmul.f32 %v1165, %v484
      %v1174 = vmul.f32 %v1166, %v484
      %v1175 = vmul.f32 %v1167, %v484
      %v1176 = vmul.f32 %v1168, %v484
      %v1177 = vadd.f32 %v1152, %v1169
      %v1178 = vadd.f32 %v1153, %v1170
      %v1179 = vadd.f32 %v1154, %v1171
      %v1180 = vadd.f32 %v1155, %v1172
      %v1181 = vadd.f32 %v1156, %v1173
      %v1182 = vadd.f32 %v1157, %v1174
      %v1183 = vadd.f32 %v1158, %v1175
      %v1184 = vadd.f32 %v1159, %v1176
      %v1185 = vld [vmem:[%s1160 + $0x1] sm:$0xff]
      %v1186 = vld [vmem:[%s1160 + $0x9] sm:$0xff]
      %v1187 = vld [vmem:[%s1160 + $0x19] sm:$0xff]
      %v1188 = vld [vmem:[%s1160 + $0x21] sm:$0xff]
      %v1189 = vld [vmem:[%s1160 + $0x31] sm:$0xff]
      %v1190 = vld [vmem:[%s1160 + $0x39] sm:$0xff]
      %v1191 = vld [vmem:[%s1160 + $0x49] sm:$0xff]
      %v1192 = vld [vmem:[%s1160 + $0x51] sm:$0xff]
      %v1193 = vmul.f32 %v1185, %v509
      %v1194 = vmul.f32 %v1186, %v509
      %v1195 = vmul.f32 %v1187, %v509
      %v1196 = vmul.f32 %v1188, %v509
      %v1197 = vmul.f32 %v1189, %v509
      %v1198 = vmul.f32 %v1190, %v509
      %v1199 = vmul.f32 %v1191, %v509
      %v1200 = vmul.f32 %v1192, %v509
      %v1201 = vadd.f32 %v1177, %v1193
      %v1202 = vadd.f32 %v1178, %v1194
      %v1203 = vadd.f32 %v1179, %v1195
      %v1204 = vadd.f32 %v1180, %v1196
      %v1205 = vadd.f32 %v1181, %v1197
      %v1206 = vadd.f32 %v1182, %v1198
      %v1207 = vadd.f32 %v1183, %v1199
      %v1208 = vadd.f32 %v1184, %v1200
      %v1209 = vld [vmem:[%s1160 + $0x2] sm:$0xff]
      %v1210 = vld [vmem:[%s1160 + $0xa] sm:$0xff]
      %v1211 = vld [vmem:[%s1160 + $0x1a] sm:$0xff]
      %v1212 = vld [vmem:[%s1160 + $0x22] sm:$0xff]
      %v1213 = vld [vmem:[%s1160 + $0x32] sm:$0xff]
      %v1214 = vld [vmem:[%s1160 + $0x3a] sm:$0xff]
      %v1215 = vld [vmem:[%s1160 + $0x4a] sm:$0xff]
      %v1216 = vld [vmem:[%s1160 + $0x52] sm:$0xff]
      %v1217 = vmul.f32 %v1209, %v534
      %v1218 = vmul.f32 %v1210, %v534
      %v1219 = vmul.f32 %v1211, %v534
      %v1220 = vmul.f32 %v1212, %v534
      %v1221 = vmul.f32 %v1213, %v534
      %v1222 = vmul.f32 %v1214, %v534
      %v1223 = vmul.f32 %v1215, %v534
      %v1224 = vmul.f32 %v1216, %v534
      %v1225 = vadd.f32 %v1201, %v1217
      %v1226 = vadd.f32 %v1202, %v1218
      %v1227 = vadd.f32 %v1203, %v1219
      %v1228 = vadd.f32 %v1204, %v1220
      %v1229 = vadd.f32 %v1205, %v1221
      %v1230 = vadd.f32 %v1206, %v1222
      %v1231 = vadd.f32 %v1207, %v1223
      %v1232 = vadd.f32 %v1208, %v1224
      %v1233 = vadd.f32 %v1225, %v552
      %v1234 = vadd.f32 %v1226, %v552
      %v1235 = vadd.f32 %v1227, %v552
      %v1236 = vadd.f32 %v1228, %v552
      %v1237 = vadd.f32 %v1229, %v552
      %v1238 = vadd.f32 %v1230, %v552
      %v1239 = vadd.f32 %v1231, %v552
      %v1240 = vadd.f32 %v1232, %v552
      %v1241 = vmax.f32 %v1233, 0.0
      %v1242 = vmax.f32 %v1234, 0.0
      %v1243 = vmax.f32 %v1235, 0.0
      %v1244 = vmax.f32 %v1236, 0.0
      %v1245 = vmax.f32 %v1237, 0.0
      %v1246 = vmax.f32 %v1238, 0.0
      %v1247 = vmax.f32 %v1239, 0.0
      %v1248 = vmax.f32 %v1240, 0.0
      %v1249 = vmin.f32 %v1241, 6.0
      %v1250 = vmin.f32 %v1242, 6.0
      %v1251 = vmin.f32 %v1243, 6.0
      %v1252 = vmin.f32 %v1244, 6.0
      %v1253 = vmin.f32 %v1245, 6.0
      %v1254 = vmin.f32 %v1246, 6.0
      %v1255 = vmin.f32 %v1247, 6.0
      %v1256 = vmin.f32 %v1248, 6.0
      %s1257 = scalar_lea.vmem %s205, 128
      %1258 = vst.msk [vmem:[%s1257] sm:$0xff] %vm211, %v1249
      %1259 = vst.msk [vmem:[%s1257 + $0x8] sm:$0xff] %vm211, %v1250
      %1260 = vst.msk [vmem:[%s1257 + $0x10] sm:$0xff] %vm211, %v1251
      %1261 = vst.msk [vmem:[%s1257 + $0x18] sm:$0xff] %vm211, %v1252
      %1262 = vst.msk [vmem:[%s1257 + $0x20] sm:$0xff] %vm211, %v1253
      %1263 = vst.msk [vmem:[%s1257 + $0x28] sm:$0xff] %vm211, %v1254
      %1264 = vst.msk [vmem:[%s1257 + $0x30] sm:$0xff] %vm211, %v1255
      %1265 = vst.msk [vmem:[%s1257 + $0x38] sm:$0xff] %vm211, %v1256
      %v1266 = vsel %vm586, %v1249, 0.0
      %v1267 = vsel %vm586, %v1251, 0.0
      %v1268 = vadd.f32 %v1266, %v1267
      %v1269 = vsel %vm586, %v1253, 0.0
      %v1270 = vadd.f32 %v1268, %v1269
      %v1271 = vsel %vm586, %v1255, 0.0
      %v1272 = vadd.f32 %v1270, %v1271
      %v1273 = vrot.slane %v1272, 4
      %v1274 = vadd.f32 %v1272, %v1273
      %v1275 = vrot.slane %v1274, 2
      %v1276 = vadd.f32 %v1274, %v1275
      %v1277 = vrot.slane %v1276, 1
      %v1278 = vadd.f32 %v1276, %v1277
      %v1279 = vmul.f32 %v1278, %v606
      %1280 = vst.msk [vmem:[%s210 + $0xd] sm:$0x1] %vm220, %v1279
      %v1285 = vrot.slane %v1249, 4
      %v1286 = vrot.slane %v1251, 4
      %v1287 = vrot.slane %v1253, 4
      %v1288 = vrot.slane %v1255, 4
      %v1293 = vsel %vm586, %v1285, 0.0
      %v1294 = vsel %vm586, %v1286, 0.0
      %v1295 = vadd.f32 %v1293, %v1294
      %v1296 = vsel %vm586, %v1287, 0.0
      %v1297 = vadd.f32 %v1295, %v1296
      %v1298 = vsel %vm586, %v1288, 0.0
      %v1299 = vadd.f32 %v1297, %v1298
      %v1300 = vrot.slane %v1299, 4
      %v1301 = vadd.f32 %v1299, %v1300
      %v1302 = vrot.slane %v1301, 2
      %v1303 = vadd.f32 %v1301, %v1302
      %v1304 = vrot.slane %v1303, 1
      %v1305 = vadd.f32 %v1303, %v1304
      %v1306 = vmul.f32 %v1305, %v606
      %1307 = vst.msk [vmem:[%s210 + $0xe] sm:$0x1] %vm220, %v1306
      %v1308 = vsel %vm586, %v1250, 0.0
      %v1309 = vsel %vm586, %v1252, 0.0
      %v1310 = vadd.f32 %v1308, %v1309
      %v1311 = vsel %vm586, %v1254, 0.0
      %v1312 = vadd.f32 %v1310, %v1311
      %v1313 = vsel %vm586, %v1256, 0.0
      %v1314 = vadd.f32 %v1312, %v1313
      %v1315 = vrot.slane %v1314, 4
      %v1316 = vadd.f32 %v1314, %v1315
      %v1317 = vrot.slane %v1316, 2
      %v1318 = vadd.f32 %v1316, %v1317
      %v1319 = vrot.slane %v1318, 1
      %v1320 = vadd.f32 %v1318, %v1319
      %v1321 = vmul.f32 %v1320, %v606
      %1322 = vst.msk [vmem:[%s210 + $0xf] sm:$0x1] %vm220, %v1321
      %v1327 = vrot.slane %v1250, 4
      %v1328 = vrot.slane %v1252, 4
      %v1329 = vrot.slane %v1254, 4
      %v1330 = vrot.slane %v1256, 4
      %v1335 = vsel %vm586, %v1327, 0.0
      %v1336 = vsel %vm586, %v1328, 0.0
      %v1337 = vadd.f32 %v1335, %v1336
      %v1338 = vsel %vm586, %v1329, 0.0
      %v1339 = vadd.f32 %v1337, %v1338
      %v1340 = vsel %vm586, %v1330, 0.0
      %v1341 = vadd.f32 %v1339, %v1340
      %v1342 = vrot.slane %v1341, 4
      %v1343 = vadd.f32 %v1341, %v1342
      %v1344 = vrot.slane %v1343, 2
      %v1345 = vadd.f32 %v1343, %v1344
      %v1346 = vrot.slane %v1345, 1
      %v1347 = vadd.f32 %v1345, %v1346
      %v1348 = vmul.f32 %v1347, %v606
      %1349 = vst.msk [vmem:[%s210 + $0x10] sm:$0x1] %vm220, %v1348
      %s1350 = scalar_lea.vmem [#allocation2], 288
      %v1351 = vld [vmem:[%s1350] sm:$0xff]
      %v1352 = vld [vmem:[%s1350 + $0x8] sm:$0xff]
      %v1353 = vld [vmem:[%s1350 + $0x18] sm:$0xff]
      %v1354 = vld [vmem:[%s1350 + $0x20] sm:$0xff]
      %v1355 = vld [vmem:[%s1350 + $0x30] sm:$0xff]
      %v1356 = vld [vmem:[%s1350 + $0x38] sm:$0xff]
      %v1357 = vld [vmem:[%s1350 + $0x48] sm:$0xff]
      %v1358 = vld [vmem:[%s1350 + $0x50] sm:$0xff]
      %v1359 = vmul.f32 %v1351, %v333
      %v1360 = vmul.f32 %v1352, %v333
      %v1361 = vmul.f32 %v1353, %v333
      %v1362 = vmul.f32 %v1354, %v333
      %v1363 = vmul.f32 %v1355, %v333
      %v1364 = vmul.f32 %v1356, %v333
      %v1365 = vmul.f32 %v1357, %v333
      %v1366 = vmul.f32 %v1358, %v333
      %v1367 = vadd.f32 %v1359, 0.0
      %v1368 = vadd.f32 %v1360, 0.0
      %v1369 = vadd.f32 %v1361, 0.0
      %v1370 = vadd.f32 %v1362, 0.0
      %v1371 = vadd.f32 %v1363, 0.0
      %v1372 = vadd.f32 %v1364, 0.0
      %v1373 = vadd.f32 %v1365, 0.0
      %v1374 = vadd.f32 %v1366, 0.0
      %v1375 = vld [vmem:[%s1350 + $0x1] sm:$0xff]
      %v1376 = vld [vmem:[%s1350 + $0x9] sm:$0xff]
      %v1377 = vld [vmem:[%s1350 + $0x19] sm:$0xff]
      %v1378 = vld [vmem:[%s1350 + $0x21] sm:$0xff]
      %v1379 = vld [vmem:[%s1350 + $0x31] sm:$0xff]
      %v1380 = vld [vmem:[%s1350 + $0x39] sm:$0xff]
      %v1381 = vld [vmem:[%s1350 + $0x49] sm:$0xff]
      %v1382 = vld [vmem:[%s1350 + $0x51] sm:$0xff]
      %v1383 = vmul.f32 %v1375, %v358
      %v1384 = vmul.f32 %v1376, %v358
      %v1385 = vmul.f32 %v1377, %v358
      %v1386 = vmul.f32 %v1378, %v358
      %v1387 = vmul.f32 %v1379, %v358
      %v1388 = vmul.f32 %v1380, %v358
      %v1389 = vmul.f32 %v1381, %v358
      %v1390 = vmul.f32 %v1382, %v358
      %v1391 = vadd.f32 %v1367, %v1383
      %v1392 = vadd.f32 %v1368, %v1384
      %v1393 = vadd.f32 %v1369, %v1385
      %v1394 = vadd.f32 %v1370, %v1386
      %v1395 = vadd.f32 %v1371, %v1387
      %v1396 = vadd.f32 %v1372, %v1388
      %v1397 = vadd.f32 %v1373, %v1389
      %v1398 = vadd.f32 %v1374, %v1390
      %v1399 = vld [vmem:[%s1350 + $0x2] sm:$0xff]
      %v1400 = vld [vmem:[%s1350 + $0xa] sm:$0xff]
      %v1401 = vld [vmem:[%s1350 + $0x1a] sm:$0xff]
      %v1402 = vld [vmem:[%s1350 + $0x22] sm:$0xff]
      %v1403 = vld [vmem:[%s1350 + $0x32] sm:$0xff]
      %v1404 = vld [vmem:[%s1350 + $0x3a] sm:$0xff]
      %v1405 = vld [vmem:[%s1350 + $0x4a] sm:$0xff]
      %v1406 = vld [vmem:[%s1350 + $0x52] sm:$0xff]
      %v1407 = vmul.f32 %v1399, %v383
      %v1408 = vmul.f32 %v1400, %v383
      %v1409 = vmul.f32 %v1401, %v383
      %v1410 = vmul.f32 %v1402, %v383
      %v1411 = vmul.f32 %v1403, %v383
      %v1412 = vmul.f32 %v1404, %v383
      %v1413 = vmul.f32 %v1405, %v383
      %v1414 = vmul.f32 %v1406, %v383
      %v1415 = vadd.f32 %v1391, %v1407
      %v1416 = vadd.f32 %v1392, %v1408
      %v1417 = vadd.f32 %v1393, %v1409
      %v1418 = vadd.f32 %v1394, %v1410
      %v1419 = vadd.f32 %v1395, %v1411
      %v1420 = vadd.f32 %v1396, %v1412
      %v1421 = vadd.f32 %v1397, %v1413
      %v1422 = vadd.f32 %v1398, %v1414
      %s1423 = scalar_lea.vmem [#allocation2], 312
      %v1424 = vld [vmem:[%s1423] sm:$0xff]
      %v1425 = vld [vmem:[%s1423 + $0x8] sm:$0xff]
      %v1426 = vld [vmem:[%s1423 + $0x18] sm:$0xff]
      %v1427 = vld [vmem:[%s1423 + $0x20] sm:$0xff]
      %v1428 = vld [vmem:[%s1423 + $0x30] sm:$0xff]
      %v1429 = vld [vmem:[%s1423 + $0x38] sm:$0xff]
      %v1430 = vld [vmem:[%s1423 + $0x48] sm:$0xff]
      %v1431 = vld [vmem:[%s1423 + $0x50] sm:$0xff]
      %v1432 = vmul.f32 %v1424, %v408
      %v1433 = vmul.f32 %v1425, %v408
      %v1434 = vmul.f32 %v1426, %v408
      %v1435 = vmul.f32 %v1427, %v408
      %v1436 = vmul.f32 %v1428, %v408
      %v1437 = vmul.f32 %v1429, %v408
      %v1438 = vmul.f32 %v1430, %v408
      %v1439 = vmul.f32 %v1431, %v408
      %v1440 = vadd.f32 %v1415, %v1432
      %v1441 = vadd.f32 %v1416, %v1433
      %v1442 = vadd.f32 %v1417, %v1434
      %v1443 = vadd.f32 %v1418, %v1435
      %v1444 = vadd.f32 %v1419, %v1436
      %v1445 = vadd.f32 %v1420, %v1437
      %v1446 = vadd.f32 %v1421, %v1438
      %v1447 = vadd.f32 %v1422, %v1439
      %v1448 = vld [vmem:[%s1423 + $0x1] sm:$0xff]
      %v1449 = vld [vmem:[%s1423 + $0x9] sm:$0xff]
      %v1450 = vld [vmem:[%s1423 + $0x19] sm:$0xff]
      %v1451 = vld [vmem:[%s1423 + $0x21] sm:$0xff]
      %v1452 = vld [vmem:[%s1423 + $0x31] sm:$0xff]
      %v1453 = vld [vmem:[%s1423 + $0x39] sm:$0xff]
      %v1454 = vld [vmem:[%s1423 + $0x49] sm:$0xff]
      %v1455 = vld [vmem:[%s1423 + $0x51] sm:$0xff]
      %v1456 = vmul.f32 %v1448, %v433
      %v1457 = vmul.f32 %v1449, %v433
      %v1458 = vmul.f32 %v1450, %v433
      %v1459 = vmul.f32 %v1451, %v433
      %v1460 = vmul.f32 %v1452, %v433
      %v1461 = vmul.f32 %v1453, %v433
      %v1462 = vmul.f32 %v1454, %v433
      %v1463 = vmul.f32 %v1455, %v433
      %v1464 = vadd.f32 %v1440, %v1456
      %v1465 = vadd.f32 %v1441, %v1457
      %v1466 = vadd.f32 %v1442, %v1458
      %v1467 = vadd.f32 %v1443, %v1459
      %v1468 = vadd.f32 %v1444, %v1460
      %v1469 = vadd.f32 %v1445, %v1461
      %v1470 = vadd.f32 %v1446, %v1462
      %v1471 = vadd.f32 %v1447, %v1463
      %v1472 = vld [vmem:[%s1423 + $0x2] sm:$0xff]
      %v1473 = vld [vmem:[%s1423 + $0xa] sm:$0xff]
      %v1474 = vld [vmem:[%s1423 + $0x1a] sm:$0xff]
      %v1475 = vld [vmem:[%s1423 + $0x22] sm:$0xff]
      %v1476 = vld [vmem:[%s1423 + $0x32] sm:$0xff]
      %v1477 = vld [vmem:[%s1423 + $0x3a] sm:$0xff]
      %v1478 = vld [vmem:[%s1423 + $0x4a] sm:$0xff]
      %v1479 = vld [vmem:[%s1423 + $0x52] sm:$0xff]
      %v1480 = vmul.f32 %v1472, %v458
      %v1481 = vmul.f32 %v1473, %v458
      %v1482 = vmul.f32 %v1474, %v458
      %v1483 = vmul.f32 %v1475, %v458
      %v1484 = vmul.f32 %v1476, %v458
      %v1485 = vmul.f32 %v1477, %v458
      %v1486 = vmul.f32 %v1478, %v458
      %v1487 = vmul.f32 %v1479, %v458
      %v1488 = vadd.f32 %v1464, %v1480
      %v1489 = vadd.f32 %v1465, %v1481
      %v1490 = vadd.f32 %v1466, %v1482
      %v1491 = vadd.f32 %v1467, %v1483
      %v1492 = vadd.f32 %v1468, %v1484
      %v1493 = vadd.f32 %v1469, %v1485
      %v1494 = vadd.f32 %v1470, %v1486
      %v1495 = vadd.f32 %v1471, %v1487
      %s1496 = scalar_lea.vmem [#allocation2], 336
      %v1497 = vld [vmem:[%s1496] sm:$0xff]
      %v1498 = vld [vmem:[%s1496 + $0x8] sm:$0xff]
      %v1499 = vld [vmem:[%s1496 + $0x18] sm:$0xff]
      %v1500 = vld [vmem:[%s1496 + $0x20] sm:$0xff]
      %v1501 = vld [vmem:[%s1496 + $0x30] sm:$0xff]
      %v1502 = vld [vmem:[%s1496 + $0x38] sm:$0xff]
      %v1503 = vld [vmem:[%s1496 + $0x48] sm:$0xff]
      %v1504 = vld [vmem:[%s1496 + $0x50] sm:$0xff]
      %v1505 = vmul.f32 %v1497, %v484
      %v1506 = vmul.f32 %v1498, %v484
      %v1507 = vmul.f32 %v1499, %v484
      %v1508 = vmul.f32 %v1500, %v484
      %v1509 = vmul.f32 %v1501, %v484
      %v1510 = vmul.f32 %v1502, %v484
      %v1511 = vmul.f32 %v1503, %v484
      %v1512 = vmul.f32 %v1504, %v484
      %v1513 = vadd.f32 %v1488, %v1505
      %v1514 = vadd.f32 %v1489, %v1506
      %v1515 = vadd.f32 %v1490, %v1507
      %v1516 = vadd.f32 %v1491, %v1508
      %v1517 = vadd.f32 %v1492, %v1509
      %v1518 = vadd.f32 %v1493, %v1510
      %v1519 = vadd.f32 %v1494, %v1511
      %v1520 = vadd.f32 %v1495, %v1512
      %v1521 = vld [vmem:[%s1496 + $0x1] sm:$0xff]
      %v1522 = vld [vmem:[%s1496 + $0x9] sm:$0xff]
      %v1523 = vld [vmem:[%s1496 + $0x19] sm:$0xff]
      %v1524 = vld [vmem:[%s1496 + $0x21] sm:$0xff]
      %v1525 = vld [vmem:[%s1496 + $0x31] sm:$0xff]
      %v1526 = vld [vmem:[%s1496 + $0x39] sm:$0xff]
      %v1527 = vld [vmem:[%s1496 + $0x49] sm:$0xff]
      %v1528 = vld [vmem:[%s1496 + $0x51] sm:$0xff]
      %v1529 = vmul.f32 %v1521, %v509
      %v1530 = vmul.f32 %v1522, %v509
      %v1531 = vmul.f32 %v1523, %v509
      %v1532 = vmul.f32 %v1524, %v509
      %v1533 = vmul.f32 %v1525, %v509
      %v1534 = vmul.f32 %v1526, %v509
      %v1535 = vmul.f32 %v1527, %v509
      %v1536 = vmul.f32 %v1528, %v509
      %v1537 = vadd.f32 %v1513, %v1529
      %v1538 = vadd.f32 %v1514, %v1530
      %v1539 = vadd.f32 %v1515, %v1531
      %v1540 = vadd.f32 %v1516, %v1532
      %v1541 = vadd.f32 %v1517, %v1533
      %v1542 = vadd.f32 %v1518, %v1534
      %v1543 = vadd.f32 %v1519, %v1535
      %v1544 = vadd.f32 %v1520, %v1536
      %v1545 = vld [vmem:[%s1496 + $0x2] sm:$0xff]
      %v1546 = vld [vmem:[%s1496 + $0xa] sm:$0xff]
      %v1547 = vld [vmem:[%s1496 + $0x1a] sm:$0xff]
      %v1548 = vld [vmem:[%s1496 + $0x22] sm:$0xff]
      %v1549 = vld [vmem:[%s1496 + $0x32] sm:$0xff]
      %v1550 = vld [vmem:[%s1496 + $0x3a] sm:$0xff]
      %v1551 = vld [vmem:[%s1496 + $0x4a] sm:$0xff]
      %v1552 = vld [vmem:[%s1496 + $0x52] sm:$0xff]
      %v1553 = vmul.f32 %v1545, %v534
      %v1554 = vmul.f32 %v1546, %v534
      %v1555 = vmul.f32 %v1547, %v534
      %v1556 = vmul.f32 %v1548, %v534
      %v1557 = vmul.f32 %v1549, %v534
      %v1558 = vmul.f32 %v1550, %v534
      %v1559 = vmul.f32 %v1551, %v534
      %v1560 = vmul.f32 %v1552, %v534
      %v1561 = vadd.f32 %v1537, %v1553
      %v1562 = vadd.f32 %v1538, %v1554
      %v1563 = vadd.f32 %v1539, %v1555
      %v1564 = vadd.f32 %v1540, %v1556
      %v1565 = vadd.f32 %v1541, %v1557
      %v1566 = vadd.f32 %v1542, %v1558
      %v1567 = vadd.f32 %v1543, %v1559
      %v1568 = vadd.f32 %v1544, %v1560
      %v1569 = vadd.f32 %v1561, %v552
      %v1570 = vadd.f32 %v1562, %v552
      %v1571 = vadd.f32 %v1563, %v552
      %v1572 = vadd.f32 %v1564, %v552
      %v1573 = vadd.f32 %v1565, %v552
      %v1574 = vadd.f32 %v1566, %v552
      %v1575 = vadd.f32 %v1567, %v552
      %v1576 = vadd.f32 %v1568, %v552
      %v1577 = vmax.f32 %v1569, 0.0
      %v1578 = vmax.f32 %v1570, 0.0
      %v1579 = vmax.f32 %v1571, 0.0
      %v1580 = vmax.f32 %v1572, 0.0
      %v1581 = vmax.f32 %v1573, 0.0
      %v1582 = vmax.f32 %v1574, 0.0
      %v1583 = vmax.f32 %v1575, 0.0
      %v1584 = vmax.f32 %v1576, 0.0
      %v1585 = vmin.f32 %v1577, 6.0
      %v1586 = vmin.f32 %v1578, 6.0
      %v1587 = vmin.f32 %v1579, 6.0
      %v1588 = vmin.f32 %v1580, 6.0
      %v1589 = vmin.f32 %v1581, 6.0
      %v1590 = vmin.f32 %v1582, 6.0
      %v1591 = vmin.f32 %v1583, 6.0
      %v1592 = vmin.f32 %v1584, 6.0
      %s1593 = scalar_lea.vmem %s205, 192
      %1594 = vst.msk [vmem:[%s1593] sm:$0xff] %vm211, %v1585
      %1595 = vst.msk [vmem:[%s1593 + $0x8] sm:$0xff] %vm211, %v1586
      %1596 = vst.msk [vmem:[%s1593 + $0x10] sm:$0xff] %vm211, %v1587
      %1597 = vst.msk [vmem:[%s1593 + $0x18] sm:$0xff] %vm211, %v1588
      %1598 = vst.msk [vmem:[%s1593 + $0x20] sm:$0xff] %vm211, %v1589
      %1599 = vst.msk [vmem:[%s1593 + $0x28] sm:$0xff] %vm211, %v1590
      %1600 = vst.msk [vmem:[%s1593 + $0x30] sm:$0xff] %vm211, %v1591
      %1601 = vst.msk [vmem:[%s1593 + $0x38] sm:$0xff] %vm211, %v1592
      %v1602 = vsel %vm586, %v1585, 0.0
      %v1603 = vsel %vm586, %v1587, 0.0
      %v1604 = vadd.f32 %v1602, %v1603
      %v1605 = vsel %vm586, %v1589, 0.0
      %v1606 = vadd.f32 %v1604, %v1605
      %v1607 = vsel %vm586, %v1591, 0.0
      %v1608 = vadd.f32 %v1606, %v1607
      %v1609 = vrot.slane %v1608, 4
      %v1610 = vadd.f32 %v1608, %v1609
      %v1611 = vrot.slane %v1610, 2
      %v1612 = vadd.f32 %v1610, %v1611
      %v1613 = vrot.slane %v1612, 1
      %v1614 = vadd.f32 %v1612, %v1613
      %v1615 = vmul.f32 %v1614, %v606
      %1616 = vst.msk [vmem:[%s210 + $0x11] sm:$0x1] %vm220, %v1615
      %v1621 = vrot.slane %v1585, 4
      %v1622 = vrot.slane %v1587, 4
      %v1623 = vrot.slane %v1589, 4
      %v1624 = vrot.slane %v1591, 4
      %v1629 = vsel %vm586, %v1621, 0.0
      %v1630 = vsel %vm586, %v1622, 0.0
      %v1631 = vadd.f32 %v1629, %v1630
      %v1632 = vsel %vm586, %v1623, 0.0
      %v1633 = vadd.f32 %v1631, %v1632
      %v1634 = vsel %vm586, %v1624, 0.0
      %v1635 = vadd.f32 %v1633, %v1634
      %v1636 = vrot.slane %v1635, 4
      %v1637 = vadd.f32 %v1635, %v1636
      %v1638 = vrot.slane %v1637, 2
      %v1639 = vadd.f32 %v1637, %v1638
      %v1640 = vrot.slane %v1639, 1
      %v1641 = vadd.f32 %v1639, %v1640
      %v1642 = vmul.f32 %v1641, %v606
      %1643 = vst.msk [vmem:[%s210 + $0x12] sm:$0x1] %vm220, %v1642
      %v1644 = vsel %vm586, %v1586, 0.0
      %v1645 = vsel %vm586, %v1588, 0.0
      %v1646 = vadd.f32 %v1644, %v1645
      %v1647 = vsel %vm586, %v1590, 0.0
      %v1648 = vadd.f32 %v1646, %v1647
      %v1649 = vsel %vm586, %v1592, 0.0
      %v1650 = vadd.f32 %v1648, %v1649
      %v1651 = vrot.slane %v1650, 4
      %v1652 = vadd.f32 %v1650, %v1651
      %v1653 = vrot.slane %v1652, 2
      %v1654 = vadd.f32 %v1652, %v1653
      %v1655 = vrot.slane %v1654, 1
      %v1656 = vadd.f32 %v1654, %v1655
      %v1657 = vmul.f32 %v1656, %v606
      %1658 = vst.msk [vmem:[%s210 + $0x13] sm:$0x1] %vm220, %v1657
      %v1663 = vrot.slane %v1586, 4
      %v1664 = vrot.slane %v1588, 4
      %v1665 = vrot.slane %v1590, 4
      %v1666 = vrot.slane %v1592, 4
      %v1671 = vsel %vm586, %v1663, 0.0
      %v1672 = vsel %vm586, %v1664, 0.0
      %v1673 = vadd.f32 %v1671, %v1672
      %v1674 = vsel %vm586, %v1665, 0.0
      %v1675 = vadd.f32 %v1673, %v1674
      %v1676 = vsel %vm586, %v1666, 0.0
      %v1677 = vadd.f32 %v1675, %v1676
      %v1678 = vrot.slane %v1677, 4
      %v1679 = vadd.f32 %v1677, %v1678
      %v1680 = vrot.slane %v1679, 2
      %v1681 = vadd.f32 %v1679, %v1680
      %v1682 = vrot.slane %v1681, 1
      %v1683 = vadd.f32 %v1681, %v1682
      %v1684 = vmul.f32 %v1683, %v606
      %1685 = vst.msk [vmem:[%s210 + $0x14] sm:$0x1] %vm220, %v1684
      %v1686 = vadd.f32 %v607, %v634
      %v1687 = vadd.f32 %v1686, %v943
      %v1688 = vadd.f32 %v1687, %v970
      %v1689 = vmul.f32 %v1688, 0.25
      %1690 = vst.msk [vmem:[%s210 + $0x1] sm:$0x1] %vm220, %v1689
      %v1691 = vadd.f32 %v649, %v676
      %v1692 = vadd.f32 %v1691, %v985
      %v1693 = vadd.f32 %v1692, %v1012
      %v1694 = vmul.f32 %v1693, 0.25
      %1695 = vst.msk [vmem:[%s210 + $0x2] sm:$0x1] %vm220, %v1694
      %v1696 = vadd.f32 %v1279, %v1306
      %v1697 = vadd.f32 %v1696, %v1615
      %v1698 = vadd.f32 %v1697, %v1642
      %v1699 = vmul.f32 %v1698, 0.25
      %1700 = vst.msk [vmem:[%s210 + $0x3] sm:$0x1] %vm220, %v1699
      %v1701 = vadd.f32 %v1321, %v1348
      %v1702 = vadd.f32 %v1701, %v1657
      %v1703 = vadd.f32 %v1702, %v1684
      %v1704 = vmul.f32 %v1703, 0.25
      %1705 = vst.msk [vmem:[%s210 + $0x4] sm:$0x1] %vm220, %v1704
      %v1706 = vadd.f32 %v607, 0.0
      %v1707 = vadd.f32 %v1706, %v634
      %v1708 = vadd.f32 %v1707, %v649
      %v1709 = vadd.f32 %v1708, %v676
      %v1710 = vadd.f32 %v1709, %v943
      %v1711 = vadd.f32 %v1710, %v970
      %v1712 = vadd.f32 %v1711, %v985
      %v1713 = vadd.f32 %v1712, %v1012
      %v1714 = vadd.f32 %v1713, %v1279
      %v1715 = vadd.f32 %v1714, %v1306
      %v1716 = vadd.f32 %v1715, %v1321
      %v1717 = vadd.f32 %v1716, %v1348
      %v1718 = vadd.f32 %v1717, %v1615
      %v1719 = vadd.f32 %v1718, %v1642
      %v1720 = vadd.f32 %v1719, %v1657
      %v1721 = vadd.f32 %v1720, %v1684
      %v1722 = vmul.f32 %v1721, 0.0625
      %1723 = vst.msk [vmem:[%s210] sm:$0x1] %vm220, %v1722
      %p1724 = scmp.lt.s32.totalorder %s16, 1
      %s1725 = scalar_select %p1724, %s16, 1
      %s1726 = smul.addr %s1725, 32
      %s1727 = smul.addr %s1726, 8
      %s1728 = scalar_lea.vmem %s3, %s1727
      %p1729 = scmp.lt.s32.totalorder %s16, 1
      %s1730 = scalar_select %p1729, %s16, 1
      %s1731 = smul.addr %s1730, 3
      %s1732 = smul.addr %s1731, 8
      %s1733 = scalar_lea.vmem %s4, %s1732
      // Predicated region
      $region33: #{inverted_residual_forward.5} parent=31 // pred_check
        %p1734 = pneg %p102
      $region34: #{inverted_residual_forward.5} parent=31 // pred_check_branch
        %1736 = sbr.rel (%p1734) target = $region36
      $region35: #{inverted_residual_forward.5} parent=31 // pred_region
        _
      $region36: #{inverted_residual_forward.5} parent=31 // pred_fallthru
        _
      // Predicated region
      $region37: #{inverted_residual_forward.5} parent=31 // pred_check
        %p1737 = pneg %p128
      $region38: #{inverted_residual_forward.5} parent=31 // pred_check_branch
        %1739 = sbr.rel (%p1737) target = $region40
      $region39: #{inverted_residual_forward.5} parent=31 // pred_region
        _
      $region40: #{inverted_residual_forward.5} parent=31 // pred_fallthru
        _
    $region32: #{inverted_residual_forward.5} parent=5 // pred_fallthru
      _
    %p1740 = scmp.le.s32.totalorder 2, %s11
    // Predicated region
    $region41: #{inverted_residual_forward.5} parent=5 // pred_check
      %p1741 = pneg %p1740
    $region42: #{inverted_residual_forward.5} parent=5 // pred_check_branch
      %1743 = sbr.rel (%p1741) target = $region44
    $region43: #{inverted_residual_forward.5} parent=5 // pred_region
      %s1744 = ssub.s32 %s11, 2
      // Predicated region
      $region45: #{inverted_residual_forward.5} parent=43 // pred_check
        %p1745 = pneg %p108
      $region46: #{inverted_residual_forward.5} parent=43 // pred_check_branch
        %1747 = sbr.rel (%p1745) target = $region48
      $region47: #{inverted_residual_forward.5} parent=43 // pred_region
        %p1748 = scmp.lt.s32.totalorder %s17, 1
        %s1749 = scalar_select %p1748, %s17, 1
        %s1750 = smul.addr %s1749, 32
        %s1751 = smul.addr %s1750, 8
        %s1752 = scalar_lea.vmem %s3, %s1751
      $region48: #{inverted_residual_forward.5} parent=43 // pred_fallthru
        _
      // Predicated region
      $region49: #{inverted_residual_forward.5} parent=43 // pred_check
        %p1753 = pneg %p134
      $region50: #{inverted_residual_forward.5} parent=43 // pred_check_branch
        %1755 = sbr.rel (%p1753) target = $region52
      $region51: #{inverted_residual_forward.5} parent=43 // pred_region
        %p1756 = scmp.lt.s32.totalorder %s17, 1
        %s1757 = scalar_select %p1756, %s17, 1
        %s1758 = smul.addr %s1757, 3
        %s1759 = smul.addr %s1758, 8
        %s1760 = scalar_lea.vmem %s4, %s1759
      $region52: #{inverted_residual_forward.5} parent=43 // pred_fallthru
        _
    $region44: #{inverted_residual_forward.5} parent=5 // pred_fallthru
      _
  $region6: #{inverted_residual_forward.5} parent=0 // loop_footer
    %s15 = sadd.s32 1, %s11
  $region7: #{inverted_residual_forward.5} parent=0 // loop_footer_branch
    %10 = sbr.rel target = $region3
  $region8: #{inverted_residual_forward.5} parent=0 // loop_exit
    _

</llo_original>
